<compile_context>
chip_gen: v7x
topology: tpu7x:2x2x1
jax: 0.10.0
libtpu: 0.0.40
codegen_flags: <defaults>
</compile_context>

<pallas_src>
import functools

import numpy as np
import jax
import jax.numpy as jnp
from jax.experimental import pallas as pl
from jax.experimental.pallas import tpu as pltpu

WINDOW_SIZE = 11
WINDOW_SIGMA = 1.5
C1 = (0.01 * 255.0) ** 2
C2 = (0.03 * 255.0) ** 2


def gaussian_1d(size: int, sigma: float) -> np.ndarray:
    """Normalized 1D Gaussian; outer(g, g) equals GaussianWindow2D's kernel."""
    axis = np.arange(-size // 2 + 1.0, size // 2 + 1.0, dtype=np.float32)
    k = np.exp(-(axis ** 2) / (2.0 * sigma ** 2)).astype(np.float32)
    return (k / k.sum()).astype(np.float32)


def gaussian_window_2d(size: int, sigma: float) -> np.ndarray:
    """Replicates GaussianWindow2D._create_window (used by the pure-JAX reference)."""
    axis = np.arange(-size // 2 + 1.0, size // 2 + 1.0, dtype=np.float32)
    xx, yy = np.meshgrid(axis, axis, indexing="xy")
    kernel = np.exp(-(xx ** 2 + yy ** 2) / (2.0 * sigma ** 2)).astype(np.float32)
    kernel /= kernel.sum()
    return kernel.astype(np.float32)


def ssim_kernel(bv_ref, bw_ref, img1_ref, img2_ref, out_ref, *, ncb, nc):
    # bv_ref: (H, Hp) row-pass band matrix; bw_ref: (Wp_pad, W) column-pass band.
    # img*_ref: (ncb, Hp, Wp_pad) zero-padded planes (lane-dense last dim).
    bv = bv_ref[...]
    bw = bw_ref[...]
    base = pl.program_id(0) * ncb

    def sep_conv(p):
        # (Hp, Wp_pad) -> (H, W): two MXU matmuls, f32 accumulation.
        t = jnp.dot(bv, p, preferred_element_type=jnp.float32)
        return jnp.dot(t, bw, preferred_element_type=jnp.float32)

    total = jnp.float32(0.0)
    for j in range(ncb):  # compile-time unrolled; ncb is small
        p1 = img1_ref[j]
        p2 = img2_ref[j]

        mu1 = sep_conv(p1)
        mu2 = sep_conv(p2)
        s11 = sep_conv(p1 * p1)
        s22 = sep_conv(p2 * p2)
        s12 = sep_conv(p1 * p2)

        mu1_sq = mu1 * mu1
        mu2_sq = mu2 * mu2
        mu1_mu2 = mu1 * mu2
        sigma1_sq = s11 - mu1_sq
        sigma2_sq = s22 - mu2_sq
        sigma12 = s12 - mu1_mu2

        num = (2.0 * mu1_mu2 + C1) * (2.0 * sigma12 + C2)
        den = (mu1_sq + mu2_sq + C1) * (sigma1_sq + sigma2_sq + C2)
        ssim_map = num * pl.reciprocal(den, approx=False)

        plane_sum = jnp.sum(ssim_map)
        valid = (base + j) < nc  # mask planes added when rounding N*C up to ncb
        total = total + jnp.where(valid, plane_sum, jnp.float32(0.0))

    out_ref[...] = jnp.full(out_ref.shape, total, jnp.float32)


def ssim_pallas(img1, img2, window_size=WINDOW_SIZE, window_sigma=WINDOW_SIGMA):
    N, C, H, W = img1.shape
    K = window_size
    pad = K // 2
    Hp = H + 2 * pad
    Wp = W + 2 * pad
    Wp_pad = ((Wp + 127) // 128) * 128  # lane-dense last dim
    NC = N * C

    # Planes per grid step: amortize per-step overhead while keeping each
    # double-buffered input block modest in VMEM (<= ~1 MiB per input block).
    plane_bytes = Hp * Wp_pad * 4
    ncb = max(1, min(NC, 8, (1 << 20) // plane_bytes))
    g_steps = -(-NC // ncb)  # cdiv
    nc_pad = g_steps * ncb

    # Constant band matrices implementing the separable Gaussian correlation
    # (F.conv2d cross-correlation semantics; extra padded rows/cols are zero).
    g1 = gaussian_1d(K, window_sigma)
    bv = np.zeros((H, Hp), np.float32)
    r = np.arange(H)
    for ky in range(K):
        bv[r, r + ky] = g1[ky]
    bw = np.zeros((Wp_pad, W), np.float32)
    c = np.arange(W)
    for kx in range(K):
        bw[c + kx, c] = g1[kx]

    def prep(x):
        x = x.astype(jnp.float32).reshape(NC, H, W)
        return jnp.pad(
            x, ((0, nc_pad - NC), (pad, pad), (pad, pad + Wp_pad - Wp)))

    x1 = prep(img1)
    x2 = prep(img2)

    kern = functools.partial(ssim_kernel, ncb=ncb, nc=NC)
    partials = pl.pallas_call(
        kern,
        out_shape=jax.ShapeDtypeStruct((g_steps, 1, 128), jnp.float32),
        grid=(g_steps,),
        in_specs=[
            pl.BlockSpec((H, Hp), lambda g: (0, 0)),            # bv (resident)
            pl.BlockSpec((Wp_pad, W), lambda g: (0, 0)),         # bw (resident)
            pl.BlockSpec((ncb, Hp, Wp_pad), lambda g: (g, 0, 0)),
            pl.BlockSpec((ncb, Hp, Wp_pad), lambda g: (g, 0, 0)),
        ],
        out_specs=pl.BlockSpec((1, 1, 128), lambda g: (g, 0, 0)),
        compiler_params=pltpu.CompilerParams(
            dimension_semantics=("parallel",)),
    )(jnp.asarray(bv), jnp.asarray(bw), x1, x2)

    return jnp.sum(partials[:, 0, 0]) / jnp.float32(N * C * H * W)


def ssim_ref(img1, img2, window_size=WINDOW_SIZE, window_sigma=WINDOW_SIGMA):
    """Pure-JAX reference mirroring the PyTorch module (for correctness check)."""
    N, C, H, W = img1.shape
    K = window_size
    pad = K // 2
    w2 = jnp.asarray(gaussian_window_2d(K, window_sigma))
    w = jnp.broadcast_to(w2[None, None], (C, 1, K, K))

    def conv(x):
        return jax.lax.conv_general_dilated(
            x, w, window_strides=(1, 1), padding=[(pad, pad), (pad, pad)],
            dimension_numbers=("NCHW", "OIHW", "NCHW"), feature_group_count=C,
            precision=jax.lax.Precision.HIGHEST,
        )

    mu1 = conv(img1)
    mu2 = conv(img2)
    mu1_sq, mu2_sq, mu1_mu2 = mu1 * mu1, mu2 * mu2, mu1 * mu2
    sigma1_sq = conv(img1 * img1) - mu1_sq
    sigma2_sq = conv(img2 * img2) - mu2_sq
    sigma12 = conv(img1 * img2) - mu1_mu2
    ssim_map = ((2 * mu1_mu2 + C1) * (2 * sigma12 + C2)) / (
        (mu1_sq + mu2_sq + C1) * (sigma1_sq + sigma2_sq + C2)
    )
    return jnp.mean(ssim_map)


if __name__ == "__main__":
    key = jax.random.PRNGKey(0)
    k1, k2 = jax.random.split(key)
    N, C, H, W = 2, 3, 16, 16
    img1 = jax.random.uniform(k1, (N, C, H, W), dtype=jnp.float32)
    img2 = jax.random.uniform(k2, (N, C, H, W), dtype=jnp.float32)

    out = jax.block_until_ready(ssim_pallas(img1, img2))
    ref = jax.block_until_ready(ssim_ref(img1, img2))

    if not np.allclose(np.asarray(out), np.asarray(ref), rtol=1e-3, atol=1e-4):
        raise AssertionError(f"mismatch: pallas={out}, ref={ref}")
    print("KERNEL_OK")
</pallas_src>

<mosaic_0001>
module attributes {stable_mosaic.version = 11 : i64} {
  func.func @ssim_kernel(%arg0: i32, %arg1: memref<16x26xf32, #tpu.memory_space<vmem>>, %arg2: memref<128x16xf32, #tpu.memory_space<vmem>>, %arg3: memref<6x26x128xf32, #tpu.memory_space<vmem>>, %arg4: memref<6x26x128xf32, #tpu.memory_space<vmem>>, %arg5: memref<1x1x128xf32, #tpu.memory_space<vmem>>) attributes {dimension_semantics = [#tpu.dimension_semantics<parallel>], iteration_bounds = array<i64: 1>, scalar_prefetch = 0 : i64, scratch_operands = 0 : i64, tpu.core_type = #tpu.core_type<tc>, window_params = [{pipeline_mode = #tpu.pipeline_mode<synchronous>, transform_indices = @transform_0, window_bounds = array<i64: 16, 26>}, {pipeline_mode = #tpu.pipeline_mode<synchronous>, transform_indices = @transform_1, window_bounds = array<i64: 128, 16>}, {transform_indices = @transform_2, window_bounds = array<i64: 6, 26, 128>}, {transform_indices = @transform_3, window_bounds = array<i64: 6, 26, 128>}, {transform_indices = @transform_4, window_bounds = array<i64: 1, 1, 128>}]} {
    %c0 = arith.constant 0 : index
    %c0_0 = arith.constant 0 : index
    %0 = vector.load %arg1[%c0, %c0_0] : memref<16x26xf32, #tpu.memory_space<vmem>>, vector<16x26xf32>
    %c0_1 = arith.constant 0 : index
    %c0_2 = arith.constant 0 : index
    %1 = vector.load %arg2[%c0_1, %c0_2] : memref<128x16xf32, #tpu.memory_space<vmem>>, vector<128x16xf32>
    %c6_i32 = arith.constant 6 : i32
    %2 = arith.muli %arg0, %c6_i32 : i32
    %c0_3 = arith.constant 0 : index
    %c0_4 = arith.constant 0 : index
    %c0_5 = arith.constant 0 : index
    %3 = vector.load %arg3[%c0_3, %c0_4, %c0_5] : memref<6x26x128xf32, #tpu.memory_space<vmem>>, vector<1x26x128xf32>
    %4 = vector.shape_cast %3 : vector<1x26x128xf32> to vector<26x128xf32>
    %c0_6 = arith.constant 0 : index
    %c0_7 = arith.constant 0 : index
    %c0_8 = arith.constant 0 : index
    %5 = vector.load %arg4[%c0_6, %c0_7, %c0_8] : memref<6x26x128xf32, #tpu.memory_space<vmem>>, vector<1x26x128xf32>
    %6 = vector.shape_cast %5 : vector<1x26x128xf32> to vector<26x128xf32>
    %cst = arith.constant dense<0.000000e+00> : vector<16x128xf32>
    %7 = tpu.matmul %0, %4, %cst {dimension_numbers = #tpu.dot_dimension_numbers<[1], [0], [0], [1], [0, 0, 1, 1], [], []>} : vector<16x26xf32>, vector<26x128xf32>, vector<16x128xf32> -> vector<16x128xf32>
    %cst_9 = arith.constant dense<0.000000e+00> : vector<16x16xf32>
    %8 = tpu.matmul %7, %1, %cst_9 {dimension_numbers = #tpu.dot_dimension_numbers<[1], [0], [0], [1], [0, 0, 1, 1], [], []>} : vector<16x128xf32>, vector<128x16xf32>, vector<16x16xf32> -> vector<16x16xf32>
    %cst_10 = arith.constant dense<0.000000e+00> : vector<16x128xf32>
    %9 = tpu.matmul %0, %6, %cst_10 {dimension_numbers = #tpu.dot_dimension_numbers<[1], [0], [0], [1], [0, 0, 1, 1], [], []>} : vector<16x26xf32>, vector<26x128xf32>, vector<16x128xf32> -> vector<16x128xf32>
    %cst_11 = arith.constant dense<0.000000e+00> : vector<16x16xf32>
    %10 = tpu.matmul %9, %1, %cst_11 {dimension_numbers = #tpu.dot_dimension_numbers<[1], [0], [0], [1], [0, 0, 1, 1], [], []>} : vector<16x128xf32>, vector<128x16xf32>, vector<16x16xf32> -> vector<16x16xf32>
    %11 = arith.mulf %4, %4 : vector<26x128xf32>
    %cst_12 = arith.constant dense<0.000000e+00> : vector<16x128xf32>
    %12 = tpu.matmul %0, %11, %cst_12 {dimension_numbers = #tpu.dot_dimension_numbers<[1], [0], [0], [1], [0, 0, 1, 1], [], []>} : vector<16x26xf32>, vector<26x128xf32>, vector<16x128xf32> -> vector<16x128xf32>
    %cst_13 = arith.constant dense<0.000000e+00> : vector<16x16xf32>
    %13 = tpu.matmul %12, %1, %cst_13 {dimension_numbers = #tpu.dot_dimension_numbers<[1], [0], [0], [1], [0, 0, 1, 1], [], []>} : vector<16x128xf32>, vector<128x16xf32>, vector<16x16xf32> -> vector<16x16xf32>
    %14 = arith.mulf %6, %6 : vector<26x128xf32>
    %cst_14 = arith.constant dense<0.000000e+00> : vector<16x128xf32>
    %15 = tpu.matmul %0, %14, %cst_14 {dimension_numbers = #tpu.dot_dimension_numbers<[1], [0], [0], [1], [0, 0, 1, 1], [], []>} : vector<16x26xf32>, vector<26x128xf32>, vector<16x128xf32> -> vector<16x128xf32>
    %cst_15 = arith.constant dense<0.000000e+00> : vector<16x16xf32>
    %16 = tpu.matmul %15, %1, %cst_15 {dimension_numbers = #tpu.dot_dimension_numbers<[1], [0], [0], [1], [0, 0, 1, 1], [], []>} : vector<16x128xf32>, vector<128x16xf32>, vector<16x16xf32> -> vector<16x16xf32>
    %17 = arith.mulf %4, %6 : vector<26x128xf32>
    %cst_16 = arith.constant dense<0.000000e+00> : vector<16x128xf32>
    %18 = tpu.matmul %0, %17, %cst_16 {dimension_numbers = #tpu.dot_dimension_numbers<[1], [0], [0], [1], [0, 0, 1, 1], [], []>} : vector<16x26xf32>, vector<26x128xf32>, vector<16x128xf32> -> vector<16x128xf32>
    %cst_17 = arith.constant dense<0.000000e+00> : vector<16x16xf32>
    %19 = tpu.matmul %18, %1, %cst_17 {dimension_numbers = #tpu.dot_dimension_numbers<[1], [0], [0], [1], [0, 0, 1, 1], [], []>} : vector<16x128xf32>, vector<128x16xf32>, vector<16x16xf32> -> vector<16x16xf32>
    %20 = arith.mulf %8, %8 : vector<16x16xf32>
    %21 = arith.mulf %10, %10 : vector<16x16xf32>
    %22 = arith.mulf %8, %10 : vector<16x16xf32>
    %23 = arith.subf %13, %20 : vector<16x16xf32>
    %24 = arith.subf %16, %21 : vector<16x16xf32>
    %25 = arith.subf %19, %22 : vector<16x16xf32>
    %cst_18 = arith.constant 2.000000e+00 : f32
    %26 = vector.broadcast %cst_18 : f32 to vector<16x16xf32>
    %27 = arith.mulf %26, %22 : vector<16x16xf32>
    %cst_19 = arith.constant 6.502500e+00 : f32
    %28 = vector.broadcast %cst_19 : f32 to vector<16x16xf32>
    %29 = arith.addf %27, %28 : vector<16x16xf32>
    %cst_20 = arith.constant 2.000000e+00 : f32
    %30 = vector.broadcast %cst_20 : f32 to vector<16x16xf32>
    %31 = arith.mulf %30, %25 : vector<16x16xf32>
    %cst_21 = arith.constant 5.852250e+01 : f32
    %32 = vector.broadcast %cst_21 : f32 to vector<16x16xf32>
    %33 = arith.addf %31, %32 : vector<16x16xf32>
    %34 = arith.mulf %29, %33 : vector<16x16xf32>
    %35 = arith.addf %20, %21 : vector<16x16xf32>
    %cst_22 = arith.constant 6.502500e+00 : f32
    %36 = vector.broadcast %cst_22 : f32 to vector<16x16xf32>
    %37 = arith.addf %35, %36 : vector<16x16xf32>
    %38 = arith.addf %23, %24 : vector<16x16xf32>
    %cst_23 = arith.constant 5.852250e+01 : f32
    %39 = vector.broadcast %cst_23 : f32 to vector<16x16xf32>
    %40 = arith.addf %38, %39 : vector<16x16xf32>
    %41 = arith.mulf %37, %40 : vector<16x16xf32>
    %42 = tpu.reciprocal %41 : vector<16x16xf32> -> vector<16x16xf32>
    %43 = arith.mulf %34, %42 : vector<16x16xf32>
    %44 = vector.shape_cast %43 : vector<16x16xf32> to vector<1x16x16xf32>
    %cst_24 = arith.constant dense<0.000000e+00> : vector<1xf32>
    %45 = vector.multi_reduction <add>, %44, %cst_24 [1, 2] : vector<1x16x16xf32> to vector<1xf32>
    %46 = vector.shape_cast %45 : vector<1xf32> to vector<1x1x1xf32>
    %47 = vector.extract %46[0, 0, 0] : f32 from vector<1x1x1xf32>
    %c0_i32 = arith.constant 0 : i32
    %48 = arith.addi %2, %c0_i32 : i32
    %c6_i32_25 = arith.constant 6 : i32
    %49 = arith.cmpi slt, %48, %c6_i32_25 : i32
    %cst_26 = arith.constant 0.000000e+00 : f32
    %50 = arith.select %49, %47, %cst_26 : f32
    %cst_27 = arith.constant 0.000000e+00 : f32
    %51 = arith.addf %cst_27, %50 : f32
    %c1 = arith.constant 1 : index
    %c0_28 = arith.constant 0 : index
    %c0_29 = arith.constant 0 : index
    %52 = vector.load %arg3[%c1, %c0_28, %c0_29] : memref<6x26x128xf32, #tpu.memory_space<vmem>>, vector<1x26x128xf32>
    %53 = vector.shape_cast %52 : vector<1x26x128xf32> to vector<26x128xf32>
    %c1_30 = arith.constant 1 : index
    %c0_31 = arith.constant 0 : index
    %c0_32 = arith.constant 0 : index
    %54 = vector.load %arg4[%c1_30, %c0_31, %c0_32] : memref<6x26x128xf32, #tpu.memory_space<vmem>>, vector<1x26x128xf32>
    %55 = vector.shape_cast %54 : vector<1x26x128xf32> to vector<26x128xf32>
    %cst_33 = arith.constant dense<0.000000e+00> : vector<16x128xf32>
    %56 = tpu.matmul %0, %53, %cst_33 {dimension_numbers = #tpu.dot_dimension_numbers<[1], [0], [0], [1], [0, 0, 1, 1], [], []>} : vector<16x26xf32>, vector<26x128xf32>, vector<16x128xf32> -> vector<16x128xf32>
    %cst_34 = arith.constant dense<0.000000e+00> : vector<16x16xf32>
    %57 = tpu.matmul %56, %1, %cst_34 {dimension_numbers = #tpu.dot_dimension_numbers<[1], [0], [0], [1], [0, 0, 1, 1], [], []>} : vector<16x128xf32>, vector<128x16xf32>, vector<16x16xf32> -> vector<16x16xf32>
    %cst_35 = arith.constant dense<0.000000e+00> : vector<16x128xf32>
    %58 = tpu.matmul %0, %55, %cst_35 {dimension_numbers = #tpu.dot_dimension_numbers<[1], [0], [0], [1], [0, 0, 1, 1], [], []>} : vector<16x26xf32>, vector<26x128xf32>, vector<16x128xf32> -> vector<16x128xf32>
    %cst_36 = arith.constant dense<0.000000e+00> : vector<16x16xf32>
    %59 = tpu.matmul %58, %1, %cst_36 {dimension_numbers = #tpu.dot_dimension_numbers<[1], [0], [0], [1], [0, 0, 1, 1], [], []>} : vector<16x128xf32>, vector<128x16xf32>, vector<16x16xf32> -> vector<16x16xf32>
    %60 = arith.mulf %53, %53 : vector<26x128xf32>
    %cst_37 = arith.constant dense<0.000000e+00> : vector<16x128xf32>
    %61 = tpu.matmul %0, %60, %cst_37 {dimension_numbers = #tpu.dot_dimension_numbers<[1], [0], [0], [1], [0, 0, 1, 1], [], []>} : vector<16x26xf32>, vector<26x128xf32>, vector<16x128xf32> -> vector<16x128xf32>
    %cst_38 = arith.constant dense<0.000000e+00> : vector<16x16xf32>
    %62 = tpu.matmul %61, %1, %cst_38 {dimension_numbers = #tpu.dot_dimension_numbers<[1], [0], [0], [1], [0, 0, 1, 1], [], []>} : vector<16x128xf32>, vector<128x16xf32>, vector<16x16xf32> -> vector<16x16xf32>
    %63 = arith.mulf %55, %55 : vector<26x128xf32>
    %cst_39 = arith.constant dense<0.000000e+00> : vector<16x128xf32>
    %64 = tpu.matmul %0, %63, %cst_39 {dimension_numbers = #tpu.dot_dimension_numbers<[1], [0], [0], [1], [0, 0, 1, 1], [], []>} : vector<16x26xf32>, vector<26x128xf32>, vector<16x128xf32> -> vector<16x128xf32>
    %cst_40 = arith.constant dense<0.000000e+00> : vector<16x16xf32>
    %65 = tpu.matmul %64, %1, %cst_40 {dimension_numbers = #tpu.dot_dimension_numbers<[1], [0], [0], [1], [0, 0, 1, 1], [], []>} : vector<16x128xf32>, vector<128x16xf32>, vector<16x16xf32> -> vector<16x16xf32>
    %66 = arith.mulf %53, %55 : vector<26x128xf32>
    %cst_41 = arith.constant dense<0.000000e+00> : vector<16x128xf32>
    %67 = tpu.matmul %0, %66, %cst_41 {dimension_numbers = #tpu.dot_dimension_numbers<[1], [0], [0], [1], [0, 0, 1, 1], [], []>} : vector<16x26xf32>, vector<26x128xf32>, vector<16x128xf32> -> vector<16x128xf32>
    %cst_42 = arith.constant dense<0.000000e+00> : vector<16x16xf32>
    %68 = tpu.matmul %67, %1, %cst_42 {dimension_numbers = #tpu.dot_dimension_numbers<[1], [0], [0], [1], [0, 0, 1, 1], [], []>} : vector<16x128xf32>, vector<128x16xf32>, vector<16x16xf32> -> vector<16x16xf32>
    %69 = arith.mulf %57, %57 : vector<16x16xf32>
    %70 = arith.mulf %59, %59 : vector<16x16xf32>
    %71 = arith.mulf %57, %59 : vector<16x16xf32>
    %72 = arith.subf %62, %69 : vector<16x16xf32>
    %73 = arith.subf %65, %70 : vector<16x16xf32>
    %74 = arith.subf %68, %71 : vector<16x16xf32>
    %cst_43 = arith.constant 2.000000e+00 : f32
    %75 = vector.broadcast %cst_43 : f32 to vector<16x16xf32>
    %76 = arith.mulf %75, %71 : vector<16x16xf32>
    %cst_44 = arith.constant 6.502500e+00 : f32
    %77 = vector.broadcast %cst_44 : f32 to vector<16x16xf32>
    %78 = arith.addf %76, %77 : vector<16x16xf32>
    %cst_45 = arith.constant 2.000000e+00 : f32
    %79 = vector.broadcast %cst_45 : f32 to vector<16x16xf32>
    %80 = arith.mulf %79, %74 : vector<16x16xf32>
    %cst_46 = arith.constant 5.852250e+01 : f32
    %81 = vector.broadcast %cst_46 : f32 to vector<16x16xf32>
    %82 = arith.addf %80, %81 : vector<16x16xf32>
    %83 = arith.mulf %78, %82 : vector<16x16xf32>
    %84 = arith.addf %69, %70 : vector<16x16xf32>
    %cst_47 = arith.constant 6.502500e+00 : f32
    %85 = vector.broadcast %cst_47 : f32 to vector<16x16xf32>
    %86 = arith.addf %84, %85 : vector<16x16xf32>
    %87 = arith.addf %72, %73 : vector<16x16xf32>
    %cst_48 = arith.constant 5.852250e+01 : f32
    %88 = vector.broadcast %cst_48 : f32 to vector<16x16xf32>
    %89 = arith.addf %87, %88 : vector<16x16xf32>
    %90 = arith.mulf %86, %89 : vector<16x16xf32>
    %91 = tpu.reciprocal %90 : vector<16x16xf32> -> vector<16x16xf32>
    %92 = arith.mulf %83, %91 : vector<16x16xf32>
    %93 = vector.shape_cast %92 : vector<16x16xf32> to vector<1x16x16xf32>
    %cst_49 = arith.constant dense<0.000000e+00> : vector<1xf32>
    %94 = vector.multi_reduction <add>, %93, %cst_49 [1, 2] : vector<1x16x16xf32> to vector<1xf32>
    %95 = vector.shape_cast %94 : vector<1xf32> to vector<1x1x1xf32>
    %96 = vector.extract %95[0, 0, 0] : f32 from vector<1x1x1xf32>
    %c1_i32 = arith.constant 1 : i32
    %97 = arith.addi %2, %c1_i32 : i32
    %c6_i32_50 = arith.constant 6 : i32
    %98 = arith.cmpi slt, %97, %c6_i32_50 : i32
    %cst_51 = arith.constant 0.000000e+00 : f32
    %99 = arith.select %98, %96, %cst_51 : f32
    %100 = arith.addf %51, %99 : f32
    %c2 = arith.constant 2 : index
    %c0_52 = arith.constant 0 : index
    %c0_53 = arith.constant 0 : index
    %101 = vector.load %arg3[%c2, %c0_52, %c0_53] : memref<6x26x128xf32, #tpu.memory_space<vmem>>, vector<1x26x128xf32>
    %102 = vector.shape_cast %101 : vector<1x26x128xf32> to vector<26x128xf32>
    %c2_54 = arith.constant 2 : index
    %c0_55 = arith.constant 0 : index
    %c0_56 = arith.constant 0 : index
    %103 = vector.load %arg4[%c2_54, %c0_55, %c0_56] : memref<6x26x128xf32, #tpu.memory_space<vmem>>, vector<1x26x128xf32>
    %104 = vector.shape_cast %103 : vector<1x26x128xf32> to vector<26x128xf32>
    %cst_57 = arith.constant dense<0.000000e+00> : vector<16x128xf32>
    %105 = tpu.matmul %0, %102, %cst_57 {dimension_numbers = #tpu.dot_dimension_numbers<[1], [0], [0], [1], [0, 0, 1, 1], [], []>} : vector<16x26xf32>, vector<26x128xf32>, vector<16x128xf32> -> vector<16x128xf32>
    %cst_58 = arith.constant dense<0.000000e+00> : vector<16x16xf32>
    %106 = tpu.matmul %105, %1, %cst_58 {dimension_numbers = #tpu.dot_dimension_numbers<[1], [0], [0], [1], [0, 0, 1, 1], [], []>} : vector<16x128xf32>, vector<128x16xf32>, vector<16x16xf32> -> vector<16x16xf32>
    %cst_59 = arith.constant dense<0.000000e+00> : vector<16x128xf32>
    %107 = tpu.matmul %0, %104, %cst_59 {dimension_numbers = #tpu.dot_dimension_numbers<[1], [0], [0], [1], [0, 0, 1, 1], [], []>} : vector<16x26xf32>, vector<26x128xf32>, vector<16x128xf32> -> vector<16x128xf32>
    %cst_60 = arith.constant dense<0.000000e+00> : vector<16x16xf32>
    %108 = tpu.matmul %107, %1, %cst_60 {dimension_numbers = #tpu.dot_dimension_numbers<[1], [0], [0], [1], [0, 0, 1, 1], [], []>} : vector<16x128xf32>, vector<128x16xf32>, vector<16x16xf32> -> vector<16x16xf32>
    %109 = arith.mulf %102, %102 : vector<26x128xf32>
    %cst_61 = arith.constant dense<0.000000e+00> : vector<16x128xf32>
    %110 = tpu.matmul %0, %109, %cst_61 {dimension_numbers = #tpu.dot_dimension_numbers<[1], [0], [0], [1], [0, 0, 1, 1], [], []>} : vector<16x26xf32>, vector<26x128xf32>, vector<16x128xf32> -> vector<16x128xf32>
    %cst_62 = arith.constant dense<0.000000e+00> : vector<16x16xf32>
    %111 = tpu.matmul %110, %1, %cst_62 {dimension_numbers = #tpu.dot_dimension_numbers<[1], [0], [0], [1], [0, 0, 1, 1], [], []>} : vector<16x128xf32>, vector<128x16xf32>, vector<16x16xf32> -> vector<16x16xf32>
    %112 = arith.mulf %104, %104 : vector<26x128xf32>
    %cst_63 = arith.constant dense<0.000000e+00> : vector<16x128xf32>
    %113 = tpu.matmul %0, %112, %cst_63 {dimension_numbers = #tpu.dot_dimension_numbers<[1], [0], [0], [1], [0, 0, 1, 1], [], []>} : vector<16x26xf32>, vector<26x128xf32>, vector<16x128xf32> -> vector<16x128xf32>
    %cst_64 = arith.constant dense<0.000000e+00> : vector<16x16xf32>
    %114 = tpu.matmul %113, %1, %cst_64 {dimension_numbers = #tpu.dot_dimension_numbers<[1], [0], [0], [1], [0, 0, 1, 1], [], []>} : vector<16x128xf32>, vector<128x16xf32>, vector<16x16xf32> -> vector<16x16xf32>
    %115 = arith.mulf %102, %104 : vector<26x128xf32>
    %cst_65 = arith.constant dense<0.000000e+00> : vector<16x128xf32>
    %116 = tpu.matmul %0, %115, %cst_65 {dimension_numbers = #tpu.dot_dimension_numbers<[1], [0], [0], [1], [0, 0, 1, 1], [], []>} : vector<16x26xf32>, vector<26x128xf32>, vector<16x128xf32> -> vector<16x128xf32>
    %cst_66 = arith.constant dense<0.000000e+00> : vector<16x16xf32>
    %117 = tpu.matmul %116, %1, %cst_66 {dimension_numbers = #tpu.dot_dimension_numbers<[1], [0], [0], [1], [0, 0, 1, 1], [], []>} : vector<16x128xf32>, vector<128x16xf32>, vector<16x16xf32> -> vector<16x16xf32>
    %118 = arith.mulf %106, %106 : vector<16x16xf32>
    %119 = arith.mulf %108, %108 : vector<16x16xf32>
    %120 = arith.mulf %106, %108 : vector<16x16xf32>
    %121 = arith.subf %111, %118 : vector<16x16xf32>
    %122 = arith.subf %114, %119 : vector<16x16xf32>
    %123 = arith.subf %117, %120 : vector<16x16xf32>
    %cst_67 = arith.constant 2.000000e+00 : f32
    %124 = vector.broadcast %cst_67 : f32 to vector<16x16xf32>
    %125 = arith.mulf %124, %120 : vector<16x16xf32>
    %cst_68 = arith.constant 6.502500e+00 : f32
    %126 = vector.broadcast %cst_68 : f32 to vector<16x16xf32>
    %127 = arith.addf %125, %126 : vector<16x16xf32>
    %cst_69 = arith.constant 2.000000e+00 : f32
    %128 = vector.broadcast %cst_69 : f32 to vector<16x16xf32>
    %129 = arith.mulf %128, %123 : vector<16x16xf32>
    %cst_70 = arith.constant 5.852250e+01 : f32
    %130 = vector.broadcast %cst_70 : f32 to vector<16x16xf32>
    %131 = arith.addf %129, %130 : vector<16x16xf32>
    %132 = arith.mulf %127, %131 : vector<16x16xf32>
    %133 = arith.addf %118, %119 : vector<16x16xf32>
    %cst_71 = arith.constant 6.502500e+00 : f32
    %134 = vector.broadcast %cst_71 : f32 to vector<16x16xf32>
    %135 = arith.addf %133, %134 : vector<16x16xf32>
    %136 = arith.addf %121, %122 : vector<16x16xf32>
    %cst_72 = arith.constant 5.852250e+01 : f32
    %137 = vector.broadcast %cst_72 : f32 to vector<16x16xf32>
    %138 = arith.addf %136, %137 : vector<16x16xf32>
    %139 = arith.mulf %135, %138 : vector<16x16xf32>
    %140 = tpu.reciprocal %139 : vector<16x16xf32> -> vector<16x16xf32>
    %141 = arith.mulf %132, %140 : vector<16x16xf32>
    %142 = vector.shape_cast %141 : vector<16x16xf32> to vector<1x16x16xf32>
    %cst_73 = arith.constant dense<0.000000e+00> : vector<1xf32>
    %143 = vector.multi_reduction <add>, %142, %cst_73 [1, 2] : vector<1x16x16xf32> to vector<1xf32>
    %144 = vector.shape_cast %143 : vector<1xf32> to vector<1x1x1xf32>
    %145 = vector.extract %144[0, 0, 0] : f32 from vector<1x1x1xf32>
    %c2_i32 = arith.constant 2 : i32
    %146 = arith.addi %2, %c2_i32 : i32
    %c6_i32_74 = arith.constant 6 : i32
    %147 = arith.cmpi slt, %146, %c6_i32_74 : i32
    %cst_75 = arith.constant 0.000000e+00 : f32
    %148 = arith.select %147, %145, %cst_75 : f32
    %149 = arith.addf %100, %148 : f32
    %c3 = arith.constant 3 : index
    %c0_76 = arith.constant 0 : index
    %c0_77 = arith.constant 0 : index
    %150 = vector.load %arg3[%c3, %c0_76, %c0_77] : memref<6x26x128xf32, #tpu.memory_space<vmem>>, vector<1x26x128xf32>
    %151 = vector.shape_cast %150 : vector<1x26x128xf32> to vector<26x128xf32>
    %c3_78 = arith.constant 3 : index
    %c0_79 = arith.constant 0 : index
    %c0_80 = arith.constant 0 : index
    %152 = vector.load %arg4[%c3_78, %c0_79, %c0_80] : memref<6x26x128xf32, #tpu.memory_space<vmem>>, vector<1x26x128xf32>
    %153 = vector.shape_cast %152 : vector<1x26x128xf32> to vector<26x128xf32>
    %cst_81 = arith.constant dense<0.000000e+00> : vector<16x128xf32>
    %154 = tpu.matmul %0, %151, %cst_81 {dimension_numbers = #tpu.dot_dimension_numbers<[1], [0], [0], [1], [0, 0, 1, 1], [], []>} : vector<16x26xf32>, vector<26x128xf32>, vector<16x128xf32> -> vector<16x128xf32>
    %cst_82 = arith.constant dense<0.000000e+00> : vector<16x16xf32>
    %155 = tpu.matmul %154, %1, %cst_82 {dimension_numbers = #tpu.dot_dimension_numbers<[1], [0], [0], [1], [0, 0, 1, 1], [], []>} : vector<16x128xf32>, vector<128x16xf32>, vector<16x16xf32> -> vector<16x16xf32>
    %cst_83 = arith.constant dense<0.000000e+00> : vector<16x128xf32>
    %156 = tpu.matmul %0, %153, %cst_83 {dimension_numbers = #tpu.dot_dimension_numbers<[1], [0], [0], [1], [0, 0, 1, 1], [], []>} : vector<16x26xf32>, vector<26x128xf32>, vector<16x128xf32> -> vector<16x128xf32>
    %cst_84 = arith.constant dense<0.000000e+00> : vector<16x16xf32>
    %157 = tpu.matmul %156, %1, %cst_84 {dimension_numbers = #tpu.dot_dimension_numbers<[1], [0], [0], [1], [0, 0, 1, 1], [], []>} : vector<16x128xf32>, vector<128x16xf32>, vector<16x16xf32> -> vector<16x16xf32>
    %158 = arith.mulf %151, %151 : vector<26x128xf32>
    %cst_85 = arith.constant dense<0.000000e+00> : vector<16x128xf32>
    %159 = tpu.matmul %0, %158, %cst_85 {dimension_numbers = #tpu.dot_dimension_numbers<[1], [0], [0], [1], [0, 0, 1, 1], [], []>} : vector<16x26xf32>, vector<26x128xf32>, vector<16x128xf32> -> vector<16x128xf32>
    %cst_86 = arith.constant dense<0.000000e+00> : vector<16x16xf32>
    %160 = tpu.matmul %159, %1, %cst_86 {dimension_numbers = #tpu.dot_dimension_numbers<[1], [0], [0], [1], [0, 0, 1, 1], [], []>} : vector<16x128xf32>, vector<128x16xf32>, vector<16x16xf32> -> vector<16x16xf32>
    %161 = arith.mulf %153, %153 : vector<26x128xf32>
    %cst_87 = arith.constant dense<0.000000e+00> : vector<16x128xf32>
    %162 = tpu.matmul %0, %161, %cst_87 {dimension_numbers = #tpu.dot_dimension_numbers<[1], [0], [0], [1], [0, 0, 1, 1], [], []>} : vector<16x26xf32>, vector<26x128xf32>, vector<16x128xf32> -> vector<16x128xf32>
    %cst_88 = arith.constant dense<0.000000e+00> : vector<16x16xf32>
    %163 = tpu.matmul %162, %1, %cst_88 {dimension_numbers = #tpu.dot_dimension_numbers<[1], [0], [0], [1], [0, 0, 1, 1], [], []>} : vector<16x128xf32>, vector<128x16xf32>, vector<16x16xf32> -> vector<16x16xf32>
    %164 = arith.mulf %151, %153 : vector<26x128xf32>
    %cst_89 = arith.constant dense<0.000000e+00> : vector<16x128xf32>
    %165 = tpu.matmul %0, %164, %cst_89 {dimension_numbers = #tpu.dot_dimension_numbers<[1], [0], [0], [1], [0, 0, 1, 1], [], []>} : vector<16x26xf32>, vector<26x128xf32>, vector<16x128xf32> -> vector<16x128xf32>
    %cst_90 = arith.constant dense<0.000000e+00> : vector<16x16xf32>
    %166 = tpu.matmul %165, %1, %cst_90 {dimension_numbers = #tpu.dot_dimension_numbers<[1], [0], [0], [1], [0, 0, 1, 1], [], []>} : vector<16x128xf32>, vector<128x16xf32>, vector<16x16xf32> -> vector<16x16xf32>
    %167 = arith.mulf %155, %155 : vector<16x16xf32>
    %168 = arith.mulf %157, %157 : vector<16x16xf32>
    %169 = arith.mulf %155, %157 : vector<16x16xf32>
    %170 = arith.subf %160, %167 : vector<16x16xf32>
    %171 = arith.subf %163, %168 : vector<16x16xf32>
    %172 = arith.subf %166, %169 : vector<16x16xf32>
    %cst_91 = arith.constant 2.000000e+00 : f32
    %173 = vector.broadcast %cst_91 : f32 to vector<16x16xf32>
    %174 = arith.mulf %173, %169 : vector<16x16xf32>
    %cst_92 = arith.constant 6.502500e+00 : f32
    %175 = vector.broadcast %cst_92 : f32 to vector<16x16xf32>
    %176 = arith.addf %174, %175 : vector<16x16xf32>
    %cst_93 = arith.constant 2.000000e+00 : f32
    %177 = vector.broadcast %cst_93 : f32 to vector<16x16xf32>
    %178 = arith.mulf %177, %172 : vector<16x16xf32>
    %cst_94 = arith.constant 5.852250e+01 : f32
    %179 = vector.broadcast %cst_94 : f32 to vector<16x16xf32>
    %180 = arith.addf %178, %179 : vector<16x16xf32>
    %181 = arith.mulf %176, %180 : vector<16x16xf32>
    %182 = arith.addf %167, %168 : vector<16x16xf32>
    %cst_95 = arith.constant 6.502500e+00 : f32
    %183 = vector.broadcast %cst_95 : f32 to vector<16x16xf32>
    %184 = arith.addf %182, %183 : vector<16x16xf32>
    %185 = arith.addf %170, %171 : vector<16x16xf32>
    %cst_96 = arith.constant 5.852250e+01 : f32
    %186 = vector.broadcast %cst_96 : f32 to vector<16x16xf32>
    %187 = arith.addf %185, %186 : vector<16x16xf32>
    %188 = arith.mulf %184, %187 : vector<16x16xf32>
    %189 = tpu.reciprocal %188 : vector<16x16xf32> -> vector<16x16xf32>
    %190 = arith.mulf %181, %189 : vector<16x16xf32>
    %191 = vector.shape_cast %190 : vector<16x16xf32> to vector<1x16x16xf32>
    %cst_97 = arith.constant dense<0.000000e+00> : vector<1xf32>
    %192 = vector.multi_reduction <add>, %191, %cst_97 [1, 2] : vector<1x16x16xf32> to vector<1xf32>
    %193 = vector.shape_cast %192 : vector<1xf32> to vector<1x1x1xf32>
    %194 = vector.extract %193[0, 0, 0] : f32 from vector<1x1x1xf32>
    %c3_i32 = arith.constant 3 : i32
    %195 = arith.addi %2, %c3_i32 : i32
    %c6_i32_98 = arith.constant 6 : i32
    %196 = arith.cmpi slt, %195, %c6_i32_98 : i32
    %cst_99 = arith.constant 0.000000e+00 : f32
    %197 = arith.select %196, %194, %cst_99 : f32
    %198 = arith.addf %149, %197 : f32
    %c4 = arith.constant 4 : index
    %c0_100 = arith.constant 0 : index
    %c0_101 = arith.constant 0 : index
    %199 = vector.load %arg3[%c4, %c0_100, %c0_101] : memref<6x26x128xf32, #tpu.memory_space<vmem>>, vector<1x26x128xf32>
    %200 = vector.shape_cast %199 : vector<1x26x128xf32> to vector<26x128xf32>
    %c4_102 = arith.constant 4 : index
    %c0_103 = arith.constant 0 : index
    %c0_104 = arith.constant 0 : index
    %201 = vector.load %arg4[%c4_102, %c0_103, %c0_104] : memref<6x26x128xf32, #tpu.memory_space<vmem>>, vector<1x26x128xf32>
    %202 = vector.shape_cast %201 : vector<1x26x128xf32> to vector<26x128xf32>
    %cst_105 = arith.constant dense<0.000000e+00> : vector<16x128xf32>
    %203 = tpu.matmul %0, %200, %cst_105 {dimension_numbers = #tpu.dot_dimension_numbers<[1], [0], [0], [1], [0, 0, 1, 1], [], []>} : vector<16x26xf32>, vector<26x128xf32>, vector<16x128xf32> -> vector<16x128xf32>
    %cst_106 = arith.constant dense<0.000000e+00> : vector<16x16xf32>
    %204 = tpu.matmul %203, %1, %cst_106 {dimension_numbers = #tpu.dot_dimension_numbers<[1], [0], [0], [1], [0, 0, 1, 1], [], []>} : vector<16x128xf32>, vector<128x16xf32>, vector<16x16xf32> -> vector<16x16xf32>
    %cst_107 = arith.constant dense<0.000000e+00> : vector<16x128xf32>
    %205 = tpu.matmul %0, %202, %cst_107 {dimension_numbers = #tpu.dot_dimension_numbers<[1], [0], [0], [1], [0, 0, 1, 1], [], []>} : vector<16x26xf32>, vector<26x128xf32>, vector<16x128xf32> -> vector<16x128xf32>
    %cst_108 = arith.constant dense<0.000000e+00> : vector<16x16xf32>
    %206 = tpu.matmul %205, %1, %cst_108 {dimension_numbers = #tpu.dot_dimension_numbers<[1], [0], [0], [1], [0, 0, 1, 1], [], []>} : vector<16x128xf32>, vector<128x16xf32>, vector<16x16xf32> -> vector<16x16xf32>
    %207 = arith.mulf %200, %200 : vector<26x128xf32>
    %cst_109 = arith.constant dense<0.000000e+00> : vector<16x128xf32>
    %208 = tpu.matmul %0, %207, %cst_109 {dimension_numbers = #tpu.dot_dimension_numbers<[1], [0], [0], [1], [0, 0, 1, 1], [], []>} : vector<16x26xf32>, vector<26x128xf32>, vector<16x128xf32> -> vector<16x128xf32>
    %cst_110 = arith.constant dense<0.000000e+00> : vector<16x16xf32>
    %209 = tpu.matmul %208, %1, %cst_110 {dimension_numbers = #tpu.dot_dimension_numbers<[1], [0], [0], [1], [0, 0, 1, 1], [], []>} : vector<16x128xf32>, vector<128x16xf32>, vector<16x16xf32> -> vector<16x16xf32>
    %210 = arith.mulf %202, %202 : vector<26x128xf32>
    %cst_111 = arith.constant dense<0.000000e+00> : vector<16x128xf32>
    %211 = tpu.matmul %0, %210, %cst_111 {dimension_numbers = #tpu.dot_dimension_numbers<[1], [0], [0], [1], [0, 0, 1, 1], [], []>} : vector<16x26xf32>, vector<26x128xf32>, vector<16x128xf32> -> vector<16x128xf32>
    %cst_112 = arith.constant dense<0.000000e+00> : vector<16x16xf32>
    %212 = tpu.matmul %211, %1, %cst_112 {dimension_numbers = #tpu.dot_dimension_numbers<[1], [0], [0], [1], [0, 0, 1, 1], [], []>} : vector<16x128xf32>, vector<128x16xf32>, vector<16x16xf32> -> vector<16x16xf32>
    %213 = arith.mulf %200, %202 : vector<26x128xf32>
    %cst_113 = arith.constant dense<0.000000e+00> : vector<16x128xf32>
    %214 = tpu.matmul %0, %213, %cst_113 {dimension_numbers = #tpu.dot_dimension_numbers<[1], [0], [0], [1], [0, 0, 1, 1], [], []>} : vector<16x26xf32>, vector<26x128xf32>, vector<16x128xf32> -> vector<16x128xf32>
    %cst_114 = arith.constant dense<0.000000e+00> : vector<16x16xf32>
    %215 = tpu.matmul %214, %1, %cst_114 {dimension_numbers = #tpu.dot_dimension_numbers<[1], [0], [0], [1], [0, 0, 1, 1], [], []>} : vector<16x128xf32>, vector<128x16xf32>, vector<16x16xf32> -> vector<16x16xf32>
    %216 = arith.mulf %204, %204 : vector<16x16xf32>
    %217 = arith.mulf %206, %206 : vector<16x16xf32>
    %218 = arith.mulf %204, %206 : vector<16x16xf32>
    %219 = arith.subf %209, %216 : vector<16x16xf32>
    %220 = arith.subf %212, %217 : vector<16x16xf32>
    %221 = arith.subf %215, %218 : vector<16x16xf32>
    %cst_115 = arith.constant 2.000000e+00 : f32
    %222 = vector.broadcast %cst_115 : f32 to vector<16x16xf32>
    %223 = arith.mulf %222, %218 : vector<16x16xf32>
    %cst_116 = arith.constant 6.502500e+00 : f32
    %224 = vector.broadcast %cst_116 : f32 to vector<16x16xf32>
    %225 = arith.addf %223, %224 : vector<16x16xf32>
    %cst_117 = arith.constant 2.000000e+00 : f32
    %226 = vector.broadcast %cst_117 : f32 to vector<16x16xf32>
    %227 = arith.mulf %226, %221 : vector<16x16xf32>
    %cst_118 = arith.constant 5.852250e+01 : f32
    %228 = vector.broadcast %cst_118 : f32 to vector<16x16xf32>
    %229 = arith.addf %227, %228 : vector<16x16xf32>
    %230 = arith.mulf %225, %229 : vector<16x16xf32>
    %231 = arith.addf %216, %217 : vector<16x16xf32>
    %cst_119 = arith.constant 6.502500e+00 : f32
    %232 = vector.broadcast %cst_119 : f32 to vector<16x16xf32>
    %233 = arith.addf %231, %232 : vector<16x16xf32>
    %234 = arith.addf %219, %220 : vector<16x16xf32>
    %cst_120 = arith.constant 5.852250e+01 : f32
    %235 = vector.broadcast %cst_120 : f32 to vector<16x16xf32>
    %236 = arith.addf %234, %235 : vector<16x16xf32>
    %237 = arith.mulf %233, %236 : vector<16x16xf32>
    %238 = tpu.reciprocal %237 : vector<16x16xf32> -> vector<16x16xf32>
    %239 = arith.mulf %230, %238 : vector<16x16xf32>
    %240 = vector.shape_cast %239 : vector<16x16xf32> to vector<1x16x16xf32>
    %cst_121 = arith.constant dense<0.000000e+00> : vector<1xf32>
    %241 = vector.multi_reduction <add>, %240, %cst_121 [1, 2] : vector<1x16x16xf32> to vector<1xf32>
    %242 = vector.shape_cast %241 : vector<1xf32> to vector<1x1x1xf32>
    %243 = vector.extract %242[0, 0, 0] : f32 from vector<1x1x1xf32>
    %c4_i32 = arith.constant 4 : i32
    %244 = arith.addi %2, %c4_i32 : i32
    %c6_i32_122 = arith.constant 6 : i32
    %245 = arith.cmpi slt, %244, %c6_i32_122 : i32
    %cst_123 = arith.constant 0.000000e+00 : f32
    %246 = arith.select %245, %243, %cst_123 : f32
    %247 = arith.addf %198, %246 : f32
    %c5 = arith.constant 5 : index
    %c0_124 = arith.constant 0 : index
    %c0_125 = arith.constant 0 : index
    %248 = vector.load %arg3[%c5, %c0_124, %c0_125] : memref<6x26x128xf32, #tpu.memory_space<vmem>>, vector<1x26x128xf32>
    %249 = vector.shape_cast %248 : vector<1x26x128xf32> to vector<26x128xf32>
    %c5_126 = arith.constant 5 : index
    %c0_127 = arith.constant 0 : index
    %c0_128 = arith.constant 0 : index
    %250 = vector.load %arg4[%c5_126, %c0_127, %c0_128] : memref<6x26x128xf32, #tpu.memory_space<vmem>>, vector<1x26x128xf32>
    %251 = vector.shape_cast %250 : vector<1x26x128xf32> to vector<26x128xf32>
    %cst_129 = arith.constant dense<0.000000e+00> : vector<16x128xf32>
    %252 = tpu.matmul %0, %249, %cst_129 {dimension_numbers = #tpu.dot_dimension_numbers<[1], [0], [0], [1], [0, 0, 1, 1], [], []>} : vector<16x26xf32>, vector<26x128xf32>, vector<16x128xf32> -> vector<16x128xf32>
    %cst_130 = arith.constant dense<0.000000e+00> : vector<16x16xf32>
    %253 = tpu.matmul %252, %1, %cst_130 {dimension_numbers = #tpu.dot_dimension_numbers<[1], [0], [0], [1], [0, 0, 1, 1], [], []>} : vector<16x128xf32>, vector<128x16xf32>, vector<16x16xf32> -> vector<16x16xf32>
    %cst_131 = arith.constant dense<0.000000e+00> : vector<16x128xf32>
    %254 = tpu.matmul %0, %251, %cst_131 {dimension_numbers = #tpu.dot_dimension_numbers<[1], [0], [0], [1], [0, 0, 1, 1], [], []>} : vector<16x26xf32>, vector<26x128xf32>, vector<16x128xf32> -> vector<16x128xf32>
    %cst_132 = arith.constant dense<0.000000e+00> : vector<16x16xf32>
    %255 = tpu.matmul %254, %1, %cst_132 {dimension_numbers = #tpu.dot_dimension_numbers<[1], [0], [0], [1], [0, 0, 1, 1], [], []>} : vector<16x128xf32>, vector<128x16xf32>, vector<16x16xf32> -> vector<16x16xf32>
    %256 = arith.mulf %249, %249 : vector<26x128xf32>
    %cst_133 = arith.constant dense<0.000000e+00> : vector<16x128xf32>
    %257 = tpu.matmul %0, %256, %cst_133 {dimension_numbers = #tpu.dot_dimension_numbers<[1], [0], [0], [1], [0, 0, 1, 1], [], []>} : vector<16x26xf32>, vector<26x128xf32>, vector<16x128xf32> -> vector<16x128xf32>
    %cst_134 = arith.constant dense<0.000000e+00> : vector<16x16xf32>
    %258 = tpu.matmul %257, %1, %cst_134 {dimension_numbers = #tpu.dot_dimension_numbers<[1], [0], [0], [1], [0, 0, 1, 1], [], []>} : vector<16x128xf32>, vector<128x16xf32>, vector<16x16xf32> -> vector<16x16xf32>
    %259 = arith.mulf %251, %251 : vector<26x128xf32>
    %cst_135 = arith.constant dense<0.000000e+00> : vector<16x128xf32>
    %260 = tpu.matmul %0, %259, %cst_135 {dimension_numbers = #tpu.dot_dimension_numbers<[1], [0], [0], [1], [0, 0, 1, 1], [], []>} : vector<16x26xf32>, vector<26x128xf32>, vector<16x128xf32> -> vector<16x128xf32>
    %cst_136 = arith.constant dense<0.000000e+00> : vector<16x16xf32>
    %261 = tpu.matmul %260, %1, %cst_136 {dimension_numbers = #tpu.dot_dimension_numbers<[1], [0], [0], [1], [0, 0, 1, 1], [], []>} : vector<16x128xf32>, vector<128x16xf32>, vector<16x16xf32> -> vector<16x16xf32>
    %262 = arith.mulf %249, %251 : vector<26x128xf32>
    %cst_137 = arith.constant dense<0.000000e+00> : vector<16x128xf32>
    %263 = tpu.matmul %0, %262, %cst_137 {dimension_numbers = #tpu.dot_dimension_numbers<[1], [0], [0], [1], [0, 0, 1, 1], [], []>} : vector<16x26xf32>, vector<26x128xf32>, vector<16x128xf32> -> vector<16x128xf32>
    %cst_138 = arith.constant dense<0.000000e+00> : vector<16x16xf32>
    %264 = tpu.matmul %263, %1, %cst_138 {dimension_numbers = #tpu.dot_dimension_numbers<[1], [0], [0], [1], [0, 0, 1, 1], [], []>} : vector<16x128xf32>, vector<128x16xf32>, vector<16x16xf32> -> vector<16x16xf32>
    %265 = arith.mulf %253, %253 : vector<16x16xf32>
    %266 = arith.mulf %255, %255 : vector<16x16xf32>
    %267 = arith.mulf %253, %255 : vector<16x16xf32>
    %268 = arith.subf %258, %265 : vector<16x16xf32>
    %269 = arith.subf %261, %266 : vector<16x16xf32>
    %270 = arith.subf %264, %267 : vector<16x16xf32>
    %cst_139 = arith.constant 2.000000e+00 : f32
    %271 = vector.broadcast %cst_139 : f32 to vector<16x16xf32>
    %272 = arith.mulf %271, %267 : vector<16x16xf32>
    %cst_140 = arith.constant 6.502500e+00 : f32
    %273 = vector.broadcast %cst_140 : f32 to vector<16x16xf32>
    %274 = arith.addf %272, %273 : vector<16x16xf32>
    %cst_141 = arith.constant 2.000000e+00 : f32
    %275 = vector.broadcast %cst_141 : f32 to vector<16x16xf32>
    %276 = arith.mulf %275, %270 : vector<16x16xf32>
    %cst_142 = arith.constant 5.852250e+01 : f32
    %277 = vector.broadcast %cst_142 : f32 to vector<16x16xf32>
    %278 = arith.addf %276, %277 : vector<16x16xf32>
    %279 = arith.mulf %274, %278 : vector<16x16xf32>
    %280 = arith.addf %265, %266 : vector<16x16xf32>
    %cst_143 = arith.constant 6.502500e+00 : f32
    %281 = vector.broadcast %cst_143 : f32 to vector<16x16xf32>
    %282 = arith.addf %280, %281 : vector<16x16xf32>
    %283 = arith.addf %268, %269 : vector<16x16xf32>
    %cst_144 = arith.constant 5.852250e+01 : f32
    %284 = vector.broadcast %cst_144 : f32 to vector<16x16xf32>
    %285 = arith.addf %283, %284 : vector<16x16xf32>
    %286 = arith.mulf %282, %285 : vector<16x16xf32>
    %287 = tpu.reciprocal %286 : vector<16x16xf32> -> vector<16x16xf32>
    %288 = arith.mulf %279, %287 : vector<16x16xf32>
    %289 = vector.shape_cast %288 : vector<16x16xf32> to vector<1x16x16xf32>
    %cst_145 = arith.constant dense<0.000000e+00> : vector<1xf32>
    %290 = vector.multi_reduction <add>, %289, %cst_145 [1, 2] : vector<1x16x16xf32> to vector<1xf32>
    %291 = vector.shape_cast %290 : vector<1xf32> to vector<1x1x1xf32>
    %292 = vector.extract %291[0, 0, 0] : f32 from vector<1x1x1xf32>
    %c5_i32 = arith.constant 5 : i32
    %293 = arith.addi %2, %c5_i32 : i32
    %c6_i32_146 = arith.constant 6 : i32
    %294 = arith.cmpi slt, %293, %c6_i32_146 : i32
    %cst_147 = arith.constant 0.000000e+00 : f32
    %295 = arith.select %294, %292, %cst_147 : f32
    %296 = arith.addf %247, %295 : f32
    %297 = vector.broadcast %296 : f32 to vector<1x1x128xf32>
    %c0_148 = arith.constant 0 : index
    %c0_149 = arith.constant 0 : index
    %c0_150 = arith.constant 0 : index
    %298 = vector.load %arg5[%c0_148, %c0_149, %c0_150] : memref<1x1x128xf32, #tpu.memory_space<vmem>>, vector<1x1x128xf32>
    tpu.vector_store %arg5[%c0_148, %c0_149, %c0_150], %297 {strides = array<i32>} : memref<1x1x128xf32, #tpu.memory_space<vmem>>, vector<1x1x128xf32>,
    return
  }
  func.func @transform_0(%arg0: i32) -> (i32, i32) {
    %c0_i32 = arith.constant 0 : i32
    %c0_i32_0 = arith.constant 0 : i32
    %c0_i32_1 = arith.constant 0 : i32
    return %c0_i32, %c0_i32_0 : i32, i32
  }
  func.func @transform_1(%arg0: i32) -> (i32, i32) {
    %c0_i32 = arith.constant 0 : i32
    %c0_i32_0 = arith.constant 0 : i32
    %c0_i32_1 = arith.constant 0 : i32
    return %c0_i32, %c0_i32_0 : i32, i32
  }
  func.func @transform_2(%arg0: i32) -> (i32, i32, i32) {
    %c0_i32 = arith.constant 0 : i32
    %c0_i32_0 = arith.constant 0 : i32
    %c0_i32_1 = arith.constant 0 : i32
    return %arg0, %c0_i32, %c0_i32_0 : i32, i32, i32
  }
  func.func @transform_3(%arg0: i32) -> (i32, i32, i32) {
    %c0_i32 = arith.constant 0 : i32
    %c0_i32_0 = arith.constant 0 : i32
    %c0_i32_1 = arith.constant 0 : i32
    return %arg0, %c0_i32, %c0_i32_0 : i32, i32, i32
  }
  func.func @transform_4(%arg0: i32) -> (i32, i32, i32) {
    %c0_i32 = arith.constant 0 : i32
    %c0_i32_0 = arith.constant 0 : i32
    %c0_i32_1 = arith.constant 0 : i32
    return %arg0, %c0_i32, %c0_i32_0 : i32, i32, i32
  }
}

</mosaic_0001>

<llo_original>
// kernel: tpu_custom_call.1
$region0: #{tpu_custom_call.1}
  #allocation0 [shape = 'u32[]', space=smem, size = 0x4, offset = 0x4, fixed_abs, tag = 'smem constant byte address 0x4 - core index']
  #allocation1 [shape = 'u32[144,128]{1,0:T(1,128)}', space=vmem, size = 0x12000, scoped, tag = 'internal scratch']
  %s0 = inlined_call_operand.vmem [shape: f32[16,26], index: 0, kind: input, shape index: {}]
  %s1 = inlined_call_operand.vmem [shape: f32[128,16], index: 1, kind: input, shape index: {}]
  %s2 = inlined_call_operand.hbm [shape: f32[6,26,128], index: 2, kind: input, shape index: {}]
  %s3 = inlined_call_operand.hbm [shape: f32[6,26,128], index: 3, kind: input, shape index: {}]
  %s4 = inlined_call_operand.hbm [shape: f32[1,1,128], index: 4, kind: output, shape index: {}]
  %s5 = sld [smem:[#allocation0]]
  $region34: #{tpu_custom_call.1} parent=0
    _
  %s7 = ssub.s32 1, %s5
  %s8 = scalar_select 0, %s7, %s5
  $region1: #{tpu_custom_call.1} parent=0
    #allocation2 [shape = 'u8[98304]{0}', space=vmem, size = 0x18000, scoped, tag = 'input window, operand 2, single buffered']
    #allocation3 [shape = 's32[1]{0}', space=sflag, size = 0x4, scoped, tag = 'scoped memory for tpu_custom_call.1']
    #allocation4 [shape = 's32[1]{0}', space=sflag, size = 0x4, scoped, tag = 'scoped memory for tpu_custom_call.1']
    #allocation5 [shape = 'u8[98304]{0}', space=vmem, size = 0x18000, scoped, tag = 'input window, operand 3, single buffered']
    #allocation6 [shape = 's32[1]{0}', space=sflag, size = 0x4, scoped, tag = 'scoped memory for tpu_custom_call.1']
    #allocation7 [shape = 'u8[512]{0}', space=vmem, size = 0x400, scoped, tag = 'output window, operand 0, single buffered']
    %9 = vsyncpa [#allocation3], 0
    %10 = vsyncpa [#allocation6], 0
    %11 = vsyncpa [#allocation4], 0
    // Predicated region
    $region2: #{tpu_custom_call.1} parent=1 // pred_check
      _
    $region3: #{tpu_custom_call.1} parent=1 // pred_check_branch
      %13 = sbr.rel (0) target = $region5
    $region4: #{tpu_custom_call.1} parent=1 // pred_region
      _
    $region5: #{tpu_custom_call.1} parent=1 // pred_fallthru
      _
    // Predicated region
    $region6: #{tpu_custom_call.1} parent=1 // pred_check
      _
    $region7: #{tpu_custom_call.1} parent=1 // pred_check_branch
      %15 = sbr.rel (0) target = $region9
    $region8: #{tpu_custom_call.1} parent=1 // pred_region
      _
    $region9: #{tpu_custom_call.1} parent=1 // pred_fallthru
      _
    // Predicated region
    $region10: #{tpu_custom_call.1} parent=1 // pred_check
      _
    $region11: #{tpu_custom_call.1} parent=1 // pred_check_branch
      %17 = sbr.rel (0) target = $region13
    $region12: #{tpu_custom_call.1} parent=1 // pred_region
      %s19 = ssub.s32 3072, 3072
      %20 = vsyncadd [#allocation3], %s19
      %s21 = sshll.u32 [#allocation2], 4
      %s22 = int_to_ptr.vmem [resolvable:$true] %s21
      %27 = dma.hbm_to_vmem [thread:$0]  %s2, 3072, %s22, [#allocation3], 128, 128, 8
    $region13: #{tpu_custom_call.1} parent=1 // pred_fallthru
      _
    // Predicated region
    $region14: #{tpu_custom_call.1} parent=1 // pred_check
      _
    $region15: #{tpu_custom_call.1} parent=1 // pred_check_branch
      %29 = sbr.rel (0) target = $region17
    $region16: #{tpu_custom_call.1} parent=1 // pred_region
      %s31 = ssub.s32 3072, 3072
      %32 = vsyncadd [#allocation6], %s31
      %s33 = sshll.u32 [#allocation5], 4
      %s34 = int_to_ptr.vmem [resolvable:$true] %s33
      %39 = dma.hbm_to_vmem [thread:$0]  %s3, 3072, %s34, [#allocation6], 128, 128, 8
    $region17: #{tpu_custom_call.1} parent=1 // pred_fallthru
      _
    // Predicated region
    $region18: #{tpu_custom_call.1} parent=1 // pred_check
      _
    $region19: #{tpu_custom_call.1} parent=1 // pred_check_branch
      %41 = sbr.rel (0) target = $region21
    $region20: #{tpu_custom_call.1} parent=1 // pred_region
      %42 = dma.done [#allocation3], 3072
    $region21: #{tpu_custom_call.1} parent=1 // pred_fallthru
      _
    // Predicated region
    $region22: #{tpu_custom_call.1} parent=1 // pred_check
      _
    $region23: #{tpu_custom_call.1} parent=1 // pred_check_branch
      %44 = sbr.rel (0) target = $region25
    $region24: #{tpu_custom_call.1} parent=1 // pred_region
      %45 = dma.done [#allocation6], 3072
    $region25: #{tpu_custom_call.1} parent=1 // pred_fallthru
      _
    %v46 = vld [vmem:[%s0] sm:$0xff]
    %v47 = vld [vmem:[%s0 + $0x8] sm:$0xff]
    %v48 = vld [vmem:[%s1] sm:$0xff]
    %v49 = vld [vmem:[%s1 + $0x8] sm:$0xff]
    %v50 = vld [vmem:[%s1 + $0x10] sm:$0xff]
    %v51 = vld [vmem:[%s1 + $0x18] sm:$0xff]
    %v52 = vld [vmem:[%s1 + $0x20] sm:$0xff]
    %v53 = vld [vmem:[%s1 + $0x28] sm:$0xff]
    %v54 = vld [vmem:[%s1 + $0x30] sm:$0xff]
    %v55 = vld [vmem:[%s1 + $0x38] sm:$0xff]
    %v56 = vld [vmem:[%s1 + $0x40] sm:$0xff]
    %v57 = vld [vmem:[%s1 + $0x48] sm:$0xff]
    %v58 = vld [vmem:[%s1 + $0x50] sm:$0xff]
    %v59 = vld [vmem:[%s1 + $0x58] sm:$0xff]
    %v60 = vld [vmem:[%s1 + $0x60] sm:$0xff]
    %v61 = vld [vmem:[%s1 + $0x68] sm:$0xff]
    %v62 = vld [vmem:[%s1 + $0x70] sm:$0xff]
    %v63 = vld [vmem:[%s1 + $0x78] sm:$0xff]
    %s64 = smul.u32 0, 6
    %v65 = vld [vmem:[#allocation2] sm:$0xff]
    %v66 = vld [vmem:[#allocation2 + $0x8] sm:$0xff]
    %v67 = vld [vmem:[#allocation2 + $0x10] sm:$0xff]
    %v68 = vld [vmem:[#allocation2 + $0x18] sm:$0x3]
    %v69 = vld [vmem:[#allocation5] sm:$0xff]
    %v70 = vld [vmem:[#allocation5 + $0x8] sm:$0xff]
    %v71 = vld [vmem:[#allocation5 + $0x10] sm:$0xff]
    %v72 = vld [vmem:[#allocation5 + $0x18] sm:$0x3]
    %vm73 = vcmask 211968
    %v75 = vsel %vm73, %v46, 0
    %v78 = vsel %vm73, %v47, 0
    %vm80 = vcmask 1041408
    %v82 = vsel %vm80, %v68, 0
    %84 = vmatprep.subr.mxu0 0.0
    %85 = vmatpush1.msra.mxu0 %v65
    %86 = vmatprep.subr.mxu0 0.0
    %87 = vmatpush1.msra.mxu0 %v66
    %88 = vmatprep.subr.mxu0 0.0
    %89 = vmatpush1.msra.mxu0 %v67
    %90 = vmatprep.subr.mxu0 0.0
    %91 = vmatpush1.msra.mxu0 %v82
    %92 = vmatprep.subr.mxu0 0.0
    %93 = vmatpush1.msra.mxu0 0.0
    %94 = vmatprep.subr.mxu0 0.0
    %95 = vmatpush1.msra.mxu0 0.0
    %96 = vmatprep.subr.mxu0 0.0
    %97 = vmatpush1.msra.mxu0 0.0
    %98 = vmatprep.subr.mxu0 0.0
    %99 = vmatpush1.msra.mxu0 0.0
    %100 = vmatprep.subr.mxu0 0.0
    %101 = vmatpush1.msra.mxu0 0.0
    %102 = vmatprep.subr.mxu0 0.0
    %103 = vmatpush1.msra.mxu0 0.0
    %104 = vmatprep.subr.mxu0 0.0
    %105 = vmatpush1.msra.mxu0 0.0
    %106 = vmatprep.subr.mxu0 0.0
    %107 = vmatpush1.msra.mxu0 0.0
    %108 = vmatprep.subr.mxu0 0.0
    %109 = vmatpush1.msra.mxu0 0.0
    %110 = vmatprep.subr.mxu0 0.0
    %111 = vmatpush1.msra.mxu0 0.0
    %112 = vmatprep.subr.mxu0 0.0
    %113 = vmatpush1.msra.mxu0 0.0
    %114 = vmatprep.subr.mxu0 0.0
    %115 = vmatpush1.msra.mxu0 0.0
    %116 = vmatprep.subr.mxu0 0.0
    %117 = vmatpush1.msra.mxu0 0.0
    %118 = vmatprep.subr.mxu0 0.0
    %119 = vmatpush1.msra.mxu0 0.0
    %120 = vmatprep.subr.mxu0 0.0
    %121 = vmatpush1.msra.mxu0 0.0
    %122 = vmatprep.subr.mxu0 0.0
    %123 = vmatpush1.msra.mxu0 0.0
    %124 = vmatprep.subr.mxu0 0.0
    %125 = vmatpush1.msra.mxu0 0.0
    %126 = vmatprep.subr.mxu0 0.0
    %127 = vmatpush1.msra.mxu0 0.0
    %128 = vmatprep.subr.mxu0 0.0
    %129 = vmatpush1.msra.mxu0 0.0
    %130 = vmatprep.subr.mxu0 0.0
    %131 = vmatpush1.msra.mxu0 0.0
    %132 = vmatprep.subr.mxu0 0.0
    %133 = vmatpush1.msra.mxu0 0.0
    %134 = vmatprep.subr.mxu0 0.0
    %135 = vmatpush1.msra.mxu0 0.0
    %136 = vmatprep.subr.mxu0 0.0
    %137 = vmatpush1.msra.mxu0 0.0
    %138 = vmatprep.subr.mxu0 0.0
    %139 = vmatpush1.msra.mxu0 0.0
    %140 = vmatprep.subr.mxu0 0.0
    %141 = vmatpush1.msra.mxu0 0.0
    %142 = vmatprep.subr.mxu0 0.0
    %143 = vmatpush1.msra.mxu0 0.0
    %144 = vmatprep.subr.mxu0 0.0
    %145 = vmatpush1.msra.mxu0 0.0
    %146 = vmatprep.subr.mxu0 0.0
    %147 = vmatpush1.msra.mxu0 0.0
    %148 = vmatprep.mubr.f32.mxu0 0.0
    %149 = vmatmul.mubr.f32.gmra.mrb[0].mxu0 %v75
    %v150 = vpop.f32.mrb[0].mxu0
    %v151 = vadd.f32 0.0, %v150
    %v152 = vpop.f32.mrb[0].mxu0
    %153 = vmatprep.mubr.f32.mxu0 0.0
    %154 = vmatmul.mubr.f32.gmra.mrb[0].mxu0 %v78
    %v155 = vpop.f32.mrb[0].mxu0
    %v156 = vadd.f32 0.0, %v155
    %v157 = vpop.f32.mrb[0].mxu0
    %158 = vdwg.mxu0
    %159 = vmatprep.subr.mxu0 0.0
    %160 = vmatpush1.msra.mxu0 %v48
    %161 = vmatprep.subr.mxu0 0.0
    %162 = vmatpush1.msra.mxu0 %v49
    %163 = vmatprep.subr.mxu0 0.0
    %164 = vmatpush1.msra.mxu0 %v50
    %165 = vmatprep.subr.mxu0 0.0
    %166 = vmatpush1.msra.mxu0 %v51
    %167 = vmatprep.subr.mxu0 0.0
    %168 = vmatpush1.msra.mxu0 %v52
    %169 = vmatprep.subr.mxu0 0.0
    %170 = vmatpush1.msra.mxu0 %v53
    %171 = vmatprep.subr.mxu0 0.0
    %172 = vmatpush1.msra.mxu0 %v54
    %173 = vmatprep.subr.mxu0 0.0
    %174 = vmatpush1.msra.mxu0 %v55
    %175 = vmatprep.subr.mxu0 0.0
    %176 = vmatpush1.msra.mxu0 %v56
    %177 = vmatprep.subr.mxu0 0.0
    %178 = vmatpush1.msra.mxu0 %v57
    %179 = vmatprep.subr.mxu0 0.0
    %180 = vmatpush1.msra.mxu0 %v58
    %181 = vmatprep.subr.mxu0 0.0
    %182 = vmatpush1.msra.mxu0 %v59
    %183 = vmatprep.subr.mxu0 0.0
    %184 = vmatpush1.msra.mxu0 %v60
    %185 = vmatprep.subr.mxu0 0.0
    %186 = vmatpush1.msra.mxu0 %v61
    %187 = vmatprep.subr.mxu0 0.0
    %188 = vmatpush1.msra.mxu0 %v62
    %189 = vmatprep.subr.mxu0 0.0
    %190 = vmatpush1.msra.mxu0 %v63
    %191 = vmatprep.subr.mxu0 0.0
    %192 = vmatpush1.msra.mxu0 0.0
    %193 = vmatprep.subr.mxu0 0.0
    %194 = vmatpush1.msra.mxu0 0.0
    %195 = vmatprep.subr.mxu0 0.0
    %196 = vmatpush1.msra.mxu0 0.0
    %197 = vmatprep.subr.mxu0 0.0
    %198 = vmatpush1.msra.mxu0 0.0
    %199 = vmatprep.subr.mxu0 0.0
    %200 = vmatpush1.msra.mxu0 0.0
    %201 = vmatprep.subr.mxu0 0.0
    %202 = vmatpush1.msra.mxu0 0.0
    %203 = vmatprep.subr.mxu0 0.0
    %204 = vmatpush1.msra.mxu0 0.0
    %205 = vmatprep.subr.mxu0 0.0
    %206 = vmatpush1.msra.mxu0 0.0
    %207 = vmatprep.subr.mxu0 0.0
    %208 = vmatpush1.msra.mxu0 0.0
    %209 = vmatprep.subr.mxu0 0.0
    %210 = vmatpush1.msra.mxu0 0.0
    %211 = vmatprep.subr.mxu0 0.0
    %212 = vmatpush1.msra.mxu0 0.0
    %213 = vmatprep.subr.mxu0 0.0
    %214 = vmatpush1.msra.mxu0 0.0
    %215 = vmatprep.subr.mxu0 0.0
    %216 = vmatpush1.msra.mxu0 0.0
    %217 = vmatprep.subr.mxu0 0.0
    %218 = vmatpush1.msra.mxu0 0.0
    %219 = vmatprep.subr.mxu0 0.0
    %220 = vmatpush1.msra.mxu0 0.0
    %221 = vmatprep.subr.mxu0 0.0
    %222 = vmatpush1.msra.mxu0 0.0
    %223 = vmatprep.mubr.f32.mxu0 0.0
    %224 = vmatmul.mubr.f32.gmra.mrb[0].mxu0 %v151
    %v225 = vpop.f32.mrb[0].mxu0
    %v226 = vadd.f32 0.0, %v225
    %v227 = vpop.f32.mrb[0].mxu0
    %228 = vmatprep.mubr.f32.mxu0 0.0
    %229 = vmatmul.mubr.f32.gmra.mrb[0].mxu0 %v156
    %v230 = vpop.f32.mrb[0].mxu0
    %v231 = vadd.f32 0.0, %v230
    %v232 = vpop.f32.mrb[0].mxu0
    %233 = vdwg.mxu0
    %v235 = vsel %vm80, %v72, 0
    %237 = vmatprep.subr.mxu0 0.0
    %238 = vmatpush1.msra.mxu0 %v69
    %239 = vmatprep.subr.mxu0 0.0
    %240 = vmatpush1.msra.mxu0 %v70
    %241 = vmatprep.subr.mxu0 0.0
    %242 = vmatpush1.msra.mxu0 %v71
    %243 = vmatprep.subr.mxu0 0.0
    %244 = vmatpush1.msra.mxu0 %v235
    %245 = vmatprep.subr.mxu0 0.0
    %246 = vmatpush1.msra.mxu0 0.0
    %247 = vmatprep.subr.mxu0 0.0
    %248 = vmatpush1.msra.mxu0 0.0
    %249 = vmatprep.subr.mxu0 0.0
    %250 = vmatpush1.msra.mxu0 0.0
    %251 = vmatprep.subr.mxu0 0.0
    %252 = vmatpush1.msra.mxu0 0.0
    %253 = vmatprep.subr.mxu0 0.0
    %254 = vmatpush1.msra.mxu0 0.0
    %255 = vmatprep.subr.mxu0 0.0
    %256 = vmatpush1.msra.mxu0 0.0
    %257 = vmatprep.subr.mxu0 0.0
    %258 = vmatpush1.msra.mxu0 0.0
    %259 = vmatprep.subr.mxu0 0.0
    %260 = vmatpush1.msra.mxu0 0.0
    %261 = vmatprep.subr.mxu0 0.0
    %262 = vmatpush1.msra.mxu0 0.0
    %263 = vmatprep.subr.mxu0 0.0
    %264 = vmatpush1.msra.mxu0 0.0
    %265 = vmatprep.subr.mxu0 0.0
    %266 = vmatpush1.msra.mxu0 0.0
    %267 = vmatprep.subr.mxu0 0.0
    %268 = vmatpush1.msra.mxu0 0.0
    %269 = vmatprep.subr.mxu0 0.0
    %270 = vmatpush1.msra.mxu0 0.0
    %271 = vmatprep.subr.mxu0 0.0
    %272 = vmatpush1.msra.mxu0 0.0
    %273 = vmatprep.subr.mxu0 0.0
    %274 = vmatpush1.msra.mxu0 0.0
    %275 = vmatprep.subr.mxu0 0.0
    %276 = vmatpush1.msra.mxu0 0.0
    %277 = vmatprep.subr.mxu0 0.0
    %278 = vmatpush1.msra.mxu0 0.0
    %279 = vmatprep.subr.mxu0 0.0
    %280 = vmatpush1.msra.mxu0 0.0
    %281 = vmatprep.subr.mxu0 0.0
    %282 = vmatpush1.msra.mxu0 0.0
    %283 = vmatprep.subr.mxu0 0.0
    %284 = vmatpush1.msra.mxu0 0.0
    %285 = vmatprep.subr.mxu0 0.0
    %286 = vmatpush1.msra.mxu0 0.0
    %287 = vmatprep.subr.mxu0 0.0
    %288 = vmatpush1.msra.mxu0 0.0
    %289 = vmatprep.subr.mxu0 0.0
    %290 = vmatpush1.msra.mxu0 0.0
    %291 = vmatprep.subr.mxu0 0.0
    %292 = vmatpush1.msra.mxu0 0.0
    %293 = vmatprep.subr.mxu0 0.0
    %294 = vmatpush1.msra.mxu0 0.0
    %295 = vmatprep.subr.mxu0 0.0
    %296 = vmatpush1.msra.mxu0 0.0
    %297 = vmatprep.subr.mxu0 0.0
    %298 = vmatpush1.msra.mxu0 0.0
    %299 = vmatprep.subr.mxu0 0.0
    %300 = vmatpush1.msra.mxu0 0.0
    %301 = vmatprep.mubr.f32.mxu0 0.0
    %302 = vmatmul.mubr.f32.gmra.mrb[0].mxu0 %v75
    %v303 = vpop.f32.mrb[0].mxu0
    %v304 = vadd.f32 0.0, %v303
    %v305 = vpop.f32.mrb[0].mxu0
    %306 = vmatprep.mubr.f32.mxu0 0.0
    %307 = vmatmul.mubr.f32.gmra.mrb[0].mxu0 %v78
    %v308 = vpop.f32.mrb[0].mxu0
    %v309 = vadd.f32 0.0, %v308
    %v310 = vpop.f32.mrb[0].mxu0
    %311 = vdwg.mxu0
    %312 = vmatprep.subr.mxu0 0.0
    %313 = vmatpush1.msra.mxu0 %v48
    %314 = vmatprep.subr.mxu0 0.0
    %315 = vmatpush1.msra.mxu0 %v49
    %316 = vmatprep.subr.mxu0 0.0
    %317 = vmatpush1.msra.mxu0 %v50
    %318 = vmatprep.subr.mxu0 0.0
    %319 = vmatpush1.msra.mxu0 %v51
    %320 = vmatprep.subr.mxu0 0.0
    %321 = vmatpush1.msra.mxu0 %v52
    %322 = vmatprep.subr.mxu0 0.0
    %323 = vmatpush1.msra.mxu0 %v53
    %324 = vmatprep.subr.mxu0 0.0
    %325 = vmatpush1.msra.mxu0 %v54
    %326 = vmatprep.subr.mxu0 0.0
    %327 = vmatpush1.msra.mxu0 %v55
    %328 = vmatprep.subr.mxu0 0.0
    %329 = vmatpush1.msra.mxu0 %v56
    %330 = vmatprep.subr.mxu0 0.0
    %331 = vmatpush1.msra.mxu0 %v57
    %332 = vmatprep.subr.mxu0 0.0
    %333 = vmatpush1.msra.mxu0 %v58
    %334 = vmatprep.subr.mxu0 0.0
    %335 = vmatpush1.msra.mxu0 %v59
    %336 = vmatprep.subr.mxu0 0.0
    %337 = vmatpush1.msra.mxu0 %v60
    %338 = vmatprep.subr.mxu0 0.0
    %339 = vmatpush1.msra.mxu0 %v61
    %340 = vmatprep.subr.mxu0 0.0
    %341 = vmatpush1.msra.mxu0 %v62
    %342 = vmatprep.subr.mxu0 0.0
    %343 = vmatpush1.msra.mxu0 %v63
    %344 = vmatprep.subr.mxu0 0.0
    %345 = vmatpush1.msra.mxu0 0.0
    %346 = vmatprep.subr.mxu0 0.0
    %347 = vmatpush1.msra.mxu0 0.0
    %348 = vmatprep.subr.mxu0 0.0
    %349 = vmatpush1.msra.mxu0 0.0
    %350 = vmatprep.subr.mxu0 0.0
    %351 = vmatpush1.msra.mxu0 0.0
    %352 = vmatprep.subr.mxu0 0.0
    %353 = vmatpush1.msra.mxu0 0.0
    %354 = vmatprep.subr.mxu0 0.0
    %355 = vmatpush1.msra.mxu0 0.0
    %356 = vmatprep.subr.mxu0 0.0
    %357 = vmatpush1.msra.mxu0 0.0
    %358 = vmatprep.subr.mxu0 0.0
    %359 = vmatpush1.msra.mxu0 0.0
    %360 = vmatprep.subr.mxu0 0.0
    %361 = vmatpush1.msra.mxu0 0.0
    %362 = vmatprep.subr.mxu0 0.0
    %363 = vmatpush1.msra.mxu0 0.0
    %364 = vmatprep.subr.mxu0 0.0
    %365 = vmatpush1.msra.mxu0 0.0
    %366 = vmatprep.subr.mxu0 0.0
    %367 = vmatpush1.msra.mxu0 0.0
    %368 = vmatprep.subr.mxu0 0.0
    %369 = vmatpush1.msra.mxu0 0.0
    %370 = vmatprep.subr.mxu0 0.0
    %371 = vmatpush1.msra.mxu0 0.0
    %372 = vmatprep.subr.mxu0 0.0
    %373 = vmatpush1.msra.mxu0 0.0
    %374 = vmatprep.subr.mxu0 0.0
    %375 = vmatpush1.msra.mxu0 0.0
    %376 = vmatprep.mubr.f32.mxu0 0.0
    %377 = vmatmul.mubr.f32.gmra.mrb[0].mxu0 %v304
    %v378 = vpop.f32.mrb[0].mxu0
    %v379 = vadd.f32 0.0, %v378
    %v380 = vpop.f32.mrb[0].mxu0
    %381 = vmatprep.mubr.f32.mxu0 0.0
    %382 = vmatmul.mubr.f32.gmra.mrb[0].mxu0 %v309
    %v383 = vpop.f32.mrb[0].mxu0
    %v384 = vadd.f32 0.0, %v383
    %v385 = vpop.f32.mrb[0].mxu0
    %386 = vdwg.mxu0
    %v387 = vmul.f32 %v65, %v65
    %v388 = vmul.f32 %v66, %v66
    %v389 = vmul.f32 %v67, %v67
    %v390 = vmul.f32 %v68, %v68
    %v392 = vsel %vm80, %v390, 0
    %394 = vmatprep.subr.mxu0 0.0
    %395 = vmatpush1.msra.mxu0 %v387
    %396 = vmatprep.subr.mxu0 0.0
    %397 = vmatpush1.msra.mxu0 %v388
    %398 = vmatprep.subr.mxu0 0.0
    %399 = vmatpush1.msra.mxu0 %v389
    %400 = vmatprep.subr.mxu0 0.0
    %401 = vmatpush1.msra.mxu0 %v392
    %402 = vmatprep.subr.mxu0 0.0
    %403 = vmatpush1.msra.mxu0 0.0
    %404 = vmatprep.subr.mxu0 0.0
    %405 = vmatpush1.msra.mxu0 0.0
    %406 = vmatprep.subr.mxu0 0.0
    %407 = vmatpush1.msra.mxu0 0.0
    %408 = vmatprep.subr.mxu0 0.0
    %409 = vmatpush1.msra.mxu0 0.0
    %410 = vmatprep.subr.mxu0 0.0
    %411 = vmatpush1.msra.mxu0 0.0
    %412 = vmatprep.subr.mxu0 0.0
    %413 = vmatpush1.msra.mxu0 0.0
    %414 = vmatprep.subr.mxu0 0.0
    %415 = vmatpush1.msra.mxu0 0.0
    %416 = vmatprep.subr.mxu0 0.0
    %417 = vmatpush1.msra.mxu0 0.0
    %418 = vmatprep.subr.mxu0 0.0
    %419 = vmatpush1.msra.mxu0 0.0
    %420 = vmatprep.subr.mxu0 0.0
    %421 = vmatpush1.msra.mxu0 0.0
    %422 = vmatprep.subr.mxu0 0.0
    %423 = vmatpush1.msra.mxu0 0.0
    %424 = vmatprep.subr.mxu0 0.0
    %425 = vmatpush1.msra.mxu0 0.0
    %426 = vmatprep.subr.mxu0 0.0
    %427 = vmatpush1.msra.mxu0 0.0
    %428 = vmatprep.subr.mxu0 0.0
    %429 = vmatpush1.msra.mxu0 0.0
    %430 = vmatprep.subr.mxu0 0.0
    %431 = vmatpush1.msra.mxu0 0.0
    %432 = vmatprep.subr.mxu0 0.0
    %433 = vmatpush1.msra.mxu0 0.0
    %434 = vmatprep.subr.mxu0 0.0
    %435 = vmatpush1.msra.mxu0 0.0
    %436 = vmatprep.subr.mxu0 0.0
    %437 = vmatpush1.msra.mxu0 0.0
    %438 = vmatprep.subr.mxu0 0.0
    %439 = vmatpush1.msra.mxu0 0.0
    %440 = vmatprep.subr.mxu0 0.0
    %441 = vmatpush1.msra.mxu0 0.0
    %442 = vmatprep.subr.mxu0 0.0
    %443 = vmatpush1.msra.mxu0 0.0
    %444 = vmatprep.subr.mxu0 0.0
    %445 = vmatpush1.msra.mxu0 0.0
    %446 = vmatprep.subr.mxu0 0.0
    %447 = vmatpush1.msra.mxu0 0.0
    %448 = vmatprep.subr.mxu0 0.0
    %449 = vmatpush1.msra.mxu0 0.0
    %450 = vmatprep.subr.mxu0 0.0
    %451 = vmatpush1.msra.mxu0 0.0
    %452 = vmatprep.subr.mxu0 0.0
    %453 = vmatpush1.msra.mxu0 0.0
    %454 = vmatprep.subr.mxu0 0.0
    %455 = vmatpush1.msra.mxu0 0.0
    %456 = vmatprep.subr.mxu0 0.0
    %457 = vmatpush1.msra.mxu0 0.0
    %458 = vmatprep.mubr.f32.mxu0 0.0
    %459 = vmatmul.mubr.f32.gmra.mrb[0].mxu0 %v75
    %v460 = vpop.f32.mrb[0].mxu0
    %v461 = vadd.f32 0.0, %v460
    %v462 = vpop.f32.mrb[0].mxu0
    %463 = vmatprep.mubr.f32.mxu0 0.0
    %464 = vmatmul.mubr.f32.gmra.mrb[0].mxu0 %v78
    %v465 = vpop.f32.mrb[0].mxu0
    %v466 = vadd.f32 0.0, %v465
    %v467 = vpop.f32.mrb[0].mxu0
    %468 = vdwg.mxu0
    %469 = vmatprep.subr.mxu0 0.0
    %470 = vmatpush1.msra.mxu0 %v48
    %471 = vmatprep.subr.mxu0 0.0
    %472 = vmatpush1.msra.mxu0 %v49
    %473 = vmatprep.subr.mxu0 0.0
    %474 = vmatpush1.msra.mxu0 %v50
    %475 = vmatprep.subr.mxu0 0.0
    %476 = vmatpush1.msra.mxu0 %v51
    %477 = vmatprep.subr.mxu0 0.0
    %478 = vmatpush1.msra.mxu0 %v52
    %479 = vmatprep.subr.mxu0 0.0
    %480 = vmatpush1.msra.mxu0 %v53
    %481 = vmatprep.subr.mxu0 0.0
    %482 = vmatpush1.msra.mxu0 %v54
    %483 = vmatprep.subr.mxu0 0.0
    %484 = vmatpush1.msra.mxu0 %v55
    %485 = vmatprep.subr.mxu0 0.0
    %486 = vmatpush1.msra.mxu0 %v56
    %487 = vmatprep.subr.mxu0 0.0
    %488 = vmatpush1.msra.mxu0 %v57
    %489 = vmatprep.subr.mxu0 0.0
    %490 = vmatpush1.msra.mxu0 %v58
    %491 = vmatprep.subr.mxu0 0.0
    %492 = vmatpush1.msra.mxu0 %v59
    %493 = vmatprep.subr.mxu0 0.0
    %494 = vmatpush1.msra.mxu0 %v60
    %495 = vmatprep.subr.mxu0 0.0
    %496 = vmatpush1.msra.mxu0 %v61
    %497 = vmatprep.subr.mxu0 0.0
    %498 = vmatpush1.msra.mxu0 %v62
    %499 = vmatprep.subr.mxu0 0.0
    %500 = vmatpush1.msra.mxu0 %v63
    %501 = vmatprep.subr.mxu0 0.0
    %502 = vmatpush1.msra.mxu0 0.0
    %503 = vmatprep.subr.mxu0 0.0
    %504 = vmatpush1.msra.mxu0 0.0
    %505 = vmatprep.subr.mxu0 0.0
    %506 = vmatpush1.msra.mxu0 0.0
    %507 = vmatprep.subr.mxu0 0.0
    %508 = vmatpush1.msra.mxu0 0.0
    %509 = vmatprep.subr.mxu0 0.0
    %510 = vmatpush1.msra.mxu0 0.0
    %511 = vmatprep.subr.mxu0 0.0
    %512 = vmatpush1.msra.mxu0 0.0
    %513 = vmatprep.subr.mxu0 0.0
    %514 = vmatpush1.msra.mxu0 0.0
    %515 = vmatprep.subr.mxu0 0.0
    %516 = vmatpush1.msra.mxu0 0.0
    %517 = vmatprep.subr.mxu0 0.0
    %518 = vmatpush1.msra.mxu0 0.0
    %519 = vmatprep.subr.mxu0 0.0
    %520 = vmatpush1.msra.mxu0 0.0
    %521 = vmatprep.subr.mxu0 0.0
    %522 = vmatpush1.msra.mxu0 0.0
    %523 = vmatprep.subr.mxu0 0.0
    %524 = vmatpush1.msra.mxu0 0.0
    %525 = vmatprep.subr.mxu0 0.0
    %526 = vmatpush1.msra.mxu0 0.0
    %527 = vmatprep.subr.mxu0 0.0
    %528 = vmatpush1.msra.mxu0 0.0
    %529 = vmatprep.subr.mxu0 0.0
    %530 = vmatpush1.msra.mxu0 0.0
    %531 = vmatprep.subr.mxu0 0.0
    %532 = vmatpush1.msra.mxu0 0.0
    %533 = vmatprep.mubr.f32.mxu0 0.0
    %534 = vmatmul.mubr.f32.gmra.mrb[0].mxu0 %v461
    %v535 = vpop.f32.mrb[0].mxu0
    %v536 = vadd.f32 0.0, %v535
    %v537 = vpop.f32.mrb[0].mxu0
    %538 = vmatprep.mubr.f32.mxu0 0.0
    %539 = vmatmul.mubr.f32.gmra.mrb[0].mxu0 %v466
    %v540 = vpop.f32.mrb[0].mxu0
    %v541 = vadd.f32 0.0, %v540
    %v542 = vpop.f32.mrb[0].mxu0
    %543 = vdwg.mxu0
    %v544 = vmul.f32 %v69, %v69
    %v545 = vmul.f32 %v70, %v70
    %v546 = vmul.f32 %v71, %v71
    %v547 = vmul.f32 %v72, %v72
    %v549 = vsel %vm80, %v547, 0
    %551 = vmatprep.subr.mxu0 0.0
    %552 = vmatpush1.msra.mxu0 %v544
    %553 = vmatprep.subr.mxu0 0.0
    %554 = vmatpush1.msra.mxu0 %v545
    %555 = vmatprep.subr.mxu0 0.0
    %556 = vmatpush1.msra.mxu0 %v546
    %557 = vmatprep.subr.mxu0 0.0
    %558 = vmatpush1.msra.mxu0 %v549
    %559 = vmatprep.subr.mxu0 0.0
    %560 = vmatpush1.msra.mxu0 0.0
    %561 = vmatprep.subr.mxu0 0.0
    %562 = vmatpush1.msra.mxu0 0.0
    %563 = vmatprep.subr.mxu0 0.0
    %564 = vmatpush1.msra.mxu0 0.0
    %565 = vmatprep.subr.mxu0 0.0
    %566 = vmatpush1.msra.mxu0 0.0
    %567 = vmatprep.subr.mxu0 0.0
    %568 = vmatpush1.msra.mxu0 0.0
    %569 = vmatprep.subr.mxu0 0.0
    %570 = vmatpush1.msra.mxu0 0.0
    %571 = vmatprep.subr.mxu0 0.0
    %572 = vmatpush1.msra.mxu0 0.0
    %573 = vmatprep.subr.mxu0 0.0
    %574 = vmatpush1.msra.mxu0 0.0
    %575 = vmatprep.subr.mxu0 0.0
    %576 = vmatpush1.msra.mxu0 0.0
    %577 = vmatprep.subr.mxu0 0.0
    %578 = vmatpush1.msra.mxu0 0.0
    %579 = vmatprep.subr.mxu0 0.0
    %580 = vmatpush1.msra.mxu0 0.0
    %581 = vmatprep.subr.mxu0 0.0
    %582 = vmatpush1.msra.mxu0 0.0
    %583 = vmatprep.subr.mxu0 0.0
    %584 = vmatpush1.msra.mxu0 0.0
    %585 = vmatprep.subr.mxu0 0.0
    %586 = vmatpush1.msra.mxu0 0.0
    %587 = vmatprep.subr.mxu0 0.0
    %588 = vmatpush1.msra.mxu0 0.0
    %589 = vmatprep.subr.mxu0 0.0
    %590 = vmatpush1.msra.mxu0 0.0
    %591 = vmatprep.subr.mxu0 0.0
    %592 = vmatpush1.msra.mxu0 0.0
    %593 = vmatprep.subr.mxu0 0.0
    %594 = vmatpush1.msra.mxu0 0.0
    %595 = vmatprep.subr.mxu0 0.0
    %596 = vmatpush1.msra.mxu0 0.0
    %597 = vmatprep.subr.mxu0 0.0
    %598 = vmatpush1.msra.mxu0 0.0
    %599 = vmatprep.subr.mxu0 0.0
    %600 = vmatpush1.msra.mxu0 0.0
    %601 = vmatprep.subr.mxu0 0.0
    %602 = vmatpush1.msra.mxu0 0.0
    %603 = vmatprep.subr.mxu0 0.0
    %604 = vmatpush1.msra.mxu0 0.0
    %605 = vmatprep.subr.mxu0 0.0
    %606 = vmatpush1.msra.mxu0 0.0
    %607 = vmatprep.subr.mxu0 0.0
    %608 = vmatpush1.msra.mxu0 0.0
    %609 = vmatprep.subr.mxu0 0.0
    %610 = vmatpush1.msra.mxu0 0.0
    %611 = vmatprep.subr.mxu0 0.0
    %612 = vmatpush1.msra.mxu0 0.0
    %613 = vmatprep.subr.mxu0 0.0
    %614 = vmatpush1.msra.mxu0 0.0
    %615 = vmatprep.mubr.f32.mxu0 0.0
    %616 = vmatmul.mubr.f32.gmra.mrb[0].mxu0 %v75
    %v617 = vpop.f32.mrb[0].mxu0
    %v618 = vadd.f32 0.0, %v617
    %v619 = vpop.f32.mrb[0].mxu0
    %620 = vmatprep.mubr.f32.mxu0 0.0
    %621 = vmatmul.mubr.f32.gmra.mrb[0].mxu0 %v78
    %v622 = vpop.f32.mrb[0].mxu0
    %v623 = vadd.f32 0.0, %v622
    %v624 = vpop.f32.mrb[0].mxu0
    %625 = vdwg.mxu0
    %626 = vmatprep.subr.mxu0 0.0
    %627 = vmatpush1.msra.mxu0 %v48
    %628 = vmatprep.subr.mxu0 0.0
    %629 = vmatpush1.msra.mxu0 %v49
    %630 = vmatprep.subr.mxu0 0.0
    %631 = vmatpush1.msra.mxu0 %v50
    %632 = vmatprep.subr.mxu0 0.0
    %633 = vmatpush1.msra.mxu0 %v51
    %634 = vmatprep.subr.mxu0 0.0
    %635 = vmatpush1.msra.mxu0 %v52
    %636 = vmatprep.subr.mxu0 0.0
    %637 = vmatpush1.msra.mxu0 %v53
    %638 = vmatprep.subr.mxu0 0.0
    %639 = vmatpush1.msra.mxu0 %v54
    %640 = vmatprep.subr.mxu0 0.0
    %641 = vmatpush1.msra.mxu0 %v55
    %642 = vmatprep.subr.mxu0 0.0
    %643 = vmatpush1.msra.mxu0 %v56
    %644 = vmatprep.subr.mxu0 0.0
    %645 = vmatpush1.msra.mxu0 %v57
    %646 = vmatprep.subr.mxu0 0.0
    %647 = vmatpush1.msra.mxu0 %v58
    %648 = vmatprep.subr.mxu0 0.0
    %649 = vmatpush1.msra.mxu0 %v59
    %650 = vmatprep.subr.mxu0 0.0
    %651 = vmatpush1.msra.mxu0 %v60
    %652 = vmatprep.subr.mxu0 0.0
    %653 = vmatpush1.msra.mxu0 %v61
    %654 = vmatprep.subr.mxu0 0.0
    %655 = vmatpush1.msra.mxu0 %v62
    %656 = vmatprep.subr.mxu0 0.0
    %657 = vmatpush1.msra.mxu0 %v63
    %658 = vmatprep.subr.mxu0 0.0
    %659 = vmatpush1.msra.mxu0 0.0
    %660 = vmatprep.subr.mxu0 0.0
    %661 = vmatpush1.msra.mxu0 0.0
    %662 = vmatprep.subr.mxu0 0.0
    %663 = vmatpush1.msra.mxu0 0.0
    %664 = vmatprep.subr.mxu0 0.0
    %665 = vmatpush1.msra.mxu0 0.0
    %666 = vmatprep.subr.mxu0 0.0
    %667 = vmatpush1.msra.mxu0 0.0
    %668 = vmatprep.subr.mxu0 0.0
    %669 = vmatpush1.msra.mxu0 0.0
    %670 = vmatprep.subr.mxu0 0.0
    %671 = vmatpush1.msra.mxu0 0.0
    %672 = vmatprep.subr.mxu0 0.0
    %673 = vmatpush1.msra.mxu0 0.0
    %674 = vmatprep.subr.mxu0 0.0
    %675 = vmatpush1.msra.mxu0 0.0
    %676 = vmatprep.subr.mxu0 0.0
    %677 = vmatpush1.msra.mxu0 0.0
    %678 = vmatprep.subr.mxu0 0.0
    %679 = vmatpush1.msra.mxu0 0.0
    %680 = vmatprep.subr.mxu0 0.0
    %681 = vmatpush1.msra.mxu0 0.0
    %682 = vmatprep.subr.mxu0 0.0
    %683 = vmatpush1.msra.mxu0 0.0
    %684 = vmatprep.subr.mxu0 0.0
    %685 = vmatpush1.msra.mxu0 0.0
    %686 = vmatprep.subr.mxu0 0.0
    %687 = vmatpush1.msra.mxu0 0.0
    %688 = vmatprep.subr.mxu0 0.0
    %689 = vmatpush1.msra.mxu0 0.0
    %690 = vmatprep.mubr.f32.mxu0 0.0
    %691 = vmatmul.mubr.f32.gmra.mrb[0].mxu0 %v618
    %v692 = vpop.f32.mrb[0].mxu0
    %v693 = vadd.f32 0.0, %v692
    %v694 = vpop.f32.mrb[0].mxu0
    %695 = vmatprep.mubr.f32.mxu0 0.0
    %696 = vmatmul.mubr.f32.gmra.mrb[0].mxu0 %v623
    %v697 = vpop.f32.mrb[0].mxu0
    %v698 = vadd.f32 0.0, %v697
    %v699 = vpop.f32.mrb[0].mxu0
    %700 = vdwg.mxu0
    %v701 = vmul.f32 %v65, %v69
    %v702 = vmul.f32 %v66, %v70
    %v703 = vmul.f32 %v67, %v71
    %v704 = vmul.f32 %v68, %v72
    %v706 = vsel %vm80, %v704, 0
    %708 = vmatprep.subr.mxu0 0.0
    %709 = vmatpush1.msra.mxu0 %v701
    %710 = vmatprep.subr.mxu0 0.0
    %711 = vmatpush1.msra.mxu0 %v702
    %712 = vmatprep.subr.mxu0 0.0
    %713 = vmatpush1.msra.mxu0 %v703
    %714 = vmatprep.subr.mxu0 0.0
    %715 = vmatpush1.msra.mxu0 %v706
    %716 = vmatprep.subr.mxu0 0.0
    %717 = vmatpush1.msra.mxu0 0.0
    %718 = vmatprep.subr.mxu0 0.0
    %719 = vmatpush1.msra.mxu0 0.0
    %720 = vmatprep.subr.mxu0 0.0
    %721 = vmatpush1.msra.mxu0 0.0
    %722 = vmatprep.subr.mxu0 0.0
    %723 = vmatpush1.msra.mxu0 0.0
    %724 = vmatprep.subr.mxu0 0.0
    %725 = vmatpush1.msra.mxu0 0.0
    %726 = vmatprep.subr.mxu0 0.0
    %727 = vmatpush1.msra.mxu0 0.0
    %728 = vmatprep.subr.mxu0 0.0
    %729 = vmatpush1.msra.mxu0 0.0
    %730 = vmatprep.subr.mxu0 0.0
    %731 = vmatpush1.msra.mxu0 0.0
    %732 = vmatprep.subr.mxu0 0.0
    %733 = vmatpush1.msra.mxu0 0.0
    %734 = vmatprep.subr.mxu0 0.0
    %735 = vmatpush1.msra.mxu0 0.0
    %736 = vmatprep.subr.mxu0 0.0
    %737 = vmatpush1.msra.mxu0 0.0
    %738 = vmatprep.subr.mxu0 0.0
    %739 = vmatpush1.msra.mxu0 0.0
    %740 = vmatprep.subr.mxu0 0.0
    %741 = vmatpush1.msra.mxu0 0.0
    %742 = vmatprep.subr.mxu0 0.0
    %743 = vmatpush1.msra.mxu0 0.0
    %744 = vmatprep.subr.mxu0 0.0
    %745 = vmatpush1.msra.mxu0 0.0
    %746 = vmatprep.subr.mxu0 0.0
    %747 = vmatpush1.msra.mxu0 0.0
    %748 = vmatprep.subr.mxu0 0.0
    %749 = vmatpush1.msra.mxu0 0.0
    %750 = vmatprep.subr.mxu0 0.0
    %751 = vmatpush1.msra.mxu0 0.0
    %752 = vmatprep.subr.mxu0 0.0
    %753 = vmatpush1.msra.mxu0 0.0
    %754 = vmatprep.subr.mxu0 0.0
    %755 = vmatpush1.msra.mxu0 0.0
    %756 = vmatprep.subr.mxu0 0.0
    %757 = vmatpush1.msra.mxu0 0.0
    %758 = vmatprep.subr.mxu0 0.0
    %759 = vmatpush1.msra.mxu0 0.0
    %760 = vmatprep.subr.mxu0 0.0
    %761 = vmatpush1.msra.mxu0 0.0
    %762 = vmatprep.subr.mxu0 0.0
    %763 = vmatpush1.msra.mxu0 0.0
    %764 = vmatprep.subr.mxu0 0.0
    %765 = vmatpush1.msra.mxu0 0.0
    %766 = vmatprep.subr.mxu0 0.0
    %767 = vmatpush1.msra.mxu0 0.0
    %768 = vmatprep.subr.mxu0 0.0
    %769 = vmatpush1.msra.mxu0 0.0
    %770 = vmatprep.subr.mxu0 0.0
    %771 = vmatpush1.msra.mxu0 0.0
    %772 = vmatprep.mubr.f32.mxu0 0.0
    %773 = vmatmul.mubr.f32.gmra.mrb[0].mxu0 %v75
    %v774 = vpop.f32.mrb[0].mxu0
    %v775 = vadd.f32 0.0, %v774
    %v776 = vpop.f32.mrb[0].mxu0
    %777 = vmatprep.mubr.f32.mxu0 0.0
    %778 = vmatmul.mubr.f32.gmra.mrb[0].mxu0 %v78
    %v779 = vpop.f32.mrb[0].mxu0
    %v780 = vadd.f32 0.0, %v779
    %v781 = vpop.f32.mrb[0].mxu0
    %782 = vdwg.mxu0
    %783 = vmatprep.subr.mxu0 0.0
    %784 = vmatpush1.msra.mxu0 %v48
    %785 = vmatprep.subr.mxu0 0.0
    %786 = vmatpush1.msra.mxu0 %v49
    %787 = vmatprep.subr.mxu0 0.0
    %788 = vmatpush1.msra.mxu0 %v50
    %789 = vmatprep.subr.mxu0 0.0
    %790 = vmatpush1.msra.mxu0 %v51
    %791 = vmatprep.subr.mxu0 0.0
    %792 = vmatpush1.msra.mxu0 %v52
    %793 = vmatprep.subr.mxu0 0.0
    %794 = vmatpush1.msra.mxu0 %v53
    %795 = vmatprep.subr.mxu0 0.0
    %796 = vmatpush1.msra.mxu0 %v54
    %797 = vmatprep.subr.mxu0 0.0
    %798 = vmatpush1.msra.mxu0 %v55
    %799 = vmatprep.subr.mxu0 0.0
    %800 = vmatpush1.msra.mxu0 %v56
    %801 = vmatprep.subr.mxu0 0.0
    %802 = vmatpush1.msra.mxu0 %v57
    %803 = vmatprep.subr.mxu0 0.0
    %804 = vmatpush1.msra.mxu0 %v58
    %805 = vmatprep.subr.mxu0 0.0
    %806 = vmatpush1.msra.mxu0 %v59
    %807 = vmatprep.subr.mxu0 0.0
    %808 = vmatpush1.msra.mxu0 %v60
    %809 = vmatprep.subr.mxu0 0.0
    %810 = vmatpush1.msra.mxu0 %v61
    %811 = vmatprep.subr.mxu0 0.0
    %812 = vmatpush1.msra.mxu0 %v62
    %813 = vmatprep.subr.mxu0 0.0
    %814 = vmatpush1.msra.mxu0 %v63
    %815 = vmatprep.subr.mxu0 0.0
    %816 = vmatpush1.msra.mxu0 0.0
    %817 = vmatprep.subr.mxu0 0.0
    %818 = vmatpush1.msra.mxu0 0.0
    %819 = vmatprep.subr.mxu0 0.0
    %820 = vmatpush1.msra.mxu0 0.0
    %821 = vmatprep.subr.mxu0 0.0
    %822 = vmatpush1.msra.mxu0 0.0
    %823 = vmatprep.subr.mxu0 0.0
    %824 = vmatpush1.msra.mxu0 0.0
    %825 = vmatprep.subr.mxu0 0.0
    %826 = vmatpush1.msra.mxu0 0.0
    %827 = vmatprep.subr.mxu0 0.0
    %828 = vmatpush1.msra.mxu0 0.0
    %829 = vmatprep.subr.mxu0 0.0
    %830 = vmatpush1.msra.mxu0 0.0
    %831 = vmatprep.subr.mxu0 0.0
    %832 = vmatpush1.msra.mxu0 0.0
    %833 = vmatprep.subr.mxu0 0.0
    %834 = vmatpush1.msra.mxu0 0.0
    %835 = vmatprep.subr.mxu0 0.0
    %836 = vmatpush1.msra.mxu0 0.0
    %837 = vmatprep.subr.mxu0 0.0
    %838 = vmatpush1.msra.mxu0 0.0
    %839 = vmatprep.subr.mxu0 0.0
    %840 = vmatpush1.msra.mxu0 0.0
    %841 = vmatprep.subr.mxu0 0.0
    %842 = vmatpush1.msra.mxu0 0.0
    %843 = vmatprep.subr.mxu0 0.0
    %844 = vmatpush1.msra.mxu0 0.0
    %845 = vmatprep.subr.mxu0 0.0
    %846 = vmatpush1.msra.mxu0 0.0
    %847 = vmatprep.mubr.f32.mxu0 0.0
    %848 = vmatmul.mubr.f32.gmra.mrb[0].mxu0 %v775
    %v849 = vpop.f32.mrb[0].mxu0
    %v850 = vadd.f32 0.0, %v849
    %v851 = vpop.f32.mrb[0].mxu0
    %852 = vmatprep.mubr.f32.mxu0 0.0
    %853 = vmatmul.mubr.f32.gmra.mrb[0].mxu0 %v780
    %v854 = vpop.f32.mrb[0].mxu0
    %v855 = vadd.f32 0.0, %v854
    %v856 = vpop.f32.mrb[0].mxu0
    %857 = vdwg.mxu0
    %v858 = vmul.f32 %v226, %v226
    %v859 = vmul.f32 %v231, %v231
    %v860 = vmul.f32 %v379, %v379
    %v861 = vmul.f32 %v384, %v384
    %v862 = vmul.f32 %v226, %v379
    %v863 = vmul.f32 %v231, %v384
    %v864 = vsub.f32 %v536, %v858
    %v865 = vsub.f32 %v541, %v859
    %v866 = vsub.f32 %v693, %v860
    %v867 = vsub.f32 %v698, %v861
    %v868 = vsub.f32 %v850, %v862
    %v869 = vsub.f32 %v855, %v863
    %v870 = vmul.f32 %v862, 2.0
    %v871 = vmul.f32 %v863, 2.0
    %v872 = vadd.f32 %v870, 6.5025
    %v873 = vadd.f32 %v871, 6.5025
    %v874 = vmul.f32 %v868, 2.0
    %v875 = vmul.f32 %v869, 2.0
    %v876 = vadd.f32 %v874, 58.5225
    %v877 = vadd.f32 %v875, 58.5225
    %v878 = vmul.f32 %v872, %v876
    %v879 = vmul.f32 %v873, %v877
    %v880 = vadd.f32 %v858, %v860
    %v881 = vadd.f32 %v859, %v861
    %v882 = vadd.f32 %v880, 6.5025
    %v883 = vadd.f32 %v881, 6.5025
    %v884 = vadd.f32 %v864, %v866
    %v885 = vadd.f32 %v865, %v867
    %v886 = vadd.f32 %v884, 58.5225
    %v887 = vadd.f32 %v885, 58.5225
    %v888 = vmul.f32 %v882, %v886
    %v889 = vmul.f32 %v883, %v887
    %v890 = vrcp.pop %v888
    %v891 = vrcp.pop %v889
    %v892 = vmul.f32 %v878, %v890
    %v893 = vmul.f32 %v879, %v891
    %vm894 = vcmask 130048
    %v895 = vsel %vm894, %v892, 0.0
    %v896 = vsel %vm894, %v893, 0.0
    %v897 = vadd.f32 %v895, %v896
    %898 = vadd.xlane.f32.xlu0 %v897
    %v899 = vpop.xlane.xlu0 %898
    %v900 = vrot.slane %v899, 4
    %v901 = vadd.f32 %v899, %v900
    %v902 = vrot.slane %v901, 2
    %v903 = vadd.f32 %v901, %v902
    %v904 = vrot.slane %v903, 1
    %v905 = vadd.f32 %v903, %v904
    %s906 = vtos %v905
    %p907 = scmp.lt.s32.totalorder %s64, 6
    %s908 = scalar_select %p907, %s906, 0.0
    %s909 = sadd.f32 %s908, 0.0
    %s910 = scalar_lea.vmem [#allocation2], 32
    %v911 = vld [vmem:[%s910] sm:$0xff]
    %v912 = vld [vmem:[%s910 + $0x8] sm:$0xff]
    %v913 = vld [vmem:[%s910 + $0x10] sm:$0xff]
    %v914 = vld [vmem:[%s910 + $0x18] sm:$0x3]
    %s915 = scalar_lea.vmem [#allocation5], 32
    %v916 = vld [vmem:[%s915] sm:$0xff]
    %v917 = vld [vmem:[%s915 + $0x8] sm:$0xff]
    %v918 = vld [vmem:[%s915 + $0x10] sm:$0xff]
    %v919 = vld [vmem:[%s915 + $0x18] sm:$0x3]
    %v921 = vsel %vm80, %v914, 0
    %923 = vmatprep.subr.mxu0 0.0
    %924 = vmatpush1.msra.mxu0 %v911
    %925 = vmatprep.subr.mxu0 0.0
    %926 = vmatpush1.msra.mxu0 %v912
    %927 = vmatprep.subr.mxu0 0.0
    %928 = vmatpush1.msra.mxu0 %v913
    %929 = vmatprep.subr.mxu0 0.0
    %930 = vmatpush1.msra.mxu0 %v921
    %931 = vmatprep.subr.mxu0 0.0
    %932 = vmatpush1.msra.mxu0 0.0
    %933 = vmatprep.subr.mxu0 0.0
    %934 = vmatpush1.msra.mxu0 0.0
    %935 = vmatprep.subr.mxu0 0.0
    %936 = vmatpush1.msra.mxu0 0.0
    %937 = vmatprep.subr.mxu0 0.0
    %938 = vmatpush1.msra.mxu0 0.0
    %939 = vmatprep.subr.mxu0 0.0
    %940 = vmatpush1.msra.mxu0 0.0
    %941 = vmatprep.subr.mxu0 0.0
    %942 = vmatpush1.msra.mxu0 0.0
    %943 = vmatprep.subr.mxu0 0.0
    %944 = vmatpush1.msra.mxu0 0.0
    %945 = vmatprep.subr.mxu0 0.0
    %946 = vmatpush1.msra.mxu0 0.0
    %947 = vmatprep.subr.mxu0 0.0
    %948 = vmatpush1.msra.mxu0 0.0
    %949 = vmatprep.subr.mxu0 0.0
    %950 = vmatpush1.msra.mxu0 0.0
    %951 = vmatprep.subr.mxu0 0.0
    %952 = vmatpush1.msra.mxu0 0.0
    %953 = vmatprep.subr.mxu0 0.0
    %954 = vmatpush1.msra.mxu0 0.0
    %955 = vmatprep.subr.mxu0 0.0
    %956 = vmatpush1.msra.mxu0 0.0
    %957 = vmatprep.subr.mxu0 0.0
    %958 = vmatpush1.msra.mxu0 0.0
    %959 = vmatprep.subr.mxu0 0.0
    %960 = vmatpush1.msra.mxu0 0.0
    %961 = vmatprep.subr.mxu0 0.0
    %962 = vmatpush1.msra.mxu0 0.0
    %963 = vmatprep.subr.mxu0 0.0
    %964 = vmatpush1.msra.mxu0 0.0
    %965 = vmatprep.subr.mxu0 0.0
    %966 = vmatpush1.msra.mxu0 0.0
    %967 = vmatprep.subr.mxu0 0.0
    %968 = vmatpush1.msra.mxu0 0.0
    %969 = vmatprep.subr.mxu0 0.0
    %970 = vmatpush1.msra.mxu0 0.0
    %971 = vmatprep.subr.mxu0 0.0
    %972 = vmatpush1.msra.mxu0 0.0
    %973 = vmatprep.subr.mxu0 0.0
    %974 = vmatpush1.msra.mxu0 0.0
    %975 = vmatprep.subr.mxu0 0.0
    %976 = vmatpush1.msra.mxu0 0.0
    %977 = vmatprep.subr.mxu0 0.0
    %978 = vmatpush1.msra.mxu0 0.0
    %979 = vmatprep.subr.mxu0 0.0
    %980 = vmatpush1.msra.mxu0 0.0
    %981 = vmatprep.subr.mxu0 0.0
    %982 = vmatpush1.msra.mxu0 0.0
    %983 = vmatprep.subr.mxu0 0.0
    %984 = vmatpush1.msra.mxu0 0.0
    %985 = vmatprep.subr.mxu0 0.0
    %986 = vmatpush1.msra.mxu0 0.0
    %987 = vmatprep.mubr.f32.mxu0 0.0
    %988 = vmatmul.mubr.f32.gmra.mrb[0].mxu0 %v75
    %v989 = vpop.f32.mrb[0].mxu0
    %v990 = vadd.f32 0.0, %v989
    %v991 = vpop.f32.mrb[0].mxu0
    %992 = vmatprep.mubr.f32.mxu0 0.0
    %993 = vmatmul.mubr.f32.gmra.mrb[0].mxu0 %v78
    %v994 = vpop.f32.mrb[0].mxu0
    %v995 = vadd.f32 0.0, %v994
    %v996 = vpop.f32.mrb[0].mxu0
    %997 = vdwg.mxu0
    %998 = vmatprep.subr.mxu0 0.0
    %999 = vmatpush1.msra.mxu0 %v48
    %1000 = vmatprep.subr.mxu0 0.0
    %1001 = vmatpush1.msra.mxu0 %v49
    %1002 = vmatprep.subr.mxu0 0.0
    %1003 = vmatpush1.msra.mxu0 %v50
    %1004 = vmatprep.subr.mxu0 0.0
    %1005 = vmatpush1.msra.mxu0 %v51
    %1006 = vmatprep.subr.mxu0 0.0
    %1007 = vmatpush1.msra.mxu0 %v52
    %1008 = vmatprep.subr.mxu0 0.0
    %1009 = vmatpush1.msra.mxu0 %v53
    %1010 = vmatprep.subr.mxu0 0.0
    %1011 = vmatpush1.msra.mxu0 %v54
    %1012 = vmatprep.subr.mxu0 0.0
    %1013 = vmatpush1.msra.mxu0 %v55
    %1014 = vmatprep.subr.mxu0 0.0
    %1015 = vmatpush1.msra.mxu0 %v56
    %1016 = vmatprep.subr.mxu0 0.0
    %1017 = vmatpush1.msra.mxu0 %v57
    %1018 = vmatprep.subr.mxu0 0.0
    %1019 = vmatpush1.msra.mxu0 %v58
    %1020 = vmatprep.subr.mxu0 0.0
    %1021 = vmatpush1.msra.mxu0 %v59
    %1022 = vmatprep.subr.mxu0 0.0
    %1023 = vmatpush1.msra.mxu0 %v60
    %1024 = vmatprep.subr.mxu0 0.0
    %1025 = vmatpush1.msra.mxu0 %v61
    %1026 = vmatprep.subr.mxu0 0.0
    %1027 = vmatpush1.msra.mxu0 %v62
    %1028 = vmatprep.subr.mxu0 0.0
    %1029 = vmatpush1.msra.mxu0 %v63
    %1030 = vmatprep.subr.mxu0 0.0
    %1031 = vmatpush1.msra.mxu0 0.0
    %1032 = vmatprep.subr.mxu0 0.0
    %1033 = vmatpush1.msra.mxu0 0.0
    %1034 = vmatprep.subr.mxu0 0.0
    %1035 = vmatpush1.msra.mxu0 0.0
    %1036 = vmatprep.subr.mxu0 0.0
    %1037 = vmatpush1.msra.mxu0 0.0
    %1038 = vmatprep.subr.mxu0 0.0
    %1039 = vmatpush1.msra.mxu0 0.0
    %1040 = vmatprep.subr.mxu0 0.0
    %1041 = vmatpush1.msra.mxu0 0.0
    %1042 = vmatprep.subr.mxu0 0.0
    %1043 = vmatpush1.msra.mxu0 0.0
    %1044 = vmatprep.subr.mxu0 0.0
    %1045 = vmatpush1.msra.mxu0 0.0
    %1046 = vmatprep.subr.mxu0 0.0
    %1047 = vmatpush1.msra.mxu0 0.0
    %1048 = vmatprep.subr.mxu0 0.0
    %1049 = vmatpush1.msra.mxu0 0.0
    %1050 = vmatprep.subr.mxu0 0.0
    %1051 = vmatpush1.msra.mxu0 0.0
    %1052 = vmatprep.subr.mxu0 0.0
    %1053 = vmatpush1.msra.mxu0 0.0
    %1054 = vmatprep.subr.mxu0 0.0
    %1055 = vmatpush1.msra.mxu0 0.0
    %1056 = vmatprep.subr.mxu0 0.0
    %1057 = vmatpush1.msra.mxu0 0.0
    %1058 = vmatprep.subr.mxu0 0.0
    %1059 = vmatpush1.msra.mxu0 0.0
    %1060 = vmatprep.subr.mxu0 0.0
    %1061 = vmatpush1.msra.mxu0 0.0
    %1062 = vmatprep.mubr.f32.mxu0 0.0
    %1063 = vmatmul.mubr.f32.gmra.mrb[0].mxu0 %v990
    %v1064 = vpop.f32.mrb[0].mxu0
    %v1065 = vadd.f32 0.0, %v1064
    %v1066 = vpop.f32.mrb[0].mxu0
    %1067 = vmatprep.mubr.f32.mxu0 0.0
    %1068 = vmatmul.mubr.f32.gmra.mrb[0].mxu0 %v995
    %v1069 = vpop.f32.mrb[0].mxu0
    %v1070 = vadd.f32 0.0, %v1069
    %v1071 = vpop.f32.mrb[0].mxu0
    %1072 = vdwg.mxu0
    %v1074 = vsel %vm80, %v919, 0
    %1076 = vmatprep.subr.mxu0 0.0
    %1077 = vmatpush1.msra.mxu0 %v916
    %1078 = vmatprep.subr.mxu0 0.0
    %1079 = vmatpush1.msra.mxu0 %v917
    %1080 = vmatprep.subr.mxu0 0.0
    %1081 = vmatpush1.msra.mxu0 %v918
    %1082 = vmatprep.subr.mxu0 0.0
    %1083 = vmatpush1.msra.mxu0 %v1074
    %1084 = vmatprep.subr.mxu0 0.0
    %1085 = vmatpush1.msra.mxu0 0.0
    %1086 = vmatprep.subr.mxu0 0.0
    %1087 = vmatpush1.msra.mxu0 0.0
    %1088 = vmatprep.subr.mxu0 0.0
    %1089 = vmatpush1.msra.mxu0 0.0
    %1090 = vmatprep.subr.mxu0 0.0
    %1091 = vmatpush1.msra.mxu0 0.0
    %1092 = vmatprep.subr.mxu0 0.0
    %1093 = vmatpush1.msra.mxu0 0.0
    %1094 = vmatprep.subr.mxu0 0.0
    %1095 = vmatpush1.msra.mxu0 0.0
    %1096 = vmatprep.subr.mxu0 0.0
    %1097 = vmatpush1.msra.mxu0 0.0
    %1098 = vmatprep.subr.mxu0 0.0
    %1099 = vmatpush1.msra.mxu0 0.0
    %1100 = vmatprep.subr.mxu0 0.0
    %1101 = vmatpush1.msra.mxu0 0.0
    %1102 = vmatprep.subr.mxu0 0.0
    %1103 = vmatpush1.msra.mxu0 0.0
    %1104 = vmatprep.subr.mxu0 0.0
    %1105 = vmatpush1.msra.mxu0 0.0
    %1106 = vmatprep.subr.mxu0 0.0
    %1107 = vmatpush1.msra.mxu0 0.0
    %1108 = vmatprep.subr.mxu0 0.0
    %1109 = vmatpush1.msra.mxu0 0.0
    %1110 = vmatprep.subr.mxu0 0.0
    %1111 = vmatpush1.msra.mxu0 0.0
    %1112 = vmatprep.subr.mxu0 0.0
    %1113 = vmatpush1.msra.mxu0 0.0
    %1114 = vmatprep.subr.mxu0 0.0
    %1115 = vmatpush1.msra.mxu0 0.0
    %1116 = vmatprep.subr.mxu0 0.0
    %1117 = vmatpush1.msra.mxu0 0.0
    %1118 = vmatprep.subr.mxu0 0.0
    %1119 = vmatpush1.msra.mxu0 0.0
    %1120 = vmatprep.subr.mxu0 0.0
    %1121 = vmatpush1.msra.mxu0 0.0
    %1122 = vmatprep.subr.mxu0 0.0
    %1123 = vmatpush1.msra.mxu0 0.0
    %1124 = vmatprep.subr.mxu0 0.0
    %1125 = vmatpush1.msra.mxu0 0.0
    %1126 = vmatprep.subr.mxu0 0.0
    %1127 = vmatpush1.msra.mxu0 0.0
    %1128 = vmatprep.subr.mxu0 0.0
    %1129 = vmatpush1.msra.mxu0 0.0
    %1130 = vmatprep.subr.mxu0 0.0
    %1131 = vmatpush1.msra.mxu0 0.0
    %1132 = vmatprep.subr.mxu0 0.0
    %1133 = vmatpush1.msra.mxu0 0.0
    %1134 = vmatprep.subr.mxu0 0.0
    %1135 = vmatpush1.msra.mxu0 0.0
    %1136 = vmatprep.subr.mxu0 0.0
    %1137 = vmatpush1.msra.mxu0 0.0
    %1138 = vmatprep.subr.mxu0 0.0
    %1139 = vmatpush1.msra.mxu0 0.0
    %1140 = vmatprep.mubr.f32.mxu0 0.0
    %1141 = vmatmul.mubr.f32.gmra.mrb[0].mxu0 %v75
    %v1142 = vpop.f32.mrb[0].mxu0
    %v1143 = vadd.f32 0.0, %v1142
    %v1144 = vpop.f32.mrb[0].mxu0
    %1145 = vmatprep.mubr.f32.mxu0 0.0
    %1146 = vmatmul.mubr.f32.gmra.mrb[0].mxu0 %v78
    %v1147 = vpop.f32.mrb[0].mxu0
    %v1148 = vadd.f32 0.0, %v1147
    %v1149 = vpop.f32.mrb[0].mxu0
    %1150 = vdwg.mxu0
    %1151 = vmatprep.subr.mxu0 0.0
    %1152 = vmatpush1.msra.mxu0 %v48
    %1153 = vmatprep.subr.mxu0 0.0
    %1154 = vmatpush1.msra.mxu0 %v49
    %1155 = vmatprep.subr.mxu0 0.0
    %1156 = vmatpush1.msra.mxu0 %v50
    %1157 = vmatprep.subr.mxu0 0.0
    %1158 = vmatpush1.msra.mxu0 %v51
    %1159 = vmatprep.subr.mxu0 0.0
    %1160 = vmatpush1.msra.mxu0 %v52
    %1161 = vmatprep.subr.mxu0 0.0
    %1162 = vmatpush1.msra.mxu0 %v53
    %1163 = vmatprep.subr.mxu0 0.0
    %1164 = vmatpush1.msra.mxu0 %v54
    %1165 = vmatprep.subr.mxu0 0.0
    %1166 = vmatpush1.msra.mxu0 %v55
    %1167 = vmatprep.subr.mxu0 0.0
    %1168 = vmatpush1.msra.mxu0 %v56
    %1169 = vmatprep.subr.mxu0 0.0
    %1170 = vmatpush1.msra.mxu0 %v57
    %1171 = vmatprep.subr.mxu0 0.0
    %1172 = vmatpush1.msra.mxu0 %v58
    %1173 = vmatprep.subr.mxu0 0.0
    %1174 = vmatpush1.msra.mxu0 %v59
    %1175 = vmatprep.subr.mxu0 0.0
    %1176 = vmatpush1.msra.mxu0 %v60
    %1177 = vmatprep.subr.mxu0 0.0
    %1178 = vmatpush1.msra.mxu0 %v61
    %1179 = vmatprep.subr.mxu0 0.0
    %1180 = vmatpush1.msra.mxu0 %v62
    %1181 = vmatprep.subr.mxu0 0.0
    %1182 = vmatpush1.msra.mxu0 %v63
    %1183 = vmatprep.subr.mxu0 0.0
    %1184 = vmatpush1.msra.mxu0 0.0
    %1185 = vmatprep.subr.mxu0 0.0
    %1186 = vmatpush1.msra.mxu0 0.0
    %1187 = vmatprep.subr.mxu0 0.0
    %1188 = vmatpush1.msra.mxu0 0.0
    %1189 = vmatprep.subr.mxu0 0.0
    %1190 = vmatpush1.msra.mxu0 0.0
    %1191 = vmatprep.subr.mxu0 0.0
    %1192 = vmatpush1.msra.mxu0 0.0
    %1193 = vmatprep.subr.mxu0 0.0
    %1194 = vmatpush1.msra.mxu0 0.0
    %1195 = vmatprep.subr.mxu0 0.0
    %1196 = vmatpush1.msra.mxu0 0.0
    %1197 = vmatprep.subr.mxu0 0.0
    %1198 = vmatpush1.msra.mxu0 0.0
    %1199 = vmatprep.subr.mxu0 0.0
    %1200 = vmatpush1.msra.mxu0 0.0
    %1201 = vmatprep.subr.mxu0 0.0
    %1202 = vmatpush1.msra.mxu0 0.0
    %1203 = vmatprep.subr.mxu0 0.0
    %1204 = vmatpush1.msra.mxu0 0.0
    %1205 = vmatprep.subr.mxu0 0.0
    %1206 = vmatpush1.msra.mxu0 0.0
    %1207 = vmatprep.subr.mxu0 0.0
    %1208 = vmatpush1.msra.mxu0 0.0
    %1209 = vmatprep.subr.mxu0 0.0
    %1210 = vmatpush1.msra.mxu0 0.0
    %1211 = vmatprep.subr.mxu0 0.0
    %1212 = vmatpush1.msra.mxu0 0.0
    %1213 = vmatprep.subr.mxu0 0.0
    %1214 = vmatpush1.msra.mxu0 0.0
    %1215 = vmatprep.mubr.f32.mxu0 0.0
    %1216 = vmatmul.mubr.f32.gmra.mrb[0].mxu0 %v1143
    %v1217 = vpop.f32.mrb[0].mxu0
    %v1218 = vadd.f32 0.0, %v1217
    %v1219 = vpop.f32.mrb[0].mxu0
    %1220 = vmatprep.mubr.f32.mxu0 0.0
    %1221 = vmatmul.mubr.f32.gmra.mrb[0].mxu0 %v1148
    %v1222 = vpop.f32.mrb[0].mxu0
    %v1223 = vadd.f32 0.0, %v1222
    %v1224 = vpop.f32.mrb[0].mxu0
    %1225 = vdwg.mxu0
    %v1226 = vmul.f32 %v911, %v911
    %v1227 = vmul.f32 %v912, %v912
    %v1228 = vmul.f32 %v913, %v913
    %v1229 = vmul.f32 %v914, %v914
    %v1231 = vsel %vm80, %v1229, 0
    %1233 = vmatprep.subr.mxu0 0.0
    %1234 = vmatpush1.msra.mxu0 %v1226
    %1235 = vmatprep.subr.mxu0 0.0
    %1236 = vmatpush1.msra.mxu0 %v1227
    %1237 = vmatprep.subr.mxu0 0.0
    %1238 = vmatpush1.msra.mxu0 %v1228
    %1239 = vmatprep.subr.mxu0 0.0
    %1240 = vmatpush1.msra.mxu0 %v1231
    %1241 = vmatprep.subr.mxu0 0.0
    %1242 = vmatpush1.msra.mxu0 0.0
    %1243 = vmatprep.subr.mxu0 0.0
    %1244 = vmatpush1.msra.mxu0 0.0
    %1245 = vmatprep.subr.mxu0 0.0
    %1246 = vmatpush1.msra.mxu0 0.0
    %1247 = vmatprep.subr.mxu0 0.0
    %1248 = vmatpush1.msra.mxu0 0.0
    %1249 = vmatprep.subr.mxu0 0.0
    %1250 = vmatpush1.msra.mxu0 0.0
    %1251 = vmatprep.subr.mxu0 0.0
    %1252 = vmatpush1.msra.mxu0 0.0
    %1253 = vmatprep.subr.mxu0 0.0
    %1254 = vmatpush1.msra.mxu0 0.0
    %1255 = vmatprep.subr.mxu0 0.0
    %1256 = vmatpush1.msra.mxu0 0.0
    %1257 = vmatprep.subr.mxu0 0.0
    %1258 = vmatpush1.msra.mxu0 0.0
    %1259 = vmatprep.subr.mxu0 0.0
    %1260 = vmatpush1.msra.mxu0 0.0
    %1261 = vmatprep.subr.mxu0 0.0
    %1262 = vmatpush1.msra.mxu0 0.0
    %1263 = vmatprep.subr.mxu0 0.0
    %1264 = vmatpush1.msra.mxu0 0.0
    %1265 = vmatprep.subr.mxu0 0.0
    %1266 = vmatpush1.msra.mxu0 0.0
    %1267 = vmatprep.subr.mxu0 0.0
    %1268 = vmatpush1.msra.mxu0 0.0
    %1269 = vmatprep.subr.mxu0 0.0
    %1270 = vmatpush1.msra.mxu0 0.0
    %1271 = vmatprep.subr.mxu0 0.0
    %1272 = vmatpush1.msra.mxu0 0.0
    %1273 = vmatprep.subr.mxu0 0.0
    %1274 = vmatpush1.msra.mxu0 0.0
    %1275 = vmatprep.subr.mxu0 0.0
    %1276 = vmatpush1.msra.mxu0 0.0
    %1277 = vmatprep.subr.mxu0 0.0
    %1278 = vmatpush1.msra.mxu0 0.0
    %1279 = vmatprep.subr.mxu0 0.0
    %1280 = vmatpush1.msra.mxu0 0.0
    %1281 = vmatprep.subr.mxu0 0.0
    %1282 = vmatpush1.msra.mxu0 0.0
    %1283 = vmatprep.subr.mxu0 0.0
    %1284 = vmatpush1.msra.mxu0 0.0
    %1285 = vmatprep.subr.mxu0 0.0
    %1286 = vmatpush1.msra.mxu0 0.0
    %1287 = vmatprep.subr.mxu0 0.0
    %1288 = vmatpush1.msra.mxu0 0.0
    %1289 = vmatprep.subr.mxu0 0.0
    %1290 = vmatpush1.msra.mxu0 0.0
    %1291 = vmatprep.subr.mxu0 0.0
    %1292 = vmatpush1.msra.mxu0 0.0
    %1293 = vmatprep.subr.mxu0 0.0
    %1294 = vmatpush1.msra.mxu0 0.0
    %1295 = vmatprep.subr.mxu0 0.0
    %1296 = vmatpush1.msra.mxu0 0.0
    %1297 = vmatprep.mubr.f32.mxu0 0.0
    %1298 = vmatmul.mubr.f32.gmra.mrb[0].mxu0 %v75
    %v1299 = vpop.f32.mrb[0].mxu0
    %v1300 = vadd.f32 0.0, %v1299
    %v1301 = vpop.f32.mrb[0].mxu0
    %1302 = vmatprep.mubr.f32.mxu0 0.0
    %1303 = vmatmul.mubr.f32.gmra.mrb[0].mxu0 %v78
    %v1304 = vpop.f32.mrb[0].mxu0
    %v1305 = vadd.f32 0.0, %v1304
    %v1306 = vpop.f32.mrb[0].mxu0
    %1307 = vdwg.mxu0
    %1308 = vmatprep.subr.mxu0 0.0
    %1309 = vmatpush1.msra.mxu0 %v48
    %1310 = vmatprep.subr.mxu0 0.0
    %1311 = vmatpush1.msra.mxu0 %v49
    %1312 = vmatprep.subr.mxu0 0.0
    %1313 = vmatpush1.msra.mxu0 %v50
    %1314 = vmatprep.subr.mxu0 0.0
    %1315 = vmatpush1.msra.mxu0 %v51
    %1316 = vmatprep.subr.mxu0 0.0
    %1317 = vmatpush1.msra.mxu0 %v52
    %1318 = vmatprep.subr.mxu0 0.0
    %1319 = vmatpush1.msra.mxu0 %v53
    %1320 = vmatprep.subr.mxu0 0.0
    %1321 = vmatpush1.msra.mxu0 %v54
    %1322 = vmatprep.subr.mxu0 0.0
    %1323 = vmatpush1.msra.mxu0 %v55
    %1324 = vmatprep.subr.mxu0 0.0
    %1325 = vmatpush1.msra.mxu0 %v56
    %1326 = vmatprep.subr.mxu0 0.0
    %1327 = vmatpush1.msra.mxu0 %v57
    %1328 = vmatprep.subr.mxu0 0.0
    %1329 = vmatpush1.msra.mxu0 %v58
    %1330 = vmatprep.subr.mxu0 0.0
    %1331 = vmatpush1.msra.mxu0 %v59
    %1332 = vmatprep.subr.mxu0 0.0
    %1333 = vmatpush1.msra.mxu0 %v60
    %1334 = vmatprep.subr.mxu0 0.0
    %1335 = vmatpush1.msra.mxu0 %v61
    %1336 = vmatprep.subr.mxu0 0.0
    %1337 = vmatpush1.msra.mxu0 %v62
    %1338 = vmatprep.subr.mxu0 0.0
    %1339 = vmatpush1.msra.mxu0 %v63
    %1340 = vmatprep.subr.mxu0 0.0
    %1341 = vmatpush1.msra.mxu0 0.0
    %1342 = vmatprep.subr.mxu0 0.0
    %1343 = vmatpush1.msra.mxu0 0.0
    %1344 = vmatprep.subr.mxu0 0.0
    %1345 = vmatpush1.msra.mxu0 0.0
    %1346 = vmatprep.subr.mxu0 0.0
    %1347 = vmatpush1.msra.mxu0 0.0
    %1348 = vmatprep.subr.mxu0 0.0
    %1349 = vmatpush1.msra.mxu0 0.0
    %1350 = vmatprep.subr.mxu0 0.0
    %1351 = vmatpush1.msra.mxu0 0.0
    %1352 = vmatprep.subr.mxu0 0.0
    %1353 = vmatpush1.msra.mxu0 0.0
    %1354 = vmatprep.subr.mxu0 0.0
    %1355 = vmatpush1.msra.mxu0 0.0
    %1356 = vmatprep.subr.mxu0 0.0
    %1357 = vmatpush1.msra.mxu0 0.0
    %1358 = vmatprep.subr.mxu0 0.0
    %1359 = vmatpush1.msra.mxu0 0.0
    %1360 = vmatprep.subr.mxu0 0.0
    %1361 = vmatpush1.msra.mxu0 0.0
    %1362 = vmatprep.subr.mxu0 0.0
    %1363 = vmatpush1.msra.mxu0 0.0
    %1364 = vmatprep.subr.mxu0 0.0
    %1365 = vmatpush1.msra.mxu0 0.0
    %1366 = vmatprep.subr.mxu0 0.0
    %1367 = vmatpush1.msra.mxu0 0.0
    %1368 = vmatprep.subr.mxu0 0.0
    %1369 = vmatpush1.msra.mxu0 0.0
    %1370 = vmatprep.subr.mxu0 0.0
    %1371 = vmatpush1.msra.mxu0 0.0
    %1372 = vmatprep.mubr.f32.mxu0 0.0
    %1373 = vmatmul.mubr.f32.gmra.mrb[0].mxu0 %v1300
    %v1374 = vpop.f32.mrb[0].mxu0
    %v1375 = vadd.f32 0.0, %v1374
    %v1376 = vpop.f32.mrb[0].mxu0
    %1377 = vmatprep.mubr.f32.mxu0 0.0
    %1378 = vmatmul.mubr.f32.gmra.mrb[0].mxu0 %v1305
    %v1379 = vpop.f32.mrb[0].mxu0
    %v1380 = vadd.f32 0.0, %v1379
    %v1381 = vpop.f32.mrb[0].mxu0
    %1382 = vdwg.mxu0
    %v1383 = vmul.f32 %v916, %v916
    %v1384 = vmul.f32 %v917, %v917
    %v1385 = vmul.f32 %v918, %v918
    %v1386 = vmul.f32 %v919, %v919
    %v1388 = vsel %vm80, %v1386, 0
    %1390 = vmatprep.subr.mxu0 0.0
    %1391 = vmatpush1.msra.mxu0 %v1383
    %1392 = vmatprep.subr.mxu0 0.0
    %1393 = vmatpush1.msra.mxu0 %v1384
    %1394 = vmatprep.subr.mxu0 0.0
    %1395 = vmatpush1.msra.mxu0 %v1385
    %1396 = vmatprep.subr.mxu0 0.0
    %1397 = vmatpush1.msra.mxu0 %v1388
    %1398 = vmatprep.subr.mxu0 0.0
    %1399 = vmatpush1.msra.mxu0 0.0
    %1400 = vmatprep.subr.mxu0 0.0
    %1401 = vmatpush1.msra.mxu0 0.0
    %1402 = vmatprep.subr.mxu0 0.0
    %1403 = vmatpush1.msra.mxu0 0.0
    %1404 = vmatprep.subr.mxu0 0.0
    %1405 = vmatpush1.msra.mxu0 0.0
    %1406 = vmatprep.subr.mxu0 0.0
    %1407 = vmatpush1.msra.mxu0 0.0
    %1408 = vmatprep.subr.mxu0 0.0
    %1409 = vmatpush1.msra.mxu0 0.0
    %1410 = vmatprep.subr.mxu0 0.0
    %1411 = vmatpush1.msra.mxu0 0.0
    %1412 = vmatprep.subr.mxu0 0.0
    %1413 = vmatpush1.msra.mxu0 0.0
    %1414 = vmatprep.subr.mxu0 0.0
    %1415 = vmatpush1.msra.mxu0 0.0
    %1416 = vmatprep.subr.mxu0 0.0
    %1417 = vmatpush1.msra.mxu0 0.0
    %1418 = vmatprep.subr.mxu0 0.0
    %1419 = vmatpush1.msra.mxu0 0.0
    %1420 = vmatprep.subr.mxu0 0.0
    %1421 = vmatpush1.msra.mxu0 0.0
    %1422 = vmatprep.subr.mxu0 0.0
    %1423 = vmatpush1.msra.mxu0 0.0
    %1424 = vmatprep.subr.mxu0 0.0
    %1425 = vmatpush1.msra.mxu0 0.0
    %1426 = vmatprep.subr.mxu0 0.0
    %1427 = vmatpush1.msra.mxu0 0.0
    %1428 = vmatprep.subr.mxu0 0.0
    %1429 = vmatpush1.msra.mxu0 0.0
    %1430 = vmatprep.subr.mxu0 0.0
    %1431 = vmatpush1.msra.mxu0 0.0
    %1432 = vmatprep.subr.mxu0 0.0
    %1433 = vmatpush1.msra.mxu0 0.0
    %1434 = vmatprep.subr.mxu0 0.0
    %1435 = vmatpush1.msra.mxu0 0.0
    %1436 = vmatprep.subr.mxu0 0.0
    %1437 = vmatpush1.msra.mxu0 0.0
    %1438 = vmatprep.subr.mxu0 0.0
    %1439 = vmatpush1.msra.mxu0 0.0
    %1440 = vmatprep.subr.mxu0 0.0
    %1441 = vmatpush1.msra.mxu0 0.0
    %1442 = vmatprep.subr.mxu0 0.0
    %1443 = vmatpush1.msra.mxu0 0.0
    %1444 = vmatprep.subr.mxu0 0.0
    %1445 = vmatpush1.msra.mxu0 0.0
    %1446 = vmatprep.subr.mxu0 0.0
    %1447 = vmatpush1.msra.mxu0 0.0
    %1448 = vmatprep.subr.mxu0 0.0
    %1449 = vmatpush1.msra.mxu0 0.0
    %1450 = vmatprep.subr.mxu0 0.0
    %1451 = vmatpush1.msra.mxu0 0.0
    %1452 = vmatprep.subr.mxu0 0.0
    %1453 = vmatpush1.msra.mxu0 0.0
    %1454 = vmatprep.mubr.f32.mxu0 0.0
    %1455 = vmatmul.mubr.f32.gmra.mrb[0].mxu0 %v75
    %v1456 = vpop.f32.mrb[0].mxu0
    %v1457 = vadd.f32 0.0, %v1456
    %v1458 = vpop.f32.mrb[0].mxu0
    %1459 = vmatprep.mubr.f32.mxu0 0.0
    %1460 = vmatmul.mubr.f32.gmra.mrb[0].mxu0 %v78
    %v1461 = vpop.f32.mrb[0].mxu0
    %v1462 = vadd.f32 0.0, %v1461
    %v1463 = vpop.f32.mrb[0].mxu0
    %1464 = vdwg.mxu0
    %1465 = vmatprep.subr.mxu0 0.0
    %1466 = vmatpush1.msra.mxu0 %v48
    %1467 = vmatprep.subr.mxu0 0.0
    %1468 = vmatpush1.msra.mxu0 %v49
    %1469 = vmatprep.subr.mxu0 0.0
    %1470 = vmatpush1.msra.mxu0 %v50
    %1471 = vmatprep.subr.mxu0 0.0
    %1472 = vmatpush1.msra.mxu0 %v51
    %1473 = vmatprep.subr.mxu0 0.0
    %1474 = vmatpush1.msra.mxu0 %v52
    %1475 = vmatprep.subr.mxu0 0.0
    %1476 = vmatpush1.msra.mxu0 %v53
    %1477 = vmatprep.subr.mxu0 0.0
    %1478 = vmatpush1.msra.mxu0 %v54
    %1479 = vmatprep.subr.mxu0 0.0
    %1480 = vmatpush1.msra.mxu0 %v55
    %1481 = vmatprep.subr.mxu0 0.0
    %1482 = vmatpush1.msra.mxu0 %v56
    %1483 = vmatprep.subr.mxu0 0.0
    %1484 = vmatpush1.msra.mxu0 %v57
    %1485 = vmatprep.subr.mxu0 0.0
    %1486 = vmatpush1.msra.mxu0 %v58
    %1487 = vmatprep.subr.mxu0 0.0
    %1488 = vmatpush1.msra.mxu0 %v59
    %1489 = vmatprep.subr.mxu0 0.0
    %1490 = vmatpush1.msra.mxu0 %v60
    %1491 = vmatprep.subr.mxu0 0.0
    %1492 = vmatpush1.msra.mxu0 %v61
    %1493 = vmatprep.subr.mxu0 0.0
    %1494 = vmatpush1.msra.mxu0 %v62
    %1495 = vmatprep.subr.mxu0 0.0
    %1496 = vmatpush1.msra.mxu0 %v63
    %1497 = vmatprep.subr.mxu0 0.0
    %1498 = vmatpush1.msra.mxu0 0.0
    %1499 = vmatprep.subr.mxu0 0.0
    %1500 = vmatpush1.msra.mxu0 0.0
    %1501 = vmatprep.subr.mxu0 0.0
    %1502 = vmatpush1.msra.mxu0 0.0
    %1503 = vmatprep.subr.mxu0 0.0
    %1504 = vmatpush1.msra.mxu0 0.0
    %1505 = vmatprep.subr.mxu0 0.0
    %1506 = vmatpush1.msra.mxu0 0.0
    %1507 = vmatprep.subr.mxu0 0.0
    %1508 = vmatpush1.msra.mxu0 0.0
    %1509 = vmatprep.subr.mxu0 0.0
    %1510 = vmatpush1.msra.mxu0 0.0
    %1511 = vmatprep.subr.mxu0 0.0
    %1512 = vmatpush1.msra.mxu0 0.0
    %1513 = vmatprep.subr.mxu0 0.0
    %1514 = vmatpush1.msra.mxu0 0.0
    %1515 = vmatprep.subr.mxu0 0.0
    %1516 = vmatpush1.msra.mxu0 0.0
    %1517 = vmatprep.subr.mxu0 0.0
    %1518 = vmatpush1.msra.mxu0 0.0
    %1519 = vmatprep.subr.mxu0 0.0
    %1520 = vmatpush1.msra.mxu0 0.0
    %1521 = vmatprep.subr.mxu0 0.0
    %1522 = vmatpush1.msra.mxu0 0.0
    %1523 = vmatprep.subr.mxu0 0.0
    %1524 = vmatpush1.msra.mxu0 0.0
    %1525 = vmatprep.subr.mxu0 0.0
    %1526 = vmatpush1.msra.mxu0 0.0
    %1527 = vmatprep.subr.mxu0 0.0
    %1528 = vmatpush1.msra.mxu0 0.0
    %1529 = vmatprep.mubr.f32.mxu0 0.0
    %1530 = vmatmul.mubr.f32.gmra.mrb[0].mxu0 %v1457
    %v1531 = vpop.f32.mrb[0].mxu0
    %v1532 = vadd.f32 0.0, %v1531
    %v1533 = vpop.f32.mrb[0].mxu0
    %1534 = vmatprep.mubr.f32.mxu0 0.0
    %1535 = vmatmul.mubr.f32.gmra.mrb[0].mxu0 %v1462
    %v1536 = vpop.f32.mrb[0].mxu0
    %v1537 = vadd.f32 0.0, %v1536
    %v1538 = vpop.f32.mrb[0].mxu0
    %1539 = vdwg.mxu0
    %v1540 = vmul.f32 %v911, %v916
    %v1541 = vmul.f32 %v912, %v917
    %v1542 = vmul.f32 %v913, %v918
    %v1543 = vmul.f32 %v914, %v919
    %v1545 = vsel %vm80, %v1543, 0
    %1547 = vmatprep.subr.mxu0 0.0
    %1548 = vmatpush1.msra.mxu0 %v1540
    %1549 = vmatprep.subr.mxu0 0.0
    %1550 = vmatpush1.msra.mxu0 %v1541
    %1551 = vmatprep.subr.mxu0 0.0
    %1552 = vmatpush1.msra.mxu0 %v1542
    %1553 = vmatprep.subr.mxu0 0.0
    %1554 = vmatpush1.msra.mxu0 %v1545
    %1555 = vmatprep.subr.mxu0 0.0
    %1556 = vmatpush1.msra.mxu0 0.0
    %1557 = vmatprep.subr.mxu0 0.0
    %1558 = vmatpush1.msra.mxu0 0.0
    %1559 = vmatprep.subr.mxu0 0.0
    %1560 = vmatpush1.msra.mxu0 0.0
    %1561 = vmatprep.subr.mxu0 0.0
    %1562 = vmatpush1.msra.mxu0 0.0
    %1563 = vmatprep.subr.mxu0 0.0
    %1564 = vmatpush1.msra.mxu0 0.0
    %1565 = vmatprep.subr.mxu0 0.0
    %1566 = vmatpush1.msra.mxu0 0.0
    %1567 = vmatprep.subr.mxu0 0.0
    %1568 = vmatpush1.msra.mxu0 0.0
    %1569 = vmatprep.subr.mxu0 0.0
    %1570 = vmatpush1.msra.mxu0 0.0
    %1571 = vmatprep.subr.mxu0 0.0
    %1572 = vmatpush1.msra.mxu0 0.0
    %1573 = vmatprep.subr.mxu0 0.0
    %1574 = vmatpush1.msra.mxu0 0.0
    %1575 = vmatprep.subr.mxu0 0.0
    %1576 = vmatpush1.msra.mxu0 0.0
    %1577 = vmatprep.subr.mxu0 0.0
    %1578 = vmatpush1.msra.mxu0 0.0
    %1579 = vmatprep.subr.mxu0 0.0
    %1580 = vmatpush1.msra.mxu0 0.0
    %1581 = vmatprep.subr.mxu0 0.0
    %1582 = vmatpush1.msra.mxu0 0.0
    %1583 = vmatprep.subr.mxu0 0.0
    %1584 = vmatpush1.msra.mxu0 0.0
    %1585 = vmatprep.subr.mxu0 0.0
    %1586 = vmatpush1.msra.mxu0 0.0
    %1587 = vmatprep.subr.mxu0 0.0
    %1588 = vmatpush1.msra.mxu0 0.0
    %1589 = vmatprep.subr.mxu0 0.0
    %1590 = vmatpush1.msra.mxu0 0.0
    %1591 = vmatprep.subr.mxu0 0.0
    %1592 = vmatpush1.msra.mxu0 0.0
    %1593 = vmatprep.subr.mxu0 0.0
    %1594 = vmatpush1.msra.mxu0 0.0
    %1595 = vmatprep.subr.mxu0 0.0
    %1596 = vmatpush1.msra.mxu0 0.0
    %1597 = vmatprep.subr.mxu0 0.0
    %1598 = vmatpush1.msra.mxu0 0.0
    %1599 = vmatprep.subr.mxu0 0.0
    %1600 = vmatpush1.msra.mxu0 0.0
    %1601 = vmatprep.subr.mxu0 0.0
    %1602 = vmatpush1.msra.mxu0 0.0
    %1603 = vmatprep.subr.mxu0 0.0
    %1604 = vmatpush1.msra.mxu0 0.0
    %1605 = vmatprep.subr.mxu0 0.0
    %1606 = vmatpush1.msra.mxu0 0.0
    %1607 = vmatprep.subr.mxu0 0.0
    %1608 = vmatpush1.msra.mxu0 0.0
    %1609 = vmatprep.subr.mxu0 0.0
    %1610 = vmatpush1.msra.mxu0 0.0
    %1611 = vmatprep.mubr.f32.mxu0 0.0
    %1612 = vmatmul.mubr.f32.gmra.mrb[0].mxu0 %v75
    %v1613 = vpop.f32.mrb[0].mxu0
    %v1614 = vadd.f32 0.0, %v1613
    %v1615 = vpop.f32.mrb[0].mxu0
    %1616 = vmatprep.mubr.f32.mxu0 0.0
    %1617 = vmatmul.mubr.f32.gmra.mrb[0].mxu0 %v78
    %v1618 = vpop.f32.mrb[0].mxu0
    %v1619 = vadd.f32 0.0, %v1618
    %v1620 = vpop.f32.mrb[0].mxu0
    %1621 = vdwg.mxu0
    %1622 = vmatprep.subr.mxu0 0.0
    %1623 = vmatpush1.msra.mxu0 %v48
    %1624 = vmatprep.subr.mxu0 0.0
    %1625 = vmatpush1.msra.mxu0 %v49
    %1626 = vmatprep.subr.mxu0 0.0
    %1627 = vmatpush1.msra.mxu0 %v50
    %1628 = vmatprep.subr.mxu0 0.0
    %1629 = vmatpush1.msra.mxu0 %v51
    %1630 = vmatprep.subr.mxu0 0.0
    %1631 = vmatpush1.msra.mxu0 %v52
    %1632 = vmatprep.subr.mxu0 0.0
    %1633 = vmatpush1.msra.mxu0 %v53
    %1634 = vmatprep.subr.mxu0 0.0
    %1635 = vmatpush1.msra.mxu0 %v54
    %1636 = vmatprep.subr.mxu0 0.0
    %1637 = vmatpush1.msra.mxu0 %v55
    %1638 = vmatprep.subr.mxu0 0.0
    %1639 = vmatpush1.msra.mxu0 %v56
    %1640 = vmatprep.subr.mxu0 0.0
    %1641 = vmatpush1.msra.mxu0 %v57
    %1642 = vmatprep.subr.mxu0 0.0
    %1643 = vmatpush1.msra.mxu0 %v58
    %1644 = vmatprep.subr.mxu0 0.0
    %1645 = vmatpush1.msra.mxu0 %v59
    %1646 = vmatprep.subr.mxu0 0.0
    %1647 = vmatpush1.msra.mxu0 %v60
    %1648 = vmatprep.subr.mxu0 0.0
    %1649 = vmatpush1.msra.mxu0 %v61
    %1650 = vmatprep.subr.mxu0 0.0
    %1651 = vmatpush1.msra.mxu0 %v62
    %1652 = vmatprep.subr.mxu0 0.0
    %1653 = vmatpush1.msra.mxu0 %v63
    %1654 = vmatprep.subr.mxu0 0.0
    %1655 = vmatpush1.msra.mxu0 0.0
    %1656 = vmatprep.subr.mxu0 0.0
    %1657 = vmatpush1.msra.mxu0 0.0
    %1658 = vmatprep.subr.mxu0 0.0
    %1659 = vmatpush1.msra.mxu0 0.0
    %1660 = vmatprep.subr.mxu0 0.0
    %1661 = vmatpush1.msra.mxu0 0.0
    %1662 = vmatprep.subr.mxu0 0.0
    %1663 = vmatpush1.msra.mxu0 0.0
    %1664 = vmatprep.subr.mxu0 0.0
    %1665 = vmatpush1.msra.mxu0 0.0
    %1666 = vmatprep.subr.mxu0 0.0
    %1667 = vmatpush1.msra.mxu0 0.0
    %1668 = vmatprep.subr.mxu0 0.0
    %1669 = vmatpush1.msra.mxu0 0.0
    %1670 = vmatprep.subr.mxu0 0.0
    %1671 = vmatpush1.msra.mxu0 0.0
    %1672 = vmatprep.subr.mxu0 0.0
    %1673 = vmatpush1.msra.mxu0 0.0
    %1674 = vmatprep.subr.mxu0 0.0
    %1675 = vmatpush1.msra.mxu0 0.0
    %1676 = vmatprep.subr.mxu0 0.0
    %1677 = vmatpush1.msra.mxu0 0.0
    %1678 = vmatprep.subr.mxu0 0.0
    %1679 = vmatpush1.msra.mxu0 0.0
    %1680 = vmatprep.subr.mxu0 0.0
    %1681 = vmatpush1.msra.mxu0 0.0
    %1682 = vmatprep.subr.mxu0 0.0
    %1683 = vmatpush1.msra.mxu0 0.0
    %1684 = vmatprep.subr.mxu0 0.0
    %1685 = vmatpush1.msra.mxu0 0.0
    %1686 = vmatprep.mubr.f32.mxu0 0.0
    %1687 = vmatmul.mubr.f32.gmra.mrb[0].mxu0 %v1614
    %v1688 = vpop.f32.mrb[0].mxu0
    %v1689 = vadd.f32 0.0, %v1688
    %v1690 = vpop.f32.mrb[0].mxu0
    %1691 = vmatprep.mubr.f32.mxu0 0.0
    %1692 = vmatmul.mubr.f32.gmra.mrb[0].mxu0 %v1619
    %v1693 = vpop.f32.mrb[0].mxu0
    %v1694 = vadd.f32 0.0, %v1693
    %v1695 = vpop.f32.mrb[0].mxu0
    %1696 = vdwg.mxu0
    %v1697 = vmul.f32 %v1065, %v1065
    %v1698 = vmul.f32 %v1070, %v1070
    %v1699 = vmul.f32 %v1218, %v1218
    %v1700 = vmul.f32 %v1223, %v1223
    %v1701 = vmul.f32 %v1065, %v1218
    %v1702 = vmul.f32 %v1070, %v1223
    %v1703 = vsub.f32 %v1375, %v1697
    %v1704 = vsub.f32 %v1380, %v1698
    %v1705 = vsub.f32 %v1532, %v1699
    %v1706 = vsub.f32 %v1537, %v1700
    %v1707 = vsub.f32 %v1689, %v1701
    %v1708 = vsub.f32 %v1694, %v1702
    %v1709 = vmul.f32 %v1701, 2.0
    %v1710 = vmul.f32 %v1702, 2.0
    %v1711 = vadd.f32 %v1709, 6.5025
    %v1712 = vadd.f32 %v1710, 6.5025
    %v1713 = vmul.f32 %v1707, 2.0
    %v1714 = vmul.f32 %v1708, 2.0
    %v1715 = vadd.f32 %v1713, 58.5225
    %v1716 = vadd.f32 %v1714, 58.5225
    %v1717 = vmul.f32 %v1711, %v1715
    %v1718 = vmul.f32 %v1712, %v1716
    %v1719 = vadd.f32 %v1697, %v1699
    %v1720 = vadd.f32 %v1698, %v1700
    %v1721 = vadd.f32 %v1719, 6.5025
    %v1722 = vadd.f32 %v1720, 6.5025
    %v1723 = vadd.f32 %v1703, %v1705
    %v1724 = vadd.f32 %v1704, %v1706
    %v1725 = vadd.f32 %v1723, 58.5225
    %v1726 = vadd.f32 %v1724, 58.5225
    %v1727 = vmul.f32 %v1721, %v1725
    %v1728 = vmul.f32 %v1722, %v1726
    %v1729 = vrcp.pop %v1727
    %v1730 = vrcp.pop %v1728
    %v1731 = vmul.f32 %v1717, %v1729
    %v1732 = vmul.f32 %v1718, %v1730
    %v1733 = vsel %vm894, %v1731, 0.0
    %v1734 = vsel %vm894, %v1732, 0.0
    %v1735 = vadd.f32 %v1733, %v1734
    %1736 = vadd.xlane.f32.xlu0 %v1735
    %v1737 = vpop.xlane.xlu0 %1736
    %v1738 = vrot.slane %v1737, 4
    %v1739 = vadd.f32 %v1737, %v1738
    %v1740 = vrot.slane %v1739, 2
    %v1741 = vadd.f32 %v1739, %v1740
    %v1742 = vrot.slane %v1741, 1
    %v1743 = vadd.f32 %v1741, %v1742
    %s1744 = vtos %v1743
    %s1745 = sadd.s32 %s64, 1
    %p1746 = scmp.lt.s32.totalorder %s1745, 6
    %s1747 = scalar_select %p1746, %s1744, 0.0
    %s1748 = sadd.f32 %s909, %s1747
    %s1749 = scalar_lea.vmem [#allocation2], 64
    %v1750 = vld [vmem:[%s1749] sm:$0xff]
    %v1751 = vld [vmem:[%s1749 + $0x8] sm:$0xff]
    %v1752 = vld [vmem:[%s1749 + $0x10] sm:$0xff]
    %v1753 = vld [vmem:[%s1749 + $0x18] sm:$0x3]
    %s1754 = scalar_lea.vmem [#allocation5], 64
    %v1755 = vld [vmem:[%s1754] sm:$0xff]
    %v1756 = vld [vmem:[%s1754 + $0x8] sm:$0xff]
    %v1757 = vld [vmem:[%s1754 + $0x10] sm:$0xff]
    %v1758 = vld [vmem:[%s1754 + $0x18] sm:$0x3]
    %v1760 = vsel %vm80, %v1753, 0
    %1762 = vmatprep.subr.mxu0 0.0
    %1763 = vmatpush1.msra.mxu0 %v1750
    %1764 = vmatprep.subr.mxu0 0.0
    %1765 = vmatpush1.msra.mxu0 %v1751
    %1766 = vmatprep.subr.mxu0 0.0
    %1767 = vmatpush1.msra.mxu0 %v1752
    %1768 = vmatprep.subr.mxu0 0.0
    %1769 = vmatpush1.msra.mxu0 %v1760
    %1770 = vmatprep.subr.mxu0 0.0
    %1771 = vmatpush1.msra.mxu0 0.0
    %1772 = vmatprep.subr.mxu0 0.0
    %1773 = vmatpush1.msra.mxu0 0.0
    %1774 = vmatprep.subr.mxu0 0.0
    %1775 = vmatpush1.msra.mxu0 0.0
    %1776 = vmatprep.subr.mxu0 0.0
    %1777 = vmatpush1.msra.mxu0 0.0
    %1778 = vmatprep.subr.mxu0 0.0
    %1779 = vmatpush1.msra.mxu0 0.0
    %1780 = vmatprep.subr.mxu0 0.0
    %1781 = vmatpush1.msra.mxu0 0.0
    %1782 = vmatprep.subr.mxu0 0.0
    %1783 = vmatpush1.msra.mxu0 0.0
    %1784 = vmatprep.subr.mxu0 0.0
    %1785 = vmatpush1.msra.mxu0 0.0
    %1786 = vmatprep.subr.mxu0 0.0
    %1787 = vmatpush1.msra.mxu0 0.0
    %1788 = vmatprep.subr.mxu0 0.0
    %1789 = vmatpush1.msra.mxu0 0.0
    %1790 = vmatprep.subr.mxu0 0.0
    %1791 = vmatpush1.msra.mxu0 0.0
    %1792 = vmatprep.subr.mxu0 0.0
    %1793 = vmatpush1.msra.mxu0 0.0
    %1794 = vmatprep.subr.mxu0 0.0
    %1795 = vmatpush1.msra.mxu0 0.0
    %1796 = vmatprep.subr.mxu0 0.0
    %1797 = vmatpush1.msra.mxu0 0.0
    %1798 = vmatprep.subr.mxu0 0.0
    %1799 = vmatpush1.msra.mxu0 0.0
    %1800 = vmatprep.subr.mxu0 0.0
    %1801 = vmatpush1.msra.mxu0 0.0
    %1802 = vmatprep.subr.mxu0 0.0
    %1803 = vmatpush1.msra.mxu0 0.0
    %1804 = vmatprep.subr.mxu0 0.0
    %1805 = vmatpush1.msra.mxu0 0.0
    %1806 = vmatprep.subr.mxu0 0.0
    %1807 = vmatpush1.msra.mxu0 0.0
    %1808 = vmatprep.subr.mxu0 0.0
    %1809 = vmatpush1.msra.mxu0 0.0
    %1810 = vmatprep.subr.mxu0 0.0
    %1811 = vmatpush1.msra.mxu0 0.0
    %1812 = vmatprep.subr.mxu0 0.0
    %1813 = vmatpush1.msra.mxu0 0.0
    %1814 = vmatprep.subr.mxu0 0.0
    %1815 = vmatpush1.msra.mxu0 0.0
    %1816 = vmatprep.subr.mxu0 0.0
    %1817 = vmatpush1.msra.mxu0 0.0
    %1818 = vmatprep.subr.mxu0 0.0
    %1819 = vmatpush1.msra.mxu0 0.0
    %1820 = vmatprep.subr.mxu0 0.0
    %1821 = vmatpush1.msra.mxu0 0.0
    %1822 = vmatprep.subr.mxu0 0.0
    %1823 = vmatpush1.msra.mxu0 0.0
    %1824 = vmatprep.subr.mxu0 0.0
    %1825 = vmatpush1.msra.mxu0 0.0
    %1826 = vmatprep.mubr.f32.mxu0 0.0
    %1827 = vmatmul.mubr.f32.gmra.mrb[0].mxu0 %v75
    %v1828 = vpop.f32.mrb[0].mxu0
    %v1829 = vadd.f32 0.0, %v1828
    %v1830 = vpop.f32.mrb[0].mxu0
    %1831 = vmatprep.mubr.f32.mxu0 0.0
    %1832 = vmatmul.mubr.f32.gmra.mrb[0].mxu0 %v78
    %v1833 = vpop.f32.mrb[0].mxu0
    %v1834 = vadd.f32 0.0, %v1833
    %v1835 = vpop.f32.mrb[0].mxu0
    %1836 = vdwg.mxu0
    %1837 = vmatprep.subr.mxu0 0.0
    %1838 = vmatpush1.msra.mxu0 %v48
    %1839 = vmatprep.subr.mxu0 0.0
    %1840 = vmatpush1.msra.mxu0 %v49
    %1841 = vmatprep.subr.mxu0 0.0
    %1842 = vmatpush1.msra.mxu0 %v50
    %1843 = vmatprep.subr.mxu0 0.0
    %1844 = vmatpush1.msra.mxu0 %v51
    %1845 = vmatprep.subr.mxu0 0.0
    %1846 = vmatpush1.msra.mxu0 %v52
    %1847 = vmatprep.subr.mxu0 0.0
    %1848 = vmatpush1.msra.mxu0 %v53
    %1849 = vmatprep.subr.mxu0 0.0
    %1850 = vmatpush1.msra.mxu0 %v54
    %1851 = vmatprep.subr.mxu0 0.0
    %1852 = vmatpush1.msra.mxu0 %v55
    %1853 = vmatprep.subr.mxu0 0.0
    %1854 = vmatpush1.msra.mxu0 %v56
    %1855 = vmatprep.subr.mxu0 0.0
    %1856 = vmatpush1.msra.mxu0 %v57
    %1857 = vmatprep.subr.mxu0 0.0
    %1858 = vmatpush1.msra.mxu0 %v58
    %1859 = vmatprep.subr.mxu0 0.0
    %1860 = vmatpush1.msra.mxu0 %v59
    %1861 = vmatprep.subr.mxu0 0.0
    %1862 = vmatpush1.msra.mxu0 %v60
    %1863 = vmatprep.subr.mxu0 0.0
    %1864 = vmatpush1.msra.mxu0 %v61
    %1865 = vmatprep.subr.mxu0 0.0
    %1866 = vmatpush1.msra.mxu0 %v62
    %1867 = vmatprep.subr.mxu0 0.0
    %1868 = vmatpush1.msra.mxu0 %v63
    %1869 = vmatprep.subr.mxu0 0.0
    %1870 = vmatpush1.msra.mxu0 0.0
    %1871 = vmatprep.subr.mxu0 0.0
    %1872 = vmatpush1.msra.mxu0 0.0
    %1873 = vmatprep.subr.mxu0 0.0
    %1874 = vmatpush1.msra.mxu0 0.0
    %1875 = vmatprep.subr.mxu0 0.0
    %1876 = vmatpush1.msra.mxu0 0.0
    %1877 = vmatprep.subr.mxu0 0.0
    %1878 = vmatpush1.msra.mxu0 0.0
    %1879 = vmatprep.subr.mxu0 0.0
    %1880 = vmatpush1.msra.mxu0 0.0
    %1881 = vmatprep.subr.mxu0 0.0
    %1882 = vmatpush1.msra.mxu0 0.0
    %1883 = vmatprep.subr.mxu0 0.0
    %1884 = vmatpush1.msra.mxu0 0.0
    %1885 = vmatprep.subr.mxu0 0.0
    %1886 = vmatpush1.msra.mxu0 0.0
    %1887 = vmatprep.subr.mxu0 0.0
    %1888 = vmatpush1.msra.mxu0 0.0
    %1889 = vmatprep.subr.mxu0 0.0
    %1890 = vmatpush1.msra.mxu0 0.0
    %1891 = vmatprep.subr.mxu0 0.0
    %1892 = vmatpush1.msra.mxu0 0.0
    %1893 = vmatprep.subr.mxu0 0.0
    %1894 = vmatpush1.msra.mxu0 0.0
    %1895 = vmatprep.subr.mxu0 0.0
    %1896 = vmatpush1.msra.mxu0 0.0
    %1897 = vmatprep.subr.mxu0 0.0
    %1898 = vmatpush1.msra.mxu0 0.0
    %1899 = vmatprep.subr.mxu0 0.0
    %1900 = vmatpush1.msra.mxu0 0.0
    %1901 = vmatprep.mubr.f32.mxu0 0.0
    %1902 = vmatmul.mubr.f32.gmra.mrb[0].mxu0 %v1829
    %v1903 = vpop.f32.mrb[0].mxu0
    %v1904 = vadd.f32 0.0, %v1903
    %v1905 = vpop.f32.mrb[0].mxu0
    %1906 = vmatprep.mubr.f32.mxu0 0.0
    %1907 = vmatmul.mubr.f32.gmra.mrb[0].mxu0 %v1834
    %v1908 = vpop.f32.mrb[0].mxu0
    %v1909 = vadd.f32 0.0, %v1908
    %v1910 = vpop.f32.mrb[0].mxu0
    %1911 = vdwg.mxu0
    %v1913 = vsel %vm80, %v1758, 0
    %1915 = vmatprep.subr.mxu0 0.0
    %1916 = vmatpush1.msra.mxu0 %v1755
    %1917 = vmatprep.subr.mxu0 0.0
    %1918 = vmatpush1.msra.mxu0 %v1756
    %1919 = vmatprep.subr.mxu0 0.0
    %1920 = vmatpush1.msra.mxu0 %v1757
    %1921 = vmatprep.subr.mxu0 0.0
    %1922 = vmatpush1.msra.mxu0 %v1913
    %1923 = vmatprep.subr.mxu0 0.0
    %1924 = vmatpush1.msra.mxu0 0.0
    %1925 = vmatprep.subr.mxu0 0.0
    %1926 = vmatpush1.msra.mxu0 0.0
    %1927 = vmatprep.subr.mxu0 0.0
    %1928 = vmatpush1.msra.mxu0 0.0
    %1929 = vmatprep.subr.mxu0 0.0
    %1930 = vmatpush1.msra.mxu0 0.0
    %1931 = vmatprep.subr.mxu0 0.0
    %1932 = vmatpush1.msra.mxu0 0.0
    %1933 = vmatprep.subr.mxu0 0.0
    %1934 = vmatpush1.msra.mxu0 0.0
    %1935 = vmatprep.subr.mxu0 0.0
    %1936 = vmatpush1.msra.mxu0 0.0
    %1937 = vmatprep.subr.mxu0 0.0
    %1938 = vmatpush1.msra.mxu0 0.0
    %1939 = vmatprep.subr.mxu0 0.0
    %1940 = vmatpush1.msra.mxu0 0.0
    %1941 = vmatprep.subr.mxu0 0.0
    %1942 = vmatpush1.msra.mxu0 0.0
    %1943 = vmatprep.subr.mxu0 0.0
    %1944 = vmatpush1.msra.mxu0 0.0
    %1945 = vmatprep.subr.mxu0 0.0
    %1946 = vmatpush1.msra.mxu0 0.0
    %1947 = vmatprep.subr.mxu0 0.0
    %1948 = vmatpush1.msra.mxu0 0.0
    %1949 = vmatprep.subr.mxu0 0.0
    %1950 = vmatpush1.msra.mxu0 0.0
    %1951 = vmatprep.subr.mxu0 0.0
    %1952 = vmatpush1.msra.mxu0 0.0
    %1953 = vmatprep.subr.mxu0 0.0
    %1954 = vmatpush1.msra.mxu0 0.0
    %1955 = vmatprep.subr.mxu0 0.0
    %1956 = vmatpush1.msra.mxu0 0.0
    %1957 = vmatprep.subr.mxu0 0.0
    %1958 = vmatpush1.msra.mxu0 0.0
    %1959 = vmatprep.subr.mxu0 0.0
    %1960 = vmatpush1.msra.mxu0 0.0
    %1961 = vmatprep.subr.mxu0 0.0
    %1962 = vmatpush1.msra.mxu0 0.0
    %1963 = vmatprep.subr.mxu0 0.0
    %1964 = vmatpush1.msra.mxu0 0.0
    %1965 = vmatprep.subr.mxu0 0.0
    %1966 = vmatpush1.msra.mxu0 0.0
    %1967 = vmatprep.subr.mxu0 0.0
    %1968 = vmatpush1.msra.mxu0 0.0
    %1969 = vmatprep.subr.mxu0 0.0
    %1970 = vmatpush1.msra.mxu0 0.0
    %1971 = vmatprep.subr.mxu0 0.0
    %1972 = vmatpush1.msra.mxu0 0.0
    %1973 = vmatprep.subr.mxu0 0.0
    %1974 = vmatpush1.msra.mxu0 0.0
    %1975 = vmatprep.subr.mxu0 0.0
    %1976 = vmatpush1.msra.mxu0 0.0
    %1977 = vmatprep.subr.mxu0 0.0
    %1978 = vmatpush1.msra.mxu0 0.0
    %1979 = vmatprep.mubr.f32.mxu0 0.0
    %1980 = vmatmul.mubr.f32.gmra.mrb[0].mxu0 %v75
    %v1981 = vpop.f32.mrb[0].mxu0
    %v1982 = vadd.f32 0.0, %v1981
    %v1983 = vpop.f32.mrb[0].mxu0
    %1984 = vmatprep.mubr.f32.mxu0 0.0
    %1985 = vmatmul.mubr.f32.gmra.mrb[0].mxu0 %v78
    %v1986 = vpop.f32.mrb[0].mxu0
    %v1987 = vadd.f32 0.0, %v1986
    %v1988 = vpop.f32.mrb[0].mxu0
    %1989 = vdwg.mxu0
    %1990 = vmatprep.subr.mxu0 0.0
    %1991 = vmatpush1.msra.mxu0 %v48
    %1992 = vmatprep.subr.mxu0 0.0
    %1993 = vmatpush1.msra.mxu0 %v49
    %1994 = vmatprep.subr.mxu0 0.0
    %1995 = vmatpush1.msra.mxu0 %v50
    %1996 = vmatprep.subr.mxu0 0.0
    %1997 = vmatpush1.msra.mxu0 %v51
    %1998 = vmatprep.subr.mxu0 0.0
    %1999 = vmatpush1.msra.mxu0 %v52
    %2000 = vmatprep.subr.mxu0 0.0
    %2001 = vmatpush1.msra.mxu0 %v53
    %2002 = vmatprep.subr.mxu0 0.0
    %2003 = vmatpush1.msra.mxu0 %v54
    %2004 = vmatprep.subr.mxu0 0.0
    %2005 = vmatpush1.msra.mxu0 %v55
    %2006 = vmatprep.subr.mxu0 0.0
    %2007 = vmatpush1.msra.mxu0 %v56
    %2008 = vmatprep.subr.mxu0 0.0
    %2009 = vmatpush1.msra.mxu0 %v57
    %2010 = vmatprep.subr.mxu0 0.0
    %2011 = vmatpush1.msra.mxu0 %v58
    %2012 = vmatprep.subr.mxu0 0.0
    %2013 = vmatpush1.msra.mxu0 %v59
    %2014 = vmatprep.subr.mxu0 0.0
    %2015 = vmatpush1.msra.mxu0 %v60
    %2016 = vmatprep.subr.mxu0 0.0
    %2017 = vmatpush1.msra.mxu0 %v61
    %2018 = vmatprep.subr.mxu0 0.0
    %2019 = vmatpush1.msra.mxu0 %v62
    %2020 = vmatprep.subr.mxu0 0.0
    %2021 = vmatpush1.msra.mxu0 %v63
    %2022 = vmatprep.subr.mxu0 0.0
    %2023 = vmatpush1.msra.mxu0 0.0
    %2024 = vmatprep.subr.mxu0 0.0
    %2025 = vmatpush1.msra.mxu0 0.0
    %2026 = vmatprep.subr.mxu0 0.0
    %2027 = vmatpush1.msra.mxu0 0.0
    %2028 = vmatprep.subr.mxu0 0.0
    %2029 = vmatpush1.msra.mxu0 0.0
    %2030 = vmatprep.subr.mxu0 0.0
    %2031 = vmatpush1.msra.mxu0 0.0
    %2032 = vmatprep.subr.mxu0 0.0
    %2033 = vmatpush1.msra.mxu0 0.0
    %2034 = vmatprep.subr.mxu0 0.0
    %2035 = vmatpush1.msra.mxu0 0.0
    %2036 = vmatprep.subr.mxu0 0.0
    %2037 = vmatpush1.msra.mxu0 0.0
    %2038 = vmatprep.subr.mxu0 0.0
    %2039 = vmatpush1.msra.mxu0 0.0
    %2040 = vmatprep.subr.mxu0 0.0
    %2041 = vmatpush1.msra.mxu0 0.0
    %2042 = vmatprep.subr.mxu0 0.0
    %2043 = vmatpush1.msra.mxu0 0.0
    %2044 = vmatprep.subr.mxu0 0.0
    %2045 = vmatpush1.msra.mxu0 0.0
    %2046 = vmatprep.subr.mxu0 0.0
    %2047 = vmatpush1.msra.mxu0 0.0
    %2048 = vmatprep.subr.mxu0 0.0
    %2049 = vmatpush1.msra.mxu0 0.0
    %2050 = vmatprep.subr.mxu0 0.0
    %2051 = vmatpush1.msra.mxu0 0.0
    %2052 = vmatprep.subr.mxu0 0.0
    %2053 = vmatpush1.msra.mxu0 0.0
    %2054 = vmatprep.mubr.f32.mxu0 0.0
    %2055 = vmatmul.mubr.f32.gmra.mrb[0].mxu0 %v1982
    %v2056 = vpop.f32.mrb[0].mxu0
    %v2057 = vadd.f32 0.0, %v2056
    %v2058 = vpop.f32.mrb[0].mxu0
    %2059 = vmatprep.mubr.f32.mxu0 0.0
    %2060 = vmatmul.mubr.f32.gmra.mrb[0].mxu0 %v1987
    %v2061 = vpop.f32.mrb[0].mxu0
    %v2062 = vadd.f32 0.0, %v2061
    %v2063 = vpop.f32.mrb[0].mxu0
    %2064 = vdwg.mxu0
    %v2065 = vmul.f32 %v1750, %v1750
    %v2066 = vmul.f32 %v1751, %v1751
    %v2067 = vmul.f32 %v1752, %v1752
    %v2068 = vmul.f32 %v1753, %v1753
    %v2070 = vsel %vm80, %v2068, 0
    %2072 = vmatprep.subr.mxu0 0.0
    %2073 = vmatpush1.msra.mxu0 %v2065
    %2074 = vmatprep.subr.mxu0 0.0
    %2075 = vmatpush1.msra.mxu0 %v2066
    %2076 = vmatprep.subr.mxu0 0.0
    %2077 = vmatpush1.msra.mxu0 %v2067
    %2078 = vmatprep.subr.mxu0 0.0
    %2079 = vmatpush1.msra.mxu0 %v2070
    %2080 = vmatprep.subr.mxu0 0.0
    %2081 = vmatpush1.msra.mxu0 0.0
    %2082 = vmatprep.subr.mxu0 0.0
    %2083 = vmatpush1.msra.mxu0 0.0
    %2084 = vmatprep.subr.mxu0 0.0
    %2085 = vmatpush1.msra.mxu0 0.0
    %2086 = vmatprep.subr.mxu0 0.0
    %2087 = vmatpush1.msra.mxu0 0.0
    %2088 = vmatprep.subr.mxu0 0.0
    %2089 = vmatpush1.msra.mxu0 0.0
    %2090 = vmatprep.subr.mxu0 0.0
    %2091 = vmatpush1.msra.mxu0 0.0
    %2092 = vmatprep.subr.mxu0 0.0
    %2093 = vmatpush1.msra.mxu0 0.0
    %2094 = vmatprep.subr.mxu0 0.0
    %2095 = vmatpush1.msra.mxu0 0.0
    %2096 = vmatprep.subr.mxu0 0.0
    %2097 = vmatpush1.msra.mxu0 0.0
    %2098 = vmatprep.subr.mxu0 0.0
    %2099 = vmatpush1.msra.mxu0 0.0
    %2100 = vmatprep.subr.mxu0 0.0
    %2101 = vmatpush1.msra.mxu0 0.0
    %2102 = vmatprep.subr.mxu0 0.0
    %2103 = vmatpush1.msra.mxu0 0.0
    %2104 = vmatprep.subr.mxu0 0.0
    %2105 = vmatpush1.msra.mxu0 0.0
    %2106 = vmatprep.subr.mxu0 0.0
    %2107 = vmatpush1.msra.mxu0 0.0
    %2108 = vmatprep.subr.mxu0 0.0
    %2109 = vmatpush1.msra.mxu0 0.0
    %2110 = vmatprep.subr.mxu0 0.0
    %2111 = vmatpush1.msra.mxu0 0.0
    %2112 = vmatprep.subr.mxu0 0.0
    %2113 = vmatpush1.msra.mxu0 0.0
    %2114 = vmatprep.subr.mxu0 0.0
    %2115 = vmatpush1.msra.mxu0 0.0
    %2116 = vmatprep.subr.mxu0 0.0
    %2117 = vmatpush1.msra.mxu0 0.0
    %2118 = vmatprep.subr.mxu0 0.0
    %2119 = vmatpush1.msra.mxu0 0.0
    %2120 = vmatprep.subr.mxu0 0.0
    %2121 = vmatpush1.msra.mxu0 0.0
    %2122 = vmatprep.subr.mxu0 0.0
    %2123 = vmatpush1.msra.mxu0 0.0
    %2124 = vmatprep.subr.mxu0 0.0
    %2125 = vmatpush1.msra.mxu0 0.0
    %2126 = vmatprep.subr.mxu0 0.0
    %2127 = vmatpush1.msra.mxu0 0.0
    %2128 = vmatprep.subr.mxu0 0.0
    %2129 = vmatpush1.msra.mxu0 0.0
    %2130 = vmatprep.subr.mxu0 0.0
    %2131 = vmatpush1.msra.mxu0 0.0
    %2132 = vmatprep.subr.mxu0 0.0
    %2133 = vmatpush1.msra.mxu0 0.0
    %2134 = vmatprep.subr.mxu0 0.0
    %2135 = vmatpush1.msra.mxu0 0.0
    %2136 = vmatprep.mubr.f32.mxu0 0.0
    %2137 = vmatmul.mubr.f32.gmra.mrb[0].mxu0 %v75
    %v2138 = vpop.f32.mrb[0].mxu0
    %v2139 = vadd.f32 0.0, %v2138
    %v2140 = vpop.f32.mrb[0].mxu0
    %2141 = vmatprep.mubr.f32.mxu0 0.0
    %2142 = vmatmul.mubr.f32.gmra.mrb[0].mxu0 %v78
    %v2143 = vpop.f32.mrb[0].mxu0
    %v2144 = vadd.f32 0.0, %v2143
    %v2145 = vpop.f32.mrb[0].mxu0
    %2146 = vdwg.mxu0
    %2147 = vmatprep.subr.mxu0 0.0
    %2148 = vmatpush1.msra.mxu0 %v48
    %2149 = vmatprep.subr.mxu0 0.0
    %2150 = vmatpush1.msra.mxu0 %v49
    %2151 = vmatprep.subr.mxu0 0.0
    %2152 = vmatpush1.msra.mxu0 %v50
    %2153 = vmatprep.subr.mxu0 0.0
    %2154 = vmatpush1.msra.mxu0 %v51
    %2155 = vmatprep.subr.mxu0 0.0
    %2156 = vmatpush1.msra.mxu0 %v52
    %2157 = vmatprep.subr.mxu0 0.0
    %2158 = vmatpush1.msra.mxu0 %v53
    %2159 = vmatprep.subr.mxu0 0.0
    %2160 = vmatpush1.msra.mxu0 %v54
    %2161 = vmatprep.subr.mxu0 0.0
    %2162 = vmatpush1.msra.mxu0 %v55
    %2163 = vmatprep.subr.mxu0 0.0
    %2164 = vmatpush1.msra.mxu0 %v56
    %2165 = vmatprep.subr.mxu0 0.0
    %2166 = vmatpush1.msra.mxu0 %v57
    %2167 = vmatprep.subr.mxu0 0.0
    %2168 = vmatpush1.msra.mxu0 %v58
    %2169 = vmatprep.subr.mxu0 0.0
    %2170 = vmatpush1.msra.mxu0 %v59
    %2171 = vmatprep.subr.mxu0 0.0
    %2172 = vmatpush1.msra.mxu0 %v60
    %2173 = vmatprep.subr.mxu0 0.0
    %2174 = vmatpush1.msra.mxu0 %v61
    %2175 = vmatprep.subr.mxu0 0.0
    %2176 = vmatpush1.msra.mxu0 %v62
    %2177 = vmatprep.subr.mxu0 0.0
    %2178 = vmatpush1.msra.mxu0 %v63
    %2179 = vmatprep.subr.mxu0 0.0
    %2180 = vmatpush1.msra.mxu0 0.0
    %2181 = vmatprep.subr.mxu0 0.0
    %2182 = vmatpush1.msra.mxu0 0.0
    %2183 = vmatprep.subr.mxu0 0.0
    %2184 = vmatpush1.msra.mxu0 0.0
    %2185 = vmatprep.subr.mxu0 0.0
    %2186 = vmatpush1.msra.mxu0 0.0
    %2187 = vmatprep.subr.mxu0 0.0
    %2188 = vmatpush1.msra.mxu0 0.0
    %2189 = vmatprep.subr.mxu0 0.0
    %2190 = vmatpush1.msra.mxu0 0.0
    %2191 = vmatprep.subr.mxu0 0.0
    %2192 = vmatpush1.msra.mxu0 0.0
    %2193 = vmatprep.subr.mxu0 0.0
    %2194 = vmatpush1.msra.mxu0 0.0
    %2195 = vmatprep.subr.mxu0 0.0
    %2196 = vmatpush1.msra.mxu0 0.0
    %2197 = vmatprep.subr.mxu0 0.0
    %2198 = vmatpush1.msra.mxu0 0.0
    %2199 = vmatprep.subr.mxu0 0.0
    %2200 = vmatpush1.msra.mxu0 0.0
    %2201 = vmatprep.subr.mxu0 0.0
    %2202 = vmatpush1.msra.mxu0 0.0
    %2203 = vmatprep.subr.mxu0 0.0
    %2204 = vmatpush1.msra.mxu0 0.0
    %2205 = vmatprep.subr.mxu0 0.0
    %2206 = vmatpush1.msra.mxu0 0.0
    %2207 = vmatprep.subr.mxu0 0.0
    %2208 = vmatpush1.msra.mxu0 0.0
    %2209 = vmatprep.subr.mxu0 0.0
    %2210 = vmatpush1.msra.mxu0 0.0
    %2211 = vmatprep.mubr.f32.mxu0 0.0
    %2212 = vmatmul.mubr.f32.gmra.mrb[0].mxu0 %v2139
    %v2213 = vpop.f32.mrb[0].mxu0
    %v2214 = vadd.f32 0.0, %v2213
    %v2215 = vpop.f32.mrb[0].mxu0
    %2216 = vmatprep.mubr.f32.mxu0 0.0
    %2217 = vmatmul.mubr.f32.gmra.mrb[0].mxu0 %v2144
    %v2218 = vpop.f32.mrb[0].mxu0
    %v2219 = vadd.f32 0.0, %v2218
    %v2220 = vpop.f32.mrb[0].mxu0
    %2221 = vdwg.mxu0
    %v2222 = vmul.f32 %v1755, %v1755
    %v2223 = vmul.f32 %v1756, %v1756
    %v2224 = vmul.f32 %v1757, %v1757
    %v2225 = vmul.f32 %v1758, %v1758
    %v2227 = vsel %vm80, %v2225, 0
    %2229 = vmatprep.subr.mxu0 0.0
    %2230 = vmatpush1.msra.mxu0 %v2222
    %2231 = vmatprep.subr.mxu0 0.0
    %2232 = vmatpush1.msra.mxu0 %v2223
    %2233 = vmatprep.subr.mxu0 0.0
    %2234 = vmatpush1.msra.mxu0 %v2224
    %2235 = vmatprep.subr.mxu0 0.0
    %2236 = vmatpush1.msra.mxu0 %v2227
    %2237 = vmatprep.subr.mxu0 0.0
    %2238 = vmatpush1.msra.mxu0 0.0
    %2239 = vmatprep.subr.mxu0 0.0
    %2240 = vmatpush1.msra.mxu0 0.0
    %2241 = vmatprep.subr.mxu0 0.0
    %2242 = vmatpush1.msra.mxu0 0.0
    %2243 = vmatprep.subr.mxu0 0.0
    %2244 = vmatpush1.msra.mxu0 0.0
    %2245 = vmatprep.subr.mxu0 0.0
    %2246 = vmatpush1.msra.mxu0 0.0
    %2247 = vmatprep.subr.mxu0 0.0
    %2248 = vmatpush1.msra.mxu0 0.0
    %2249 = vmatprep.subr.mxu0 0.0
    %2250 = vmatpush1.msra.mxu0 0.0
    %2251 = vmatprep.subr.mxu0 0.0
    %2252 = vmatpush1.msra.mxu0 0.0
    %2253 = vmatprep.subr.mxu0 0.0
    %2254 = vmatpush1.msra.mxu0 0.0
    %2255 = vmatprep.subr.mxu0 0.0
    %2256 = vmatpush1.msra.mxu0 0.0
    %2257 = vmatprep.subr.mxu0 0.0
    %2258 = vmatpush1.msra.mxu0 0.0
    %2259 = vmatprep.subr.mxu0 0.0
    %2260 = vmatpush1.msra.mxu0 0.0
    %2261 = vmatprep.subr.mxu0 0.0
    %2262 = vmatpush1.msra.mxu0 0.0
    %2263 = vmatprep.subr.mxu0 0.0
    %2264 = vmatpush1.msra.mxu0 0.0
    %2265 = vmatprep.subr.mxu0 0.0
    %2266 = vmatpush1.msra.mxu0 0.0
    %2267 = vmatprep.subr.mxu0 0.0
    %2268 = vmatpush1.msra.mxu0 0.0
    %2269 = vmatprep.subr.mxu0 0.0
    %2270 = vmatpush1.msra.mxu0 0.0
    %2271 = vmatprep.subr.mxu0 0.0
    %2272 = vmatpush1.msra.mxu0 0.0
    %2273 = vmatprep.subr.mxu0 0.0
    %2274 = vmatpush1.msra.mxu0 0.0
    %2275 = vmatprep.subr.mxu0 0.0
    %2276 = vmatpush1.msra.mxu0 0.0
    %2277 = vmatprep.subr.mxu0 0.0
    %2278 = vmatpush1.msra.mxu0 0.0
    %2279 = vmatprep.subr.mxu0 0.0
    %2280 = vmatpush1.msra.mxu0 0.0
    %2281 = vmatprep.subr.mxu0 0.0
    %2282 = vmatpush1.msra.mxu0 0.0
    %2283 = vmatprep.subr.mxu0 0.0
    %2284 = vmatpush1.msra.mxu0 0.0
    %2285 = vmatprep.subr.mxu0 0.0
    %2286 = vmatpush1.msra.mxu0 0.0
    %2287 = vmatprep.subr.mxu0 0.0
    %2288 = vmatpush1.msra.mxu0 0.0
    %2289 = vmatprep.subr.mxu0 0.0
    %2290 = vmatpush1.msra.mxu0 0.0
    %2291 = vmatprep.subr.mxu0 0.0
    %2292 = vmatpush1.msra.mxu0 0.0
    %2293 = vmatprep.mubr.f32.mxu0 0.0
    %2294 = vmatmul.mubr.f32.gmra.mrb[0].mxu0 %v75
    %v2295 = vpop.f32.mrb[0].mxu0
    %v2296 = vadd.f32 0.0, %v2295
    %v2297 = vpop.f32.mrb[0].mxu0
    %2298 = vmatprep.mubr.f32.mxu0 0.0
    %2299 = vmatmul.mubr.f32.gmra.mrb[0].mxu0 %v78
    %v2300 = vpop.f32.mrb[0].mxu0
    %v2301 = vadd.f32 0.0, %v2300
    %v2302 = vpop.f32.mrb[0].mxu0
    %2303 = vdwg.mxu0
    %2304 = vmatprep.subr.mxu0 0.0
    %2305 = vmatpush1.msra.mxu0 %v48
    %2306 = vmatprep.subr.mxu0 0.0
    %2307 = vmatpush1.msra.mxu0 %v49
    %2308 = vmatprep.subr.mxu0 0.0
    %2309 = vmatpush1.msra.mxu0 %v50
    %2310 = vmatprep.subr.mxu0 0.0
    %2311 = vmatpush1.msra.mxu0 %v51
    %2312 = vmatprep.subr.mxu0 0.0
    %2313 = vmatpush1.msra.mxu0 %v52
    %2314 = vmatprep.subr.mxu0 0.0
    %2315 = vmatpush1.msra.mxu0 %v53
    %2316 = vmatprep.subr.mxu0 0.0
    %2317 = vmatpush1.msra.mxu0 %v54
    %2318 = vmatprep.subr.mxu0 0.0
    %2319 = vmatpush1.msra.mxu0 %v55
    %2320 = vmatprep.subr.mxu0 0.0
    %2321 = vmatpush1.msra.mxu0 %v56
    %2322 = vmatprep.subr.mxu0 0.0
    %2323 = vmatpush1.msra.mxu0 %v57
    %2324 = vmatprep.subr.mxu0 0.0
    %2325 = vmatpush1.msra.mxu0 %v58
    %2326 = vmatprep.subr.mxu0 0.0
    %2327 = vmatpush1.msra.mxu0 %v59
    %2328 = vmatprep.subr.mxu0 0.0
    %2329 = vmatpush1.msra.mxu0 %v60
    %2330 = vmatprep.subr.mxu0 0.0
    %2331 = vmatpush1.msra.mxu0 %v61
    %2332 = vmatprep.subr.mxu0 0.0
    %2333 = vmatpush1.msra.mxu0 %v62
    %2334 = vmatprep.subr.mxu0 0.0
    %2335 = vmatpush1.msra.mxu0 %v63
    %2336 = vmatprep.subr.mxu0 0.0
    %2337 = vmatpush1.msra.mxu0 0.0
    %2338 = vmatprep.subr.mxu0 0.0
    %2339 = vmatpush1.msra.mxu0 0.0
    %2340 = vmatprep.subr.mxu0 0.0
    %2341 = vmatpush1.msra.mxu0 0.0
    %2342 = vmatprep.subr.mxu0 0.0
    %2343 = vmatpush1.msra.mxu0 0.0
    %2344 = vmatprep.subr.mxu0 0.0
    %2345 = vmatpush1.msra.mxu0 0.0
    %2346 = vmatprep.subr.mxu0 0.0
    %2347 = vmatpush1.msra.mxu0 0.0
    %2348 = vmatprep.subr.mxu0 0.0
    %2349 = vmatpush1.msra.mxu0 0.0
    %2350 = vmatprep.subr.mxu0 0.0
    %2351 = vmatpush1.msra.mxu0 0.0
    %2352 = vmatprep.subr.mxu0 0.0
    %2353 = vmatpush1.msra.mxu0 0.0
    %2354 = vmatprep.subr.mxu0 0.0
    %2355 = vmatpush1.msra.mxu0 0.0
    %2356 = vmatprep.subr.mxu0 0.0
    %2357 = vmatpush1.msra.mxu0 0.0
    %2358 = vmatprep.subr.mxu0 0.0
    %2359 = vmatpush1.msra.mxu0 0.0
    %2360 = vmatprep.subr.mxu0 0.0
    %2361 = vmatpush1.msra.mxu0 0.0
    %2362 = vmatprep.subr.mxu0 0.0
    %2363 = vmatpush1.msra.mxu0 0.0
    %2364 = vmatprep.subr.mxu0 0.0
    %2365 = vmatpush1.msra.mxu0 0.0
    %2366 = vmatprep.subr.mxu0 0.0
    %2367 = vmatpush1.msra.mxu0 0.0
    %2368 = vmatprep.mubr.f32.mxu0 0.0
    %2369 = vmatmul.mubr.f32.gmra.mrb[0].mxu0 %v2296
    %v2370 = vpop.f32.mrb[0].mxu0
    %v2371 = vadd.f32 0.0, %v2370
    %v2372 = vpop.f32.mrb[0].mxu0
    %2373 = vmatprep.mubr.f32.mxu0 0.0
    %2374 = vmatmul.mubr.f32.gmra.mrb[0].mxu0 %v2301
    %v2375 = vpop.f32.mrb[0].mxu0
    %v2376 = vadd.f32 0.0, %v2375
    %v2377 = vpop.f32.mrb[0].mxu0
    %2378 = vdwg.mxu0
    %v2379 = vmul.f32 %v1750, %v1755
    %v2380 = vmul.f32 %v1751, %v1756
    %v2381 = vmul.f32 %v1752, %v1757
    %v2382 = vmul.f32 %v1753, %v1758
    %v2384 = vsel %vm80, %v2382, 0
    %2386 = vmatprep.subr.mxu0 0.0
    %2387 = vmatpush1.msra.mxu0 %v2379
    %2388 = vmatprep.subr.mxu0 0.0
    %2389 = vmatpush1.msra.mxu0 %v2380
    %2390 = vmatprep.subr.mxu0 0.0
    %2391 = vmatpush1.msra.mxu0 %v2381
    %2392 = vmatprep.subr.mxu0 0.0
    %2393 = vmatpush1.msra.mxu0 %v2384
    %2394 = vmatprep.subr.mxu0 0.0
    %2395 = vmatpush1.msra.mxu0 0.0
    %2396 = vmatprep.subr.mxu0 0.0
    %2397 = vmatpush1.msra.mxu0 0.0
    %2398 = vmatprep.subr.mxu0 0.0
    %2399 = vmatpush1.msra.mxu0 0.0
    %2400 = vmatprep.subr.mxu0 0.0
    %2401 = vmatpush1.msra.mxu0 0.0
    %2402 = vmatprep.subr.mxu0 0.0
    %2403 = vmatpush1.msra.mxu0 0.0
    %2404 = vmatprep.subr.mxu0 0.0
    %2405 = vmatpush1.msra.mxu0 0.0
    %2406 = vmatprep.subr.mxu0 0.0
    %2407 = vmatpush1.msra.mxu0 0.0
    %2408 = vmatprep.subr.mxu0 0.0
    %2409 = vmatpush1.msra.mxu0 0.0
    %2410 = vmatprep.subr.mxu0 0.0
    %2411 = vmatpush1.msra.mxu0 0.0
    %2412 = vmatprep.subr.mxu0 0.0
    %2413 = vmatpush1.msra.mxu0 0.0
    %2414 = vmatprep.subr.mxu0 0.0
    %2415 = vmatpush1.msra.mxu0 0.0
    %2416 = vmatprep.subr.mxu0 0.0
    %2417 = vmatpush1.msra.mxu0 0.0
    %2418 = vmatprep.subr.mxu0 0.0
    %2419 = vmatpush1.msra.mxu0 0.0
    %2420 = vmatprep.subr.mxu0 0.0
    %2421 = vmatpush1.msra.mxu0 0.0
    %2422 = vmatprep.subr.mxu0 0.0
    %2423 = vmatpush1.msra.mxu0 0.0
    %2424 = vmatprep.subr.mxu0 0.0
    %2425 = vmatpush1.msra.mxu0 0.0
    %2426 = vmatprep.subr.mxu0 0.0
    %2427 = vmatpush1.msra.mxu0 0.0
    %2428 = vmatprep.subr.mxu0 0.0
    %2429 = vmatpush1.msra.mxu0 0.0
    %2430 = vmatprep.subr.mxu0 0.0
    %2431 = vmatpush1.msra.mxu0 0.0
    %2432 = vmatprep.subr.mxu0 0.0
    %2433 = vmatpush1.msra.mxu0 0.0
    %2434 = vmatprep.subr.mxu0 0.0
    %2435 = vmatpush1.msra.mxu0 0.0
    %2436 = vmatprep.subr.mxu0 0.0
    %2437 = vmatpush1.msra.mxu0 0.0
    %2438 = vmatprep.subr.mxu0 0.0
    %2439 = vmatpush1.msra.mxu0 0.0
    %2440 = vmatprep.subr.mxu0 0.0
    %2441 = vmatpush1.msra.mxu0 0.0
    %2442 = vmatprep.subr.mxu0 0.0
    %2443 = vmatpush1.msra.mxu0 0.0
    %2444 = vmatprep.subr.mxu0 0.0
    %2445 = vmatpush1.msra.mxu0 0.0
    %2446 = vmatprep.subr.mxu0 0.0
    %2447 = vmatpush1.msra.mxu0 0.0
    %2448 = vmatprep.subr.mxu0 0.0
    %2449 = vmatpush1.msra.mxu0 0.0
    %2450 = vmatprep.mubr.f32.mxu0 0.0
    %2451 = vmatmul.mubr.f32.gmra.mrb[0].mxu0 %v75
    %v2452 = vpop.f32.mrb[0].mxu0
    %v2453 = vadd.f32 0.0, %v2452
    %v2454 = vpop.f32.mrb[0].mxu0
    %2455 = vmatprep.mubr.f32.mxu0 0.0
    %2456 = vmatmul.mubr.f32.gmra.mrb[0].mxu0 %v78
    %v2457 = vpop.f32.mrb[0].mxu0
    %v2458 = vadd.f32 0.0, %v2457
    %v2459 = vpop.f32.mrb[0].mxu0
    %2460 = vdwg.mxu0
    %2461 = vmatprep.subr.mxu0 0.0
    %2462 = vmatpush1.msra.mxu0 %v48
    %2463 = vmatprep.subr.mxu0 0.0
    %2464 = vmatpush1.msra.mxu0 %v49
    %2465 = vmatprep.subr.mxu0 0.0
    %2466 = vmatpush1.msra.mxu0 %v50
    %2467 = vmatprep.subr.mxu0 0.0
    %2468 = vmatpush1.msra.mxu0 %v51
    %2469 = vmatprep.subr.mxu0 0.0
    %2470 = vmatpush1.msra.mxu0 %v52
    %2471 = vmatprep.subr.mxu0 0.0
    %2472 = vmatpush1.msra.mxu0 %v53
    %2473 = vmatprep.subr.mxu0 0.0
    %2474 = vmatpush1.msra.mxu0 %v54
    %2475 = vmatprep.subr.mxu0 0.0
    %2476 = vmatpush1.msra.mxu0 %v55
    %2477 = vmatprep.subr.mxu0 0.0
    %2478 = vmatpush1.msra.mxu0 %v56
    %2479 = vmatprep.subr.mxu0 0.0
    %2480 = vmatpush1.msra.mxu0 %v57
    %2481 = vmatprep.subr.mxu0 0.0
    %2482 = vmatpush1.msra.mxu0 %v58
    %2483 = vmatprep.subr.mxu0 0.0
    %2484 = vmatpush1.msra.mxu0 %v59
    %2485 = vmatprep.subr.mxu0 0.0
    %2486 = vmatpush1.msra.mxu0 %v60
    %2487 = vmatprep.subr.mxu0 0.0
    %2488 = vmatpush1.msra.mxu0 %v61
    %2489 = vmatprep.subr.mxu0 0.0
    %2490 = vmatpush1.msra.mxu0 %v62
    %2491 = vmatprep.subr.mxu0 0.0
    %2492 = vmatpush1.msra.mxu0 %v63
    %2493 = vmatprep.subr.mxu0 0.0
    %2494 = vmatpush1.msra.mxu0 0.0
    %2495 = vmatprep.subr.mxu0 0.0
    %2496 = vmatpush1.msra.mxu0 0.0
    %2497 = vmatprep.subr.mxu0 0.0
    %2498 = vmatpush1.msra.mxu0 0.0
    %2499 = vmatprep.subr.mxu0 0.0
    %2500 = vmatpush1.msra.mxu0 0.0
    %2501 = vmatprep.subr.mxu0 0.0
    %2502 = vmatpush1.msra.mxu0 0.0
    %2503 = vmatprep.subr.mxu0 0.0
    %2504 = vmatpush1.msra.mxu0 0.0
    %2505 = vmatprep.subr.mxu0 0.0
    %2506 = vmatpush1.msra.mxu0 0.0
    %2507 = vmatprep.subr.mxu0 0.0
    %2508 = vmatpush1.msra.mxu0 0.0
    %2509 = vmatprep.subr.mxu0 0.0
    %2510 = vmatpush1.msra.mxu0 0.0
    %2511 = vmatprep.subr.mxu0 0.0
    %2512 = vmatpush1.msra.mxu0 0.0
    %2513 = vmatprep.subr.mxu0 0.0
    %2514 = vmatpush1.msra.mxu0 0.0
    %2515 = vmatprep.subr.mxu0 0.0
    %2516 = vmatpush1.msra.mxu0 0.0
    %2517 = vmatprep.subr.mxu0 0.0
    %2518 = vmatpush1.msra.mxu0 0.0
    %2519 = vmatprep.subr.mxu0 0.0
    %2520 = vmatpush1.msra.mxu0 0.0
    %2521 = vmatprep.subr.mxu0 0.0
    %2522 = vmatpush1.msra.mxu0 0.0
    %2523 = vmatprep.subr.mxu0 0.0
    %2524 = vmatpush1.msra.mxu0 0.0
    %2525 = vmatprep.mubr.f32.mxu0 0.0
    %2526 = vmatmul.mubr.f32.gmra.mrb[0].mxu0 %v2453
    %v2527 = vpop.f32.mrb[0].mxu0
    %v2528 = vadd.f32 0.0, %v2527
    %v2529 = vpop.f32.mrb[0].mxu0
    %2530 = vmatprep.mubr.f32.mxu0 0.0
    %2531 = vmatmul.mubr.f32.gmra.mrb[0].mxu0 %v2458
    %v2532 = vpop.f32.mrb[0].mxu0
    %v2533 = vadd.f32 0.0, %v2532
    %v2534 = vpop.f32.mrb[0].mxu0
    %2535 = vdwg.mxu0
    %v2536 = vmul.f32 %v1904, %v1904
    %v2537 = vmul.f32 %v1909, %v1909
    %v2538 = vmul.f32 %v2057, %v2057
    %v2539 = vmul.f32 %v2062, %v2062
    %v2540 = vmul.f32 %v1904, %v2057
    %v2541 = vmul.f32 %v1909, %v2062
    %v2542 = vsub.f32 %v2214, %v2536
    %v2543 = vsub.f32 %v2219, %v2537
    %v2544 = vsub.f32 %v2371, %v2538
    %v2545 = vsub.f32 %v2376, %v2539
    %v2546 = vsub.f32 %v2528, %v2540
    %v2547 = vsub.f32 %v2533, %v2541
    %v2548 = vmul.f32 %v2540, 2.0
    %v2549 = vmul.f32 %v2541, 2.0
    %v2550 = vadd.f32 %v2548, 6.5025
    %v2551 = vadd.f32 %v2549, 6.5025
    %v2552 = vmul.f32 %v2546, 2.0
    %v2553 = vmul.f32 %v2547, 2.0
    %v2554 = vadd.f32 %v2552, 58.5225
    %v2555 = vadd.f32 %v2553, 58.5225
    %v2556 = vmul.f32 %v2550, %v2554
    %v2557 = vmul.f32 %v2551, %v2555
    %v2558 = vadd.f32 %v2536, %v2538
    %v2559 = vadd.f32 %v2537, %v2539
    %v2560 = vadd.f32 %v2558, 6.5025
    %v2561 = vadd.f32 %v2559, 6.5025
    %v2562 = vadd.f32 %v2542, %v2544
    %v2563 = vadd.f32 %v2543, %v2545
    %v2564 = vadd.f32 %v2562, 58.5225
    %v2565 = vadd.f32 %v2563, 58.5225
    %v2566 = vmul.f32 %v2560, %v2564
    %v2567 = vmul.f32 %v2561, %v2565
    %v2568 = vrcp.pop %v2566
    %v2569 = vrcp.pop %v2567
    %v2570 = vmul.f32 %v2556, %v2568
    %v2571 = vmul.f32 %v2557, %v2569
    %v2572 = vsel %vm894, %v2570, 0.0
    %v2573 = vsel %vm894, %v2571, 0.0
    %v2574 = vadd.f32 %v2572, %v2573
    %2575 = vadd.xlane.f32.xlu0 %v2574
    %v2576 = vpop.xlane.xlu0 %2575
    %v2577 = vrot.slane %v2576, 4
    %v2578 = vadd.f32 %v2576, %v2577
    %v2579 = vrot.slane %v2578, 2
    %v2580 = vadd.f32 %v2578, %v2579
    %v2581 = vrot.slane %v2580, 1
    %v2582 = vadd.f32 %v2580, %v2581
    %s2583 = vtos %v2582
    %s2584 = sadd.s32 %s64, 2
    %p2585 = scmp.lt.s32.totalorder %s2584, 6
    %s2586 = scalar_select %p2585, %s2583, 0.0
    %s2587 = sadd.f32 %s1748, %s2586
    %s2588 = scalar_lea.vmem [#allocation2], 96
    %v2589 = vld [vmem:[%s2588] sm:$0xff]
    %v2590 = vld [vmem:[%s2588 + $0x8] sm:$0xff]
    %v2591 = vld [vmem:[%s2588 + $0x10] sm:$0xff]
    %v2592 = vld [vmem:[%s2588 + $0x18] sm:$0x3]
    %s2593 = scalar_lea.vmem [#allocation5], 96
    %v2594 = vld [vmem:[%s2593] sm:$0xff]
    %v2595 = vld [vmem:[%s2593 + $0x8] sm:$0xff]
    %v2596 = vld [vmem:[%s2593 + $0x10] sm:$0xff]
    %v2597 = vld [vmem:[%s2593 + $0x18] sm:$0x3]
    %v2599 = vsel %vm80, %v2592, 0
    %2601 = vmatprep.subr.mxu0 0.0
    %2602 = vmatpush1.msra.mxu0 %v2589
    %2603 = vmatprep.subr.mxu0 0.0
    %2604 = vmatpush1.msra.mxu0 %v2590
    %2605 = vmatprep.subr.mxu0 0.0
    %2606 = vmatpush1.msra.mxu0 %v2591
    %2607 = vmatprep.subr.mxu0 0.0
    %2608 = vmatpush1.msra.mxu0 %v2599
    %2609 = vmatprep.subr.mxu0 0.0
    %2610 = vmatpush1.msra.mxu0 0.0
    %2611 = vmatprep.subr.mxu0 0.0
    %2612 = vmatpush1.msra.mxu0 0.0
    %2613 = vmatprep.subr.mxu0 0.0
    %2614 = vmatpush1.msra.mxu0 0.0
    %2615 = vmatprep.subr.mxu0 0.0
    %2616 = vmatpush1.msra.mxu0 0.0
    %2617 = vmatprep.subr.mxu0 0.0
    %2618 = vmatpush1.msra.mxu0 0.0
    %2619 = vmatprep.subr.mxu0 0.0
    %2620 = vmatpush1.msra.mxu0 0.0
    %2621 = vmatprep.subr.mxu0 0.0
    %2622 = vmatpush1.msra.mxu0 0.0
    %2623 = vmatprep.subr.mxu0 0.0
    %2624 = vmatpush1.msra.mxu0 0.0
    %2625 = vmatprep.subr.mxu0 0.0
    %2626 = vmatpush1.msra.mxu0 0.0
    %2627 = vmatprep.subr.mxu0 0.0
    %2628 = vmatpush1.msra.mxu0 0.0
    %2629 = vmatprep.subr.mxu0 0.0
    %2630 = vmatpush1.msra.mxu0 0.0
    %2631 = vmatprep.subr.mxu0 0.0
    %2632 = vmatpush1.msra.mxu0 0.0
    %2633 = vmatprep.subr.mxu0 0.0
    %2634 = vmatpush1.msra.mxu0 0.0
    %2635 = vmatprep.subr.mxu0 0.0
    %2636 = vmatpush1.msra.mxu0 0.0
    %2637 = vmatprep.subr.mxu0 0.0
    %2638 = vmatpush1.msra.mxu0 0.0
    %2639 = vmatprep.subr.mxu0 0.0
    %2640 = vmatpush1.msra.mxu0 0.0
    %2641 = vmatprep.subr.mxu0 0.0
    %2642 = vmatpush1.msra.mxu0 0.0
    %2643 = vmatprep.subr.mxu0 0.0
    %2644 = vmatpush1.msra.mxu0 0.0
    %2645 = vmatprep.subr.mxu0 0.0
    %2646 = vmatpush1.msra.mxu0 0.0
    %2647 = vmatprep.subr.mxu0 0.0
    %2648 = vmatpush1.msra.mxu0 0.0
    %2649 = vmatprep.subr.mxu0 0.0
    %2650 = vmatpush1.msra.mxu0 0.0
    %2651 = vmatprep.subr.mxu0 0.0
    %2652 = vmatpush1.msra.mxu0 0.0
    %2653 = vmatprep.subr.mxu0 0.0
    %2654 = vmatpush1.msra.mxu0 0.0
    %2655 = vmatprep.subr.mxu0 0.0
    %2656 = vmatpush1.msra.mxu0 0.0
    %2657 = vmatprep.subr.mxu0 0.0
    %2658 = vmatpush1.msra.mxu0 0.0
    %2659 = vmatprep.subr.mxu0 0.0
    %2660 = vmatpush1.msra.mxu0 0.0
    %2661 = vmatprep.subr.mxu0 0.0
    %2662 = vmatpush1.msra.mxu0 0.0
    %2663 = vmatprep.subr.mxu0 0.0
    %2664 = vmatpush1.msra.mxu0 0.0
    %2665 = vmatprep.mubr.f32.mxu0 0.0
    %2666 = vmatmul.mubr.f32.gmra.mrb[0].mxu0 %v75
    %v2667 = vpop.f32.mrb[0].mxu0
    %v2668 = vadd.f32 0.0, %v2667
    %v2669 = vpop.f32.mrb[0].mxu0
    %2670 = vmatprep.mubr.f32.mxu0 0.0
    %2671 = vmatmul.mubr.f32.gmra.mrb[0].mxu0 %v78
    %v2672 = vpop.f32.mrb[0].mxu0
    %v2673 = vadd.f32 0.0, %v2672
    %v2674 = vpop.f32.mrb[0].mxu0
    %2675 = vdwg.mxu0
    %2676 = vmatprep.subr.mxu0 0.0
    %2677 = vmatpush1.msra.mxu0 %v48
    %2678 = vmatprep.subr.mxu0 0.0
    %2679 = vmatpush1.msra.mxu0 %v49
    %2680 = vmatprep.subr.mxu0 0.0
    %2681 = vmatpush1.msra.mxu0 %v50
    %2682 = vmatprep.subr.mxu0 0.0
    %2683 = vmatpush1.msra.mxu0 %v51
    %2684 = vmatprep.subr.mxu0 0.0
    %2685 = vmatpush1.msra.mxu0 %v52
    %2686 = vmatprep.subr.mxu0 0.0
    %2687 = vmatpush1.msra.mxu0 %v53
    %2688 = vmatprep.subr.mxu0 0.0
    %2689 = vmatpush1.msra.mxu0 %v54
    %2690 = vmatprep.subr.mxu0 0.0
    %2691 = vmatpush1.msra.mxu0 %v55
    %2692 = vmatprep.subr.mxu0 0.0
    %2693 = vmatpush1.msra.mxu0 %v56
    %2694 = vmatprep.subr.mxu0 0.0
    %2695 = vmatpush1.msra.mxu0 %v57
    %2696 = vmatprep.subr.mxu0 0.0
    %2697 = vmatpush1.msra.mxu0 %v58
    %2698 = vmatprep.subr.mxu0 0.0
    %2699 = vmatpush1.msra.mxu0 %v59
    %2700 = vmatprep.subr.mxu0 0.0
    %2701 = vmatpush1.msra.mxu0 %v60
    %2702 = vmatprep.subr.mxu0 0.0
    %2703 = vmatpush1.msra.mxu0 %v61
    %2704 = vmatprep.subr.mxu0 0.0
    %2705 = vmatpush1.msra.mxu0 %v62
    %2706 = vmatprep.subr.mxu0 0.0
    %2707 = vmatpush1.msra.mxu0 %v63
    %2708 = vmatprep.subr.mxu0 0.0
    %2709 = vmatpush1.msra.mxu0 0.0
    %2710 = vmatprep.subr.mxu0 0.0
    %2711 = vmatpush1.msra.mxu0 0.0
    %2712 = vmatprep.subr.mxu0 0.0
    %2713 = vmatpush1.msra.mxu0 0.0
    %2714 = vmatprep.subr.mxu0 0.0
    %2715 = vmatpush1.msra.mxu0 0.0
    %2716 = vmatprep.subr.mxu0 0.0
    %2717 = vmatpush1.msra.mxu0 0.0
    %2718 = vmatprep.subr.mxu0 0.0
    %2719 = vmatpush1.msra.mxu0 0.0
    %2720 = vmatprep.subr.mxu0 0.0
    %2721 = vmatpush1.msra.mxu0 0.0
    %2722 = vmatprep.subr.mxu0 0.0
    %2723 = vmatpush1.msra.mxu0 0.0
    %2724 = vmatprep.subr.mxu0 0.0
    %2725 = vmatpush1.msra.mxu0 0.0
    %2726 = vmatprep.subr.mxu0 0.0
    %2727 = vmatpush1.msra.mxu0 0.0
    %2728 = vmatprep.subr.mxu0 0.0
    %2729 = vmatpush1.msra.mxu0 0.0
    %2730 = vmatprep.subr.mxu0 0.0
    %2731 = vmatpush1.msra.mxu0 0.0
    %2732 = vmatprep.subr.mxu0 0.0
    %2733 = vmatpush1.msra.mxu0 0.0
    %2734 = vmatprep.subr.mxu0 0.0
    %2735 = vmatpush1.msra.mxu0 0.0
    %2736 = vmatprep.subr.mxu0 0.0
    %2737 = vmatpush1.msra.mxu0 0.0
    %2738 = vmatprep.subr.mxu0 0.0
    %2739 = vmatpush1.msra.mxu0 0.0
    %2740 = vmatprep.mubr.f32.mxu0 0.0
    %2741 = vmatmul.mubr.f32.gmra.mrb[0].mxu0 %v2668
    %v2742 = vpop.f32.mrb[0].mxu0
    %v2743 = vadd.f32 0.0, %v2742
    %v2744 = vpop.f32.mrb[0].mxu0
    %2745 = vmatprep.mubr.f32.mxu0 0.0
    %2746 = vmatmul.mubr.f32.gmra.mrb[0].mxu0 %v2673
    %v2747 = vpop.f32.mrb[0].mxu0
    %v2748 = vadd.f32 0.0, %v2747
    %v2749 = vpop.f32.mrb[0].mxu0
    %2750 = vdwg.mxu0
    %v2752 = vsel %vm80, %v2597, 0
    %2754 = vmatprep.subr.mxu0 0.0
    %2755 = vmatpush1.msra.mxu0 %v2594
    %2756 = vmatprep.subr.mxu0 0.0
    %2757 = vmatpush1.msra.mxu0 %v2595
    %2758 = vmatprep.subr.mxu0 0.0
    %2759 = vmatpush1.msra.mxu0 %v2596
    %2760 = vmatprep.subr.mxu0 0.0
    %2761 = vmatpush1.msra.mxu0 %v2752
    %2762 = vmatprep.subr.mxu0 0.0
    %2763 = vmatpush1.msra.mxu0 0.0
    %2764 = vmatprep.subr.mxu0 0.0
    %2765 = vmatpush1.msra.mxu0 0.0
    %2766 = vmatprep.subr.mxu0 0.0
    %2767 = vmatpush1.msra.mxu0 0.0
    %2768 = vmatprep.subr.mxu0 0.0
    %2769 = vmatpush1.msra.mxu0 0.0
    %2770 = vmatprep.subr.mxu0 0.0
    %2771 = vmatpush1.msra.mxu0 0.0
    %2772 = vmatprep.subr.mxu0 0.0
    %2773 = vmatpush1.msra.mxu0 0.0
    %2774 = vmatprep.subr.mxu0 0.0
    %2775 = vmatpush1.msra.mxu0 0.0
    %2776 = vmatprep.subr.mxu0 0.0
    %2777 = vmatpush1.msra.mxu0 0.0
    %2778 = vmatprep.subr.mxu0 0.0
    %2779 = vmatpush1.msra.mxu0 0.0
    %2780 = vmatprep.subr.mxu0 0.0
    %2781 = vmatpush1.msra.mxu0 0.0
    %2782 = vmatprep.subr.mxu0 0.0
    %2783 = vmatpush1.msra.mxu0 0.0
    %2784 = vmatprep.subr.mxu0 0.0
    %2785 = vmatpush1.msra.mxu0 0.0
    %2786 = vmatprep.subr.mxu0 0.0
    %2787 = vmatpush1.msra.mxu0 0.0
    %2788 = vmatprep.subr.mxu0 0.0
    %2789 = vmatpush1.msra.mxu0 0.0
    %2790 = vmatprep.subr.mxu0 0.0
    %2791 = vmatpush1.msra.mxu0 0.0
    %2792 = vmatprep.subr.mxu0 0.0
    %2793 = vmatpush1.msra.mxu0 0.0
    %2794 = vmatprep.subr.mxu0 0.0
    %2795 = vmatpush1.msra.mxu0 0.0
    %2796 = vmatprep.subr.mxu0 0.0
    %2797 = vmatpush1.msra.mxu0 0.0
    %2798 = vmatprep.subr.mxu0 0.0
    %2799 = vmatpush1.msra.mxu0 0.0
    %2800 = vmatprep.subr.mxu0 0.0
    %2801 = vmatpush1.msra.mxu0 0.0
    %2802 = vmatprep.subr.mxu0 0.0
    %2803 = vmatpush1.msra.mxu0 0.0
    %2804 = vmatprep.subr.mxu0 0.0
    %2805 = vmatpush1.msra.mxu0 0.0
    %2806 = vmatprep.subr.mxu0 0.0
    %2807 = vmatpush1.msra.mxu0 0.0
    %2808 = vmatprep.subr.mxu0 0.0
    %2809 = vmatpush1.msra.mxu0 0.0
    %2810 = vmatprep.subr.mxu0 0.0
    %2811 = vmatpush1.msra.mxu0 0.0
    %2812 = vmatprep.subr.mxu0 0.0
    %2813 = vmatpush1.msra.mxu0 0.0
    %2814 = vmatprep.subr.mxu0 0.0
    %2815 = vmatpush1.msra.mxu0 0.0
    %2816 = vmatprep.subr.mxu0 0.0
    %2817 = vmatpush1.msra.mxu0 0.0
    %2818 = vmatprep.mubr.f32.mxu0 0.0
    %2819 = vmatmul.mubr.f32.gmra.mrb[0].mxu0 %v75
    %v2820 = vpop.f32.mrb[0].mxu0
    %v2821 = vadd.f32 0.0, %v2820
    %v2822 = vpop.f32.mrb[0].mxu0
    %2823 = vmatprep.mubr.f32.mxu0 0.0
    %2824 = vmatmul.mubr.f32.gmra.mrb[0].mxu0 %v78
    %v2825 = vpop.f32.mrb[0].mxu0
    %v2826 = vadd.f32 0.0, %v2825
    %v2827 = vpop.f32.mrb[0].mxu0
    %2828 = vdwg.mxu0
    %2829 = vmatprep.subr.mxu0 0.0
    %2830 = vmatpush1.msra.mxu0 %v48
    %2831 = vmatprep.subr.mxu0 0.0
    %2832 = vmatpush1.msra.mxu0 %v49
    %2833 = vmatprep.subr.mxu0 0.0
    %2834 = vmatpush1.msra.mxu0 %v50
    %2835 = vmatprep.subr.mxu0 0.0
    %2836 = vmatpush1.msra.mxu0 %v51
    %2837 = vmatprep.subr.mxu0 0.0
    %2838 = vmatpush1.msra.mxu0 %v52
    %2839 = vmatprep.subr.mxu0 0.0
    %2840 = vmatpush1.msra.mxu0 %v53
    %2841 = vmatprep.subr.mxu0 0.0
    %2842 = vmatpush1.msra.mxu0 %v54
    %2843 = vmatprep.subr.mxu0 0.0
    %2844 = vmatpush1.msra.mxu0 %v55
    %2845 = vmatprep.subr.mxu0 0.0
    %2846 = vmatpush1.msra.mxu0 %v56
    %2847 = vmatprep.subr.mxu0 0.0
    %2848 = vmatpush1.msra.mxu0 %v57
    %2849 = vmatprep.subr.mxu0 0.0
    %2850 = vmatpush1.msra.mxu0 %v58
    %2851 = vmatprep.subr.mxu0 0.0
    %2852 = vmatpush1.msra.mxu0 %v59
    %2853 = vmatprep.subr.mxu0 0.0
    %2854 = vmatpush1.msra.mxu0 %v60
    %2855 = vmatprep.subr.mxu0 0.0
    %2856 = vmatpush1.msra.mxu0 %v61
    %2857 = vmatprep.subr.mxu0 0.0
    %2858 = vmatpush1.msra.mxu0 %v62
    %2859 = vmatprep.subr.mxu0 0.0
    %2860 = vmatpush1.msra.mxu0 %v63
    %2861 = vmatprep.subr.mxu0 0.0
    %2862 = vmatpush1.msra.mxu0 0.0
    %2863 = vmatprep.subr.mxu0 0.0
    %2864 = vmatpush1.msra.mxu0 0.0
    %2865 = vmatprep.subr.mxu0 0.0
    %2866 = vmatpush1.msra.mxu0 0.0
    %2867 = vmatprep.subr.mxu0 0.0
    %2868 = vmatpush1.msra.mxu0 0.0
    %2869 = vmatprep.subr.mxu0 0.0
    %2870 = vmatpush1.msra.mxu0 0.0
    %2871 = vmatprep.subr.mxu0 0.0
    %2872 = vmatpush1.msra.mxu0 0.0
    %2873 = vmatprep.subr.mxu0 0.0
    %2874 = vmatpush1.msra.mxu0 0.0
    %2875 = vmatprep.subr.mxu0 0.0
    %2876 = vmatpush1.msra.mxu0 0.0
    %2877 = vmatprep.subr.mxu0 0.0
    %2878 = vmatpush1.msra.mxu0 0.0
    %2879 = vmatprep.subr.mxu0 0.0
    %2880 = vmatpush1.msra.mxu0 0.0
    %2881 = vmatprep.subr.mxu0 0.0
    %2882 = vmatpush1.msra.mxu0 0.0
    %2883 = vmatprep.subr.mxu0 0.0
    %2884 = vmatpush1.msra.mxu0 0.0
    %2885 = vmatprep.subr.mxu0 0.0
    %2886 = vmatpush1.msra.mxu0 0.0
    %2887 = vmatprep.subr.mxu0 0.0
    %2888 = vmatpush1.msra.mxu0 0.0
    %2889 = vmatprep.subr.mxu0 0.0
    %2890 = vmatpush1.msra.mxu0 0.0
    %2891 = vmatprep.subr.mxu0 0.0
    %2892 = vmatpush1.msra.mxu0 0.0
    %2893 = vmatprep.mubr.f32.mxu0 0.0
    %2894 = vmatmul.mubr.f32.gmra.mrb[0].mxu0 %v2821
    %v2895 = vpop.f32.mrb[0].mxu0
    %v2896 = vadd.f32 0.0, %v2895
    %v2897 = vpop.f32.mrb[0].mxu0
    %2898 = vmatprep.mubr.f32.mxu0 0.0
    %2899 = vmatmul.mubr.f32.gmra.mrb[0].mxu0 %v2826
    %v2900 = vpop.f32.mrb[0].mxu0
    %v2901 = vadd.f32 0.0, %v2900
    %v2902 = vpop.f32.mrb[0].mxu0
    %2903 = vdwg.mxu0
    %v2904 = vmul.f32 %v2589, %v2589
    %v2905 = vmul.f32 %v2590, %v2590
    %v2906 = vmul.f32 %v2591, %v2591
    %v2907 = vmul.f32 %v2592, %v2592
    %v2909 = vsel %vm80, %v2907, 0
    %2911 = vmatprep.subr.mxu0 0.0
    %2912 = vmatpush1.msra.mxu0 %v2904
    %2913 = vmatprep.subr.mxu0 0.0
    %2914 = vmatpush1.msra.mxu0 %v2905
    %2915 = vmatprep.subr.mxu0 0.0
    %2916 = vmatpush1.msra.mxu0 %v2906
    %2917 = vmatprep.subr.mxu0 0.0
    %2918 = vmatpush1.msra.mxu0 %v2909
    %2919 = vmatprep.subr.mxu0 0.0
    %2920 = vmatpush1.msra.mxu0 0.0
    %2921 = vmatprep.subr.mxu0 0.0
    %2922 = vmatpush1.msra.mxu0 0.0
    %2923 = vmatprep.subr.mxu0 0.0
    %2924 = vmatpush1.msra.mxu0 0.0
    %2925 = vmatprep.subr.mxu0 0.0
    %2926 = vmatpush1.msra.mxu0 0.0
    %2927 = vmatprep.subr.mxu0 0.0
    %2928 = vmatpush1.msra.mxu0 0.0
    %2929 = vmatprep.subr.mxu0 0.0
    %2930 = vmatpush1.msra.mxu0 0.0
    %2931 = vmatprep.subr.mxu0 0.0
    %2932 = vmatpush1.msra.mxu0 0.0
    %2933 = vmatprep.subr.mxu0 0.0
    %2934 = vmatpush1.msra.mxu0 0.0
    %2935 = vmatprep.subr.mxu0 0.0
    %2936 = vmatpush1.msra.mxu0 0.0
    %2937 = vmatprep.subr.mxu0 0.0
    %2938 = vmatpush1.msra.mxu0 0.0
    %2939 = vmatprep.subr.mxu0 0.0
    %2940 = vmatpush1.msra.mxu0 0.0
    %2941 = vmatprep.subr.mxu0 0.0
    %2942 = vmatpush1.msra.mxu0 0.0
    %2943 = vmatprep.subr.mxu0 0.0
    %2944 = vmatpush1.msra.mxu0 0.0
    %2945 = vmatprep.subr.mxu0 0.0
    %2946 = vmatpush1.msra.mxu0 0.0
    %2947 = vmatprep.subr.mxu0 0.0
    %2948 = vmatpush1.msra.mxu0 0.0
    %2949 = vmatprep.subr.mxu0 0.0
    %2950 = vmatpush1.msra.mxu0 0.0
    %2951 = vmatprep.subr.mxu0 0.0
    %2952 = vmatpush1.msra.mxu0 0.0
    %2953 = vmatprep.subr.mxu0 0.0
    %2954 = vmatpush1.msra.mxu0 0.0
    %2955 = vmatprep.subr.mxu0 0.0
    %2956 = vmatpush1.msra.mxu0 0.0
    %2957 = vmatprep.subr.mxu0 0.0
    %2958 = vmatpush1.msra.mxu0 0.0
    %2959 = vmatprep.subr.mxu0 0.0
    %2960 = vmatpush1.msra.mxu0 0.0
    %2961 = vmatprep.subr.mxu0 0.0
    %2962 = vmatpush1.msra.mxu0 0.0
    %2963 = vmatprep.subr.mxu0 0.0
    %2964 = vmatpush1.msra.mxu0 0.0
    %2965 = vmatprep.subr.mxu0 0.0
    %2966 = vmatpush1.msra.mxu0 0.0
    %2967 = vmatprep.subr.mxu0 0.0
    %2968 = vmatpush1.msra.mxu0 0.0
    %2969 = vmatprep.subr.mxu0 0.0
    %2970 = vmatpush1.msra.mxu0 0.0
    %2971 = vmatprep.subr.mxu0 0.0
    %2972 = vmatpush1.msra.mxu0 0.0
    %2973 = vmatprep.subr.mxu0 0.0
    %2974 = vmatpush1.msra.mxu0 0.0
    %2975 = vmatprep.mubr.f32.mxu0 0.0
    %2976 = vmatmul.mubr.f32.gmra.mrb[0].mxu0 %v75
    %v2977 = vpop.f32.mrb[0].mxu0
    %v2978 = vadd.f32 0.0, %v2977
    %v2979 = vpop.f32.mrb[0].mxu0
    %2980 = vmatprep.mubr.f32.mxu0 0.0
    %2981 = vmatmul.mubr.f32.gmra.mrb[0].mxu0 %v78
    %v2982 = vpop.f32.mrb[0].mxu0
    %v2983 = vadd.f32 0.0, %v2982
    %v2984 = vpop.f32.mrb[0].mxu0
    %2985 = vdwg.mxu0
    %2986 = vmatprep.subr.mxu0 0.0
    %2987 = vmatpush1.msra.mxu0 %v48
    %2988 = vmatprep.subr.mxu0 0.0
    %2989 = vmatpush1.msra.mxu0 %v49
    %2990 = vmatprep.subr.mxu0 0.0
    %2991 = vmatpush1.msra.mxu0 %v50
    %2992 = vmatprep.subr.mxu0 0.0
    %2993 = vmatpush1.msra.mxu0 %v51
    %2994 = vmatprep.subr.mxu0 0.0
    %2995 = vmatpush1.msra.mxu0 %v52
    %2996 = vmatprep.subr.mxu0 0.0
    %2997 = vmatpush1.msra.mxu0 %v53
    %2998 = vmatprep.subr.mxu0 0.0
    %2999 = vmatpush1.msra.mxu0 %v54
    %3000 = vmatprep.subr.mxu0 0.0
    %3001 = vmatpush1.msra.mxu0 %v55
    %3002 = vmatprep.subr.mxu0 0.0
    %3003 = vmatpush1.msra.mxu0 %v56
    %3004 = vmatprep.subr.mxu0 0.0
    %3005 = vmatpush1.msra.mxu0 %v57
    %3006 = vmatprep.subr.mxu0 0.0
    %3007 = vmatpush1.msra.mxu0 %v58
    %3008 = vmatprep.subr.mxu0 0.0
    %3009 = vmatpush1.msra.mxu0 %v59
    %3010 = vmatprep.subr.mxu0 0.0
    %3011 = vmatpush1.msra.mxu0 %v60
    %3012 = vmatprep.subr.mxu0 0.0
    %3013 = vmatpush1.msra.mxu0 %v61
    %3014 = vmatprep.subr.mxu0 0.0
    %3015 = vmatpush1.msra.mxu0 %v62
    %3016 = vmatprep.subr.mxu0 0.0
    %3017 = vmatpush1.msra.mxu0 %v63
    %3018 = vmatprep.subr.mxu0 0.0
    %3019 = vmatpush1.msra.mxu0 0.0
    %3020 = vmatprep.subr.mxu0 0.0
    %3021 = vmatpush1.msra.mxu0 0.0
    %3022 = vmatprep.subr.mxu0 0.0
    %3023 = vmatpush1.msra.mxu0 0.0
    %3024 = vmatprep.subr.mxu0 0.0
    %3025 = vmatpush1.msra.mxu0 0.0
    %3026 = vmatprep.subr.mxu0 0.0
    %3027 = vmatpush1.msra.mxu0 0.0
    %3028 = vmatprep.subr.mxu0 0.0
    %3029 = vmatpush1.msra.mxu0 0.0
    %3030 = vmatprep.subr.mxu0 0.0
    %3031 = vmatpush1.msra.mxu0 0.0
    %3032 = vmatprep.subr.mxu0 0.0
    %3033 = vmatpush1.msra.mxu0 0.0
    %3034 = vmatprep.subr.mxu0 0.0
    %3035 = vmatpush1.msra.mxu0 0.0
    %3036 = vmatprep.subr.mxu0 0.0
    %3037 = vmatpush1.msra.mxu0 0.0
    %3038 = vmatprep.subr.mxu0 0.0
    %3039 = vmatpush1.msra.mxu0 0.0
    %3040 = vmatprep.subr.mxu0 0.0
    %3041 = vmatpush1.msra.mxu0 0.0
    %3042 = vmatprep.subr.mxu0 0.0
    %3043 = vmatpush1.msra.mxu0 0.0
    %3044 = vmatprep.subr.mxu0 0.0
    %3045 = vmatpush1.msra.mxu0 0.0
    %3046 = vmatprep.subr.mxu0 0.0
    %3047 = vmatpush1.msra.mxu0 0.0
    %3048 = vmatprep.subr.mxu0 0.0
    %3049 = vmatpush1.msra.mxu0 0.0
    %3050 = vmatprep.mubr.f32.mxu0 0.0
    %3051 = vmatmul.mubr.f32.gmra.mrb[0].mxu0 %v2978
    %v3052 = vpop.f32.mrb[0].mxu0
    %v3053 = vadd.f32 0.0, %v3052
    %v3054 = vpop.f32.mrb[0].mxu0
    %3055 = vmatprep.mubr.f32.mxu0 0.0
    %3056 = vmatmul.mubr.f32.gmra.mrb[0].mxu0 %v2983
    %v3057 = vpop.f32.mrb[0].mxu0
    %v3058 = vadd.f32 0.0, %v3057
    %v3059 = vpop.f32.mrb[0].mxu0
    %3060 = vdwg.mxu0
    %v3061 = vmul.f32 %v2594, %v2594
    %v3062 = vmul.f32 %v2595, %v2595
    %v3063 = vmul.f32 %v2596, %v2596
    %v3064 = vmul.f32 %v2597, %v2597
    %v3066 = vsel %vm80, %v3064, 0
    %3068 = vmatprep.subr.mxu0 0.0
    %3069 = vmatpush1.msra.mxu0 %v3061
    %3070 = vmatprep.subr.mxu0 0.0
    %3071 = vmatpush1.msra.mxu0 %v3062
    %3072 = vmatprep.subr.mxu0 0.0
    %3073 = vmatpush1.msra.mxu0 %v3063
    %3074 = vmatprep.subr.mxu0 0.0
    %3075 = vmatpush1.msra.mxu0 %v3066
    %3076 = vmatprep.subr.mxu0 0.0
    %3077 = vmatpush1.msra.mxu0 0.0
    %3078 = vmatprep.subr.mxu0 0.0
    %3079 = vmatpush1.msra.mxu0 0.0
    %3080 = vmatprep.subr.mxu0 0.0
    %3081 = vmatpush1.msra.mxu0 0.0
    %3082 = vmatprep.subr.mxu0 0.0
    %3083 = vmatpush1.msra.mxu0 0.0
    %3084 = vmatprep.subr.mxu0 0.0
    %3085 = vmatpush1.msra.mxu0 0.0
    %3086 = vmatprep.subr.mxu0 0.0
    %3087 = vmatpush1.msra.mxu0 0.0
    %3088 = vmatprep.subr.mxu0 0.0
    %3089 = vmatpush1.msra.mxu0 0.0
    %3090 = vmatprep.subr.mxu0 0.0
    %3091 = vmatpush1.msra.mxu0 0.0
    %3092 = vmatprep.subr.mxu0 0.0
    %3093 = vmatpush1.msra.mxu0 0.0
    %3094 = vmatprep.subr.mxu0 0.0
    %3095 = vmatpush1.msra.mxu0 0.0
    %3096 = vmatprep.subr.mxu0 0.0
    %3097 = vmatpush1.msra.mxu0 0.0
    %3098 = vmatprep.subr.mxu0 0.0
    %3099 = vmatpush1.msra.mxu0 0.0
    %3100 = vmatprep.subr.mxu0 0.0
    %3101 = vmatpush1.msra.mxu0 0.0
    %3102 = vmatprep.subr.mxu0 0.0
    %3103 = vmatpush1.msra.mxu0 0.0
    %3104 = vmatprep.subr.mxu0 0.0
    %3105 = vmatpush1.msra.mxu0 0.0
    %3106 = vmatprep.subr.mxu0 0.0
    %3107 = vmatpush1.msra.mxu0 0.0
    %3108 = vmatprep.subr.mxu0 0.0
    %3109 = vmatpush1.msra.mxu0 0.0
    %3110 = vmatprep.subr.mxu0 0.0
    %3111 = vmatpush1.msra.mxu0 0.0
    %3112 = vmatprep.subr.mxu0 0.0
    %3113 = vmatpush1.msra.mxu0 0.0
    %3114 = vmatprep.subr.mxu0 0.0
    %3115 = vmatpush1.msra.mxu0 0.0
    %3116 = vmatprep.subr.mxu0 0.0
    %3117 = vmatpush1.msra.mxu0 0.0
    %3118 = vmatprep.subr.mxu0 0.0
    %3119 = vmatpush1.msra.mxu0 0.0
    %3120 = vmatprep.subr.mxu0 0.0
    %3121 = vmatpush1.msra.mxu0 0.0
    %3122 = vmatprep.subr.mxu0 0.0
    %3123 = vmatpush1.msra.mxu0 0.0
    %3124 = vmatprep.subr.mxu0 0.0
    %3125 = vmatpush1.msra.mxu0 0.0
    %3126 = vmatprep.subr.mxu0 0.0
    %3127 = vmatpush1.msra.mxu0 0.0
    %3128 = vmatprep.subr.mxu0 0.0
    %3129 = vmatpush1.msra.mxu0 0.0
    %3130 = vmatprep.subr.mxu0 0.0
    %3131 = vmatpush1.msra.mxu0 0.0
    %3132 = vmatprep.mubr.f32.mxu0 0.0
    %3133 = vmatmul.mubr.f32.gmra.mrb[0].mxu0 %v75
    %v3134 = vpop.f32.mrb[0].mxu0
    %v3135 = vadd.f32 0.0, %v3134
    %v3136 = vpop.f32.mrb[0].mxu0
    %3137 = vmatprep.mubr.f32.mxu0 0.0
    %3138 = vmatmul.mubr.f32.gmra.mrb[0].mxu0 %v78
    %v3139 = vpop.f32.mrb[0].mxu0
    %v3140 = vadd.f32 0.0, %v3139
    %v3141 = vpop.f32.mrb[0].mxu0
    %3142 = vdwg.mxu0
    %3143 = vmatprep.subr.mxu0 0.0
    %3144 = vmatpush1.msra.mxu0 %v48
    %3145 = vmatprep.subr.mxu0 0.0
    %3146 = vmatpush1.msra.mxu0 %v49
    %3147 = vmatprep.subr.mxu0 0.0
    %3148 = vmatpush1.msra.mxu0 %v50
    %3149 = vmatprep.subr.mxu0 0.0
    %3150 = vmatpush1.msra.mxu0 %v51
    %3151 = vmatprep.subr.mxu0 0.0
    %3152 = vmatpush1.msra.mxu0 %v52
    %3153 = vmatprep.subr.mxu0 0.0
    %3154 = vmatpush1.msra.mxu0 %v53
    %3155 = vmatprep.subr.mxu0 0.0
    %3156 = vmatpush1.msra.mxu0 %v54
    %3157 = vmatprep.subr.mxu0 0.0
    %3158 = vmatpush1.msra.mxu0 %v55
    %3159 = vmatprep.subr.mxu0 0.0
    %3160 = vmatpush1.msra.mxu0 %v56
    %3161 = vmatprep.subr.mxu0 0.0
    %3162 = vmatpush1.msra.mxu0 %v57
    %3163 = vmatprep.subr.mxu0 0.0
    %3164 = vmatpush1.msra.mxu0 %v58
    %3165 = vmatprep.subr.mxu0 0.0
    %3166 = vmatpush1.msra.mxu0 %v59
    %3167 = vmatprep.subr.mxu0 0.0
    %3168 = vmatpush1.msra.mxu0 %v60
    %3169 = vmatprep.subr.mxu0 0.0
    %3170 = vmatpush1.msra.mxu0 %v61
    %3171 = vmatprep.subr.mxu0 0.0
    %3172 = vmatpush1.msra.mxu0 %v62
    %3173 = vmatprep.subr.mxu0 0.0
    %3174 = vmatpush1.msra.mxu0 %v63
    %3175 = vmatprep.subr.mxu0 0.0
    %3176 = vmatpush1.msra.mxu0 0.0
    %3177 = vmatprep.subr.mxu0 0.0
    %3178 = vmatpush1.msra.mxu0 0.0
    %3179 = vmatprep.subr.mxu0 0.0
    %3180 = vmatpush1.msra.mxu0 0.0
    %3181 = vmatprep.subr.mxu0 0.0
    %3182 = vmatpush1.msra.mxu0 0.0
    %3183 = vmatprep.subr.mxu0 0.0
    %3184 = vmatpush1.msra.mxu0 0.0
    %3185 = vmatprep.subr.mxu0 0.0
    %3186 = vmatpush1.msra.mxu0 0.0
    %3187 = vmatprep.subr.mxu0 0.0
    %3188 = vmatpush1.msra.mxu0 0.0
    %3189 = vmatprep.subr.mxu0 0.0
    %3190 = vmatpush1.msra.mxu0 0.0
    %3191 = vmatprep.subr.mxu0 0.0
    %3192 = vmatpush1.msra.mxu0 0.0
    %3193 = vmatprep.subr.mxu0 0.0
    %3194 = vmatpush1.msra.mxu0 0.0
    %3195 = vmatprep.subr.mxu0 0.0
    %3196 = vmatpush1.msra.mxu0 0.0
    %3197 = vmatprep.subr.mxu0 0.0
    %3198 = vmatpush1.msra.mxu0 0.0
    %3199 = vmatprep.subr.mxu0 0.0
    %3200 = vmatpush1.msra.mxu0 0.0
    %3201 = vmatprep.subr.mxu0 0.0
    %3202 = vmatpush1.msra.mxu0 0.0
    %3203 = vmatprep.subr.mxu0 0.0
    %3204 = vmatpush1.msra.mxu0 0.0
    %3205 = vmatprep.subr.mxu0 0.0
    %3206 = vmatpush1.msra.mxu0 0.0
    %3207 = vmatprep.mubr.f32.mxu0 0.0
    %3208 = vmatmul.mubr.f32.gmra.mrb[0].mxu0 %v3135
    %v3209 = vpop.f32.mrb[0].mxu0
    %v3210 = vadd.f32 0.0, %v3209
    %v3211 = vpop.f32.mrb[0].mxu0
    %3212 = vmatprep.mubr.f32.mxu0 0.0
    %3213 = vmatmul.mubr.f32.gmra.mrb[0].mxu0 %v3140
    %v3214 = vpop.f32.mrb[0].mxu0
    %v3215 = vadd.f32 0.0, %v3214
    %v3216 = vpop.f32.mrb[0].mxu0
    %3217 = vdwg.mxu0
    %v3218 = vmul.f32 %v2589, %v2594
    %v3219 = vmul.f32 %v2590, %v2595
    %v3220 = vmul.f32 %v2591, %v2596
    %v3221 = vmul.f32 %v2592, %v2597
    %v3223 = vsel %vm80, %v3221, 0
    %3225 = vmatprep.subr.mxu0 0.0
    %3226 = vmatpush1.msra.mxu0 %v3218
    %3227 = vmatprep.subr.mxu0 0.0
    %3228 = vmatpush1.msra.mxu0 %v3219
    %3229 = vmatprep.subr.mxu0 0.0
    %3230 = vmatpush1.msra.mxu0 %v3220
    %3231 = vmatprep.subr.mxu0 0.0
    %3232 = vmatpush1.msra.mxu0 %v3223
    %3233 = vmatprep.subr.mxu0 0.0
    %3234 = vmatpush1.msra.mxu0 0.0
    %3235 = vmatprep.subr.mxu0 0.0
    %3236 = vmatpush1.msra.mxu0 0.0
    %3237 = vmatprep.subr.mxu0 0.0
    %3238 = vmatpush1.msra.mxu0 0.0
    %3239 = vmatprep.subr.mxu0 0.0
    %3240 = vmatpush1.msra.mxu0 0.0
    %3241 = vmatprep.subr.mxu0 0.0
    %3242 = vmatpush1.msra.mxu0 0.0
    %3243 = vmatprep.subr.mxu0 0.0
    %3244 = vmatpush1.msra.mxu0 0.0
    %3245 = vmatprep.subr.mxu0 0.0
    %3246 = vmatpush1.msra.mxu0 0.0
    %3247 = vmatprep.subr.mxu0 0.0
    %3248 = vmatpush1.msra.mxu0 0.0
    %3249 = vmatprep.subr.mxu0 0.0
    %3250 = vmatpush1.msra.mxu0 0.0
    %3251 = vmatprep.subr.mxu0 0.0
    %3252 = vmatpush1.msra.mxu0 0.0
    %3253 = vmatprep.subr.mxu0 0.0
    %3254 = vmatpush1.msra.mxu0 0.0
    %3255 = vmatprep.subr.mxu0 0.0
    %3256 = vmatpush1.msra.mxu0 0.0
    %3257 = vmatprep.subr.mxu0 0.0
    %3258 = vmatpush1.msra.mxu0 0.0
    %3259 = vmatprep.subr.mxu0 0.0
    %3260 = vmatpush1.msra.mxu0 0.0
    %3261 = vmatprep.subr.mxu0 0.0
    %3262 = vmatpush1.msra.mxu0 0.0
    %3263 = vmatprep.subr.mxu0 0.0
    %3264 = vmatpush1.msra.mxu0 0.0
    %3265 = vmatprep.subr.mxu0 0.0
    %3266 = vmatpush1.msra.mxu0 0.0
    %3267 = vmatprep.subr.mxu0 0.0
    %3268 = vmatpush1.msra.mxu0 0.0
    %3269 = vmatprep.subr.mxu0 0.0
    %3270 = vmatpush1.msra.mxu0 0.0
    %3271 = vmatprep.subr.mxu0 0.0
    %3272 = vmatpush1.msra.mxu0 0.0
    %3273 = vmatprep.subr.mxu0 0.0
    %3274 = vmatpush1.msra.mxu0 0.0
    %3275 = vmatprep.subr.mxu0 0.0
    %3276 = vmatpush1.msra.mxu0 0.0
    %3277 = vmatprep.subr.mxu0 0.0
    %3278 = vmatpush1.msra.mxu0 0.0
    %3279 = vmatprep.subr.mxu0 0.0
    %3280 = vmatpush1.msra.mxu0 0.0
    %3281 = vmatprep.subr.mxu0 0.0
    %3282 = vmatpush1.msra.mxu0 0.0
    %3283 = vmatprep.subr.mxu0 0.0
    %3284 = vmatpush1.msra.mxu0 0.0
    %3285 = vmatprep.subr.mxu0 0.0
    %3286 = vmatpush1.msra.mxu0 0.0
    %3287 = vmatprep.subr.mxu0 0.0
    %3288 = vmatpush1.msra.mxu0 0.0
    %3289 = vmatprep.mubr.f32.mxu0 0.0
    %3290 = vmatmul.mubr.f32.gmra.mrb[0].mxu0 %v75
    %v3291 = vpop.f32.mrb[0].mxu0
    %v3292 = vadd.f32 0.0, %v3291
    %v3293 = vpop.f32.mrb[0].mxu0
    %3294 = vmatprep.mubr.f32.mxu0 0.0
    %3295 = vmatmul.mubr.f32.gmra.mrb[0].mxu0 %v78
    %v3296 = vpop.f32.mrb[0].mxu0
    %v3297 = vadd.f32 0.0, %v3296
    %v3298 = vpop.f32.mrb[0].mxu0
    %3299 = vdwg.mxu0
    %3300 = vmatprep.subr.mxu0 0.0
    %3301 = vmatpush1.msra.mxu0 %v48
    %3302 = vmatprep.subr.mxu0 0.0
    %3303 = vmatpush1.msra.mxu0 %v49
    %3304 = vmatprep.subr.mxu0 0.0
    %3305 = vmatpush1.msra.mxu0 %v50
    %3306 = vmatprep.subr.mxu0 0.0
    %3307 = vmatpush1.msra.mxu0 %v51
    %3308 = vmatprep.subr.mxu0 0.0
    %3309 = vmatpush1.msra.mxu0 %v52
    %3310 = vmatprep.subr.mxu0 0.0
    %3311 = vmatpush1.msra.mxu0 %v53
    %3312 = vmatprep.subr.mxu0 0.0
    %3313 = vmatpush1.msra.mxu0 %v54
    %3314 = vmatprep.subr.mxu0 0.0
    %3315 = vmatpush1.msra.mxu0 %v55
    %3316 = vmatprep.subr.mxu0 0.0
    %3317 = vmatpush1.msra.mxu0 %v56
    %3318 = vmatprep.subr.mxu0 0.0
    %3319 = vmatpush1.msra.mxu0 %v57
    %3320 = vmatprep.subr.mxu0 0.0
    %3321 = vmatpush1.msra.mxu0 %v58
    %3322 = vmatprep.subr.mxu0 0.0
    %3323 = vmatpush1.msra.mxu0 %v59
    %3324 = vmatprep.subr.mxu0 0.0
    %3325 = vmatpush1.msra.mxu0 %v60
    %3326 = vmatprep.subr.mxu0 0.0
    %3327 = vmatpush1.msra.mxu0 %v61
    %3328 = vmatprep.subr.mxu0 0.0
    %3329 = vmatpush1.msra.mxu0 %v62
    %3330 = vmatprep.subr.mxu0 0.0
    %3331 = vmatpush1.msra.mxu0 %v63
    %3332 = vmatprep.subr.mxu0 0.0
    %3333 = vmatpush1.msra.mxu0 0.0
    %3334 = vmatprep.subr.mxu0 0.0
    %3335 = vmatpush1.msra.mxu0 0.0
    %3336 = vmatprep.subr.mxu0 0.0
    %3337 = vmatpush1.msra.mxu0 0.0
    %3338 = vmatprep.subr.mxu0 0.0
    %3339 = vmatpush1.msra.mxu0 0.0
    %3340 = vmatprep.subr.mxu0 0.0
    %3341 = vmatpush1.msra.mxu0 0.0
    %3342 = vmatprep.subr.mxu0 0.0
    %3343 = vmatpush1.msra.mxu0 0.0
    %3344 = vmatprep.subr.mxu0 0.0
    %3345 = vmatpush1.msra.mxu0 0.0
    %3346 = vmatprep.subr.mxu0 0.0
    %3347 = vmatpush1.msra.mxu0 0.0
    %3348 = vmatprep.subr.mxu0 0.0
    %3349 = vmatpush1.msra.mxu0 0.0
    %3350 = vmatprep.subr.mxu0 0.0
    %3351 = vmatpush1.msra.mxu0 0.0
    %3352 = vmatprep.subr.mxu0 0.0
    %3353 = vmatpush1.msra.mxu0 0.0
    %3354 = vmatprep.subr.mxu0 0.0
    %3355 = vmatpush1.msra.mxu0 0.0
    %3356 = vmatprep.subr.mxu0 0.0
    %3357 = vmatpush1.msra.mxu0 0.0
    %3358 = vmatprep.subr.mxu0 0.0
    %3359 = vmatpush1.msra.mxu0 0.0
    %3360 = vmatprep.subr.mxu0 0.0
    %3361 = vmatpush1.msra.mxu0 0.0
    %3362 = vmatprep.subr.mxu0 0.0
    %3363 = vmatpush1.msra.mxu0 0.0
    %3364 = vmatprep.mubr.f32.mxu0 0.0
    %3365 = vmatmul.mubr.f32.gmra.mrb[0].mxu0 %v3292
    %v3366 = vpop.f32.mrb[0].mxu0
    %v3367 = vadd.f32 0.0, %v3366
    %v3368 = vpop.f32.mrb[0].mxu0
    %3369 = vmatprep.mubr.f32.mxu0 0.0
    %3370 = vmatmul.mubr.f32.gmra.mrb[0].mxu0 %v3297
    %v3371 = vpop.f32.mrb[0].mxu0
    %v3372 = vadd.f32 0.0, %v3371
    %v3373 = vpop.f32.mrb[0].mxu0
    %3374 = vdwg.mxu0
    %v3375 = vmul.f32 %v2743, %v2743
    %v3376 = vmul.f32 %v2748, %v2748
    %v3377 = vmul.f32 %v2896, %v2896
    %v3378 = vmul.f32 %v2901, %v2901
    %v3379 = vmul.f32 %v2743, %v2896
    %v3380 = vmul.f32 %v2748, %v2901
    %v3381 = vsub.f32 %v3053, %v3375
    %v3382 = vsub.f32 %v3058, %v3376
    %v3383 = vsub.f32 %v3210, %v3377
    %v3384 = vsub.f32 %v3215, %v3378
    %v3385 = vsub.f32 %v3367, %v3379
    %v3386 = vsub.f32 %v3372, %v3380
    %v3387 = vmul.f32 %v3379, 2.0
    %v3388 = vmul.f32 %v3380, 2.0
    %v3389 = vadd.f32 %v3387, 6.5025
    %v3390 = vadd.f32 %v3388, 6.5025
    %v3391 = vmul.f32 %v3385, 2.0
    %v3392 = vmul.f32 %v3386, 2.0
    %v3393 = vadd.f32 %v3391, 58.5225
    %v3394 = vadd.f32 %v3392, 58.5225
    %v3395 = vmul.f32 %v3389, %v3393
    %v3396 = vmul.f32 %v3390, %v3394
    %v3397 = vadd.f32 %v3375, %v3377
    %v3398 = vadd.f32 %v3376, %v3378
    %v3399 = vadd.f32 %v3397, 6.5025
    %v3400 = vadd.f32 %v3398, 6.5025
    %v3401 = vadd.f32 %v3381, %v3383
    %v3402 = vadd.f32 %v3382, %v3384
    %v3403 = vadd.f32 %v3401, 58.5225
    %v3404 = vadd.f32 %v3402, 58.5225
    %v3405 = vmul.f32 %v3399, %v3403
    %v3406 = vmul.f32 %v3400, %v3404
    %v3407 = vrcp.pop %v3405
    %v3408 = vrcp.pop %v3406
    %v3409 = vmul.f32 %v3395, %v3407
    %v3410 = vmul.f32 %v3396, %v3408
    %v3411 = vsel %vm894, %v3409, 0.0
    %v3412 = vsel %vm894, %v3410, 0.0
    %v3413 = vadd.f32 %v3411, %v3412
    %3414 = vadd.xlane.f32.xlu0 %v3413
    %v3415 = vpop.xlane.xlu0 %3414
    %v3416 = vrot.slane %v3415, 4
    %v3417 = vadd.f32 %v3415, %v3416
    %v3418 = vrot.slane %v3417, 2
    %v3419 = vadd.f32 %v3417, %v3418
    %v3420 = vrot.slane %v3419, 1
    %v3421 = vadd.f32 %v3419, %v3420
    %s3422 = vtos %v3421
    %s3423 = sadd.s32 %s64, 3
    %p3424 = scmp.lt.s32.totalorder %s3423, 6
    %s3425 = scalar_select %p3424, %s3422, 0.0
    %s3426 = sadd.f32 %s2587, %s3425
    %s3427 = scalar_lea.vmem [#allocation2], 128
    %v3428 = vld [vmem:[%s3427] sm:$0xff]
    %v3429 = vld [vmem:[%s3427 + $0x8] sm:$0xff]
    %v3430 = vld [vmem:[%s3427 + $0x10] sm:$0xff]
    %v3431 = vld [vmem:[%s3427 + $0x18] sm:$0x3]
    %s3432 = scalar_lea.vmem [#allocation5], 128
    %v3433 = vld [vmem:[%s3432] sm:$0xff]
    %v3434 = vld [vmem:[%s3432 + $0x8] sm:$0xff]
    %v3435 = vld [vmem:[%s3432 + $0x10] sm:$0xff]
    %v3436 = vld [vmem:[%s3432 + $0x18] sm:$0x3]
    %v3438 = vsel %vm80, %v3431, 0
    %3440 = vmatprep.subr.mxu0 0.0
    %3441 = vmatpush1.msra.mxu0 %v3428
    %3442 = vmatprep.subr.mxu0 0.0
    %3443 = vmatpush1.msra.mxu0 %v3429
    %3444 = vmatprep.subr.mxu0 0.0
    %3445 = vmatpush1.msra.mxu0 %v3430
    %3446 = vmatprep.subr.mxu0 0.0
    %3447 = vmatpush1.msra.mxu0 %v3438
    %3448 = vmatprep.subr.mxu0 0.0
    %3449 = vmatpush1.msra.mxu0 0.0
    %3450 = vmatprep.subr.mxu0 0.0
    %3451 = vmatpush1.msra.mxu0 0.0
    %3452 = vmatprep.subr.mxu0 0.0
    %3453 = vmatpush1.msra.mxu0 0.0
    %3454 = vmatprep.subr.mxu0 0.0
    %3455 = vmatpush1.msra.mxu0 0.0
    %3456 = vmatprep.subr.mxu0 0.0
    %3457 = vmatpush1.msra.mxu0 0.0
    %3458 = vmatprep.subr.mxu0 0.0
    %3459 = vmatpush1.msra.mxu0 0.0
    %3460 = vmatprep.subr.mxu0 0.0
    %3461 = vmatpush1.msra.mxu0 0.0
    %3462 = vmatprep.subr.mxu0 0.0
    %3463 = vmatpush1.msra.mxu0 0.0
    %3464 = vmatprep.subr.mxu0 0.0
    %3465 = vmatpush1.msra.mxu0 0.0
    %3466 = vmatprep.subr.mxu0 0.0
    %3467 = vmatpush1.msra.mxu0 0.0
    %3468 = vmatprep.subr.mxu0 0.0
    %3469 = vmatpush1.msra.mxu0 0.0
    %3470 = vmatprep.subr.mxu0 0.0
    %3471 = vmatpush1.msra.mxu0 0.0
    %3472 = vmatprep.subr.mxu0 0.0
    %3473 = vmatpush1.msra.mxu0 0.0
    %3474 = vmatprep.subr.mxu0 0.0
    %3475 = vmatpush1.msra.mxu0 0.0
    %3476 = vmatprep.subr.mxu0 0.0
    %3477 = vmatpush1.msra.mxu0 0.0
    %3478 = vmatprep.subr.mxu0 0.0
    %3479 = vmatpush1.msra.mxu0 0.0
    %3480 = vmatprep.subr.mxu0 0.0
    %3481 = vmatpush1.msra.mxu0 0.0
    %3482 = vmatprep.subr.mxu0 0.0
    %3483 = vmatpush1.msra.mxu0 0.0
    %3484 = vmatprep.subr.mxu0 0.0
    %3485 = vmatpush1.msra.mxu0 0.0
    %3486 = vmatprep.subr.mxu0 0.0
    %3487 = vmatpush1.msra.mxu0 0.0
    %3488 = vmatprep.subr.mxu0 0.0
    %3489 = vmatpush1.msra.mxu0 0.0
    %3490 = vmatprep.subr.mxu0 0.0
    %3491 = vmatpush1.msra.mxu0 0.0
    %3492 = vmatprep.subr.mxu0 0.0
    %3493 = vmatpush1.msra.mxu0 0.0
    %3494 = vmatprep.subr.mxu0 0.0
    %3495 = vmatpush1.msra.mxu0 0.0
    %3496 = vmatprep.subr.mxu0 0.0
    %3497 = vmatpush1.msra.mxu0 0.0
    %3498 = vmatprep.subr.mxu0 0.0
    %3499 = vmatpush1.msra.mxu0 0.0
    %3500 = vmatprep.subr.mxu0 0.0
    %3501 = vmatpush1.msra.mxu0 0.0
    %3502 = vmatprep.subr.mxu0 0.0
    %3503 = vmatpush1.msra.mxu0 0.0
    %3504 = vmatprep.mubr.f32.mxu0 0.0
    %3505 = vmatmul.mubr.f32.gmra.mrb[0].mxu0 %v75
    %v3506 = vpop.f32.mrb[0].mxu0
    %v3507 = vadd.f32 0.0, %v3506
    %v3508 = vpop.f32.mrb[0].mxu0
    %3509 = vmatprep.mubr.f32.mxu0 0.0
    %3510 = vmatmul.mubr.f32.gmra.mrb[0].mxu0 %v78
    %v3511 = vpop.f32.mrb[0].mxu0
    %v3512 = vadd.f32 0.0, %v3511
    %v3513 = vpop.f32.mrb[0].mxu0
    %3514 = vdwg.mxu0
    %3515 = vmatprep.subr.mxu0 0.0
    %3516 = vmatpush1.msra.mxu0 %v48
    %3517 = vmatprep.subr.mxu0 0.0
    %3518 = vmatpush1.msra.mxu0 %v49
    %3519 = vmatprep.subr.mxu0 0.0
    %3520 = vmatpush1.msra.mxu0 %v50
    %3521 = vmatprep.subr.mxu0 0.0
    %3522 = vmatpush1.msra.mxu0 %v51
    %3523 = vmatprep.subr.mxu0 0.0
    %3524 = vmatpush1.msra.mxu0 %v52
    %3525 = vmatprep.subr.mxu0 0.0
    %3526 = vmatpush1.msra.mxu0 %v53
    %3527 = vmatprep.subr.mxu0 0.0
    %3528 = vmatpush1.msra.mxu0 %v54
    %3529 = vmatprep.subr.mxu0 0.0
    %3530 = vmatpush1.msra.mxu0 %v55
    %3531 = vmatprep.subr.mxu0 0.0
    %3532 = vmatpush1.msra.mxu0 %v56
    %3533 = vmatprep.subr.mxu0 0.0
    %3534 = vmatpush1.msra.mxu0 %v57
    %3535 = vmatprep.subr.mxu0 0.0
    %3536 = vmatpush1.msra.mxu0 %v58
    %3537 = vmatprep.subr.mxu0 0.0
    %3538 = vmatpush1.msra.mxu0 %v59
    %3539 = vmatprep.subr.mxu0 0.0
    %3540 = vmatpush1.msra.mxu0 %v60
    %3541 = vmatprep.subr.mxu0 0.0
    %3542 = vmatpush1.msra.mxu0 %v61
    %3543 = vmatprep.subr.mxu0 0.0
    %3544 = vmatpush1.msra.mxu0 %v62
    %3545 = vmatprep.subr.mxu0 0.0
    %3546 = vmatpush1.msra.mxu0 %v63
    %3547 = vmatprep.subr.mxu0 0.0
    %3548 = vmatpush1.msra.mxu0 0.0
    %3549 = vmatprep.subr.mxu0 0.0
    %3550 = vmatpush1.msra.mxu0 0.0
    %3551 = vmatprep.subr.mxu0 0.0
    %3552 = vmatpush1.msra.mxu0 0.0
    %3553 = vmatprep.subr.mxu0 0.0
    %3554 = vmatpush1.msra.mxu0 0.0
    %3555 = vmatprep.subr.mxu0 0.0
    %3556 = vmatpush1.msra.mxu0 0.0
    %3557 = vmatprep.subr.mxu0 0.0
    %3558 = vmatpush1.msra.mxu0 0.0
    %3559 = vmatprep.subr.mxu0 0.0
    %3560 = vmatpush1.msra.mxu0 0.0
    %3561 = vmatprep.subr.mxu0 0.0
    %3562 = vmatpush1.msra.mxu0 0.0
    %3563 = vmatprep.subr.mxu0 0.0
    %3564 = vmatpush1.msra.mxu0 0.0
    %3565 = vmatprep.subr.mxu0 0.0
    %3566 = vmatpush1.msra.mxu0 0.0
    %3567 = vmatprep.subr.mxu0 0.0
    %3568 = vmatpush1.msra.mxu0 0.0
    %3569 = vmatprep.subr.mxu0 0.0
    %3570 = vmatpush1.msra.mxu0 0.0
    %3571 = vmatprep.subr.mxu0 0.0
    %3572 = vmatpush1.msra.mxu0 0.0
    %3573 = vmatprep.subr.mxu0 0.0
    %3574 = vmatpush1.msra.mxu0 0.0
    %3575 = vmatprep.subr.mxu0 0.0
    %3576 = vmatpush1.msra.mxu0 0.0
    %3577 = vmatprep.subr.mxu0 0.0
    %3578 = vmatpush1.msra.mxu0 0.0
    %3579 = vmatprep.mubr.f32.mxu0 0.0
    %3580 = vmatmul.mubr.f32.gmra.mrb[0].mxu0 %v3507
    %v3581 = vpop.f32.mrb[0].mxu0
    %v3582 = vadd.f32 0.0, %v3581
    %v3583 = vpop.f32.mrb[0].mxu0
    %3584 = vmatprep.mubr.f32.mxu0 0.0
    %3585 = vmatmul.mubr.f32.gmra.mrb[0].mxu0 %v3512
    %v3586 = vpop.f32.mrb[0].mxu0
    %v3587 = vadd.f32 0.0, %v3586
    %v3588 = vpop.f32.mrb[0].mxu0
    %3589 = vdwg.mxu0
    %v3591 = vsel %vm80, %v3436, 0
    %3593 = vmatprep.subr.mxu0 0.0
    %3594 = vmatpush1.msra.mxu0 %v3433
    %3595 = vmatprep.subr.mxu0 0.0
    %3596 = vmatpush1.msra.mxu0 %v3434
    %3597 = vmatprep.subr.mxu0 0.0
    %3598 = vmatpush1.msra.mxu0 %v3435
    %3599 = vmatprep.subr.mxu0 0.0
    %3600 = vmatpush1.msra.mxu0 %v3591
    %3601 = vmatprep.subr.mxu0 0.0
    %3602 = vmatpush1.msra.mxu0 0.0
    %3603 = vmatprep.subr.mxu0 0.0
    %3604 = vmatpush1.msra.mxu0 0.0
    %3605 = vmatprep.subr.mxu0 0.0
    %3606 = vmatpush1.msra.mxu0 0.0
    %3607 = vmatprep.subr.mxu0 0.0
    %3608 = vmatpush1.msra.mxu0 0.0
    %3609 = vmatprep.subr.mxu0 0.0
    %3610 = vmatpush1.msra.mxu0 0.0
    %3611 = vmatprep.subr.mxu0 0.0
    %3612 = vmatpush1.msra.mxu0 0.0
    %3613 = vmatprep.subr.mxu0 0.0
    %3614 = vmatpush1.msra.mxu0 0.0
    %3615 = vmatprep.subr.mxu0 0.0
    %3616 = vmatpush1.msra.mxu0 0.0
    %3617 = vmatprep.subr.mxu0 0.0
    %3618 = vmatpush1.msra.mxu0 0.0
    %3619 = vmatprep.subr.mxu0 0.0
    %3620 = vmatpush1.msra.mxu0 0.0
    %3621 = vmatprep.subr.mxu0 0.0
    %3622 = vmatpush1.msra.mxu0 0.0
    %3623 = vmatprep.subr.mxu0 0.0
    %3624 = vmatpush1.msra.mxu0 0.0
    %3625 = vmatprep.subr.mxu0 0.0
    %3626 = vmatpush1.msra.mxu0 0.0
    %3627 = vmatprep.subr.mxu0 0.0
    %3628 = vmatpush1.msra.mxu0 0.0
    %3629 = vmatprep.subr.mxu0 0.0
    %3630 = vmatpush1.msra.mxu0 0.0
    %3631 = vmatprep.subr.mxu0 0.0
    %3632 = vmatpush1.msra.mxu0 0.0
    %3633 = vmatprep.subr.mxu0 0.0
    %3634 = vmatpush1.msra.mxu0 0.0
    %3635 = vmatprep.subr.mxu0 0.0
    %3636 = vmatpush1.msra.mxu0 0.0
    %3637 = vmatprep.subr.mxu0 0.0
    %3638 = vmatpush1.msra.mxu0 0.0
    %3639 = vmatprep.subr.mxu0 0.0
    %3640 = vmatpush1.msra.mxu0 0.0
    %3641 = vmatprep.subr.mxu0 0.0
    %3642 = vmatpush1.msra.mxu0 0.0
    %3643 = vmatprep.subr.mxu0 0.0
    %3644 = vmatpush1.msra.mxu0 0.0
    %3645 = vmatprep.subr.mxu0 0.0
    %3646 = vmatpush1.msra.mxu0 0.0
    %3647 = vmatprep.subr.mxu0 0.0
    %3648 = vmatpush1.msra.mxu0 0.0
    %3649 = vmatprep.subr.mxu0 0.0
    %3650 = vmatpush1.msra.mxu0 0.0
    %3651 = vmatprep.subr.mxu0 0.0
    %3652 = vmatpush1.msra.mxu0 0.0
    %3653 = vmatprep.subr.mxu0 0.0
    %3654 = vmatpush1.msra.mxu0 0.0
    %3655 = vmatprep.subr.mxu0 0.0
    %3656 = vmatpush1.msra.mxu0 0.0
    %3657 = vmatprep.mubr.f32.mxu0 0.0
    %3658 = vmatmul.mubr.f32.gmra.mrb[0].mxu0 %v75
    %v3659 = vpop.f32.mrb[0].mxu0
    %v3660 = vadd.f32 0.0, %v3659
    %v3661 = vpop.f32.mrb[0].mxu0
    %3662 = vmatprep.mubr.f32.mxu0 0.0
    %3663 = vmatmul.mubr.f32.gmra.mrb[0].mxu0 %v78
    %v3664 = vpop.f32.mrb[0].mxu0
    %v3665 = vadd.f32 0.0, %v3664
    %v3666 = vpop.f32.mrb[0].mxu0
    %3667 = vdwg.mxu0
    %3668 = vmatprep.subr.mxu0 0.0
    %3669 = vmatpush1.msra.mxu0 %v48
    %3670 = vmatprep.subr.mxu0 0.0
    %3671 = vmatpush1.msra.mxu0 %v49
    %3672 = vmatprep.subr.mxu0 0.0
    %3673 = vmatpush1.msra.mxu0 %v50
    %3674 = vmatprep.subr.mxu0 0.0
    %3675 = vmatpush1.msra.mxu0 %v51
    %3676 = vmatprep.subr.mxu0 0.0
    %3677 = vmatpush1.msra.mxu0 %v52
    %3678 = vmatprep.subr.mxu0 0.0
    %3679 = vmatpush1.msra.mxu0 %v53
    %3680 = vmatprep.subr.mxu0 0.0
    %3681 = vmatpush1.msra.mxu0 %v54
    %3682 = vmatprep.subr.mxu0 0.0
    %3683 = vmatpush1.msra.mxu0 %v55
    %3684 = vmatprep.subr.mxu0 0.0
    %3685 = vmatpush1.msra.mxu0 %v56
    %3686 = vmatprep.subr.mxu0 0.0
    %3687 = vmatpush1.msra.mxu0 %v57
    %3688 = vmatprep.subr.mxu0 0.0
    %3689 = vmatpush1.msra.mxu0 %v58
    %3690 = vmatprep.subr.mxu0 0.0
    %3691 = vmatpush1.msra.mxu0 %v59
    %3692 = vmatprep.subr.mxu0 0.0
    %3693 = vmatpush1.msra.mxu0 %v60
    %3694 = vmatprep.subr.mxu0 0.0
    %3695 = vmatpush1.msra.mxu0 %v61
    %3696 = vmatprep.subr.mxu0 0.0
    %3697 = vmatpush1.msra.mxu0 %v62
    %3698 = vmatprep.subr.mxu0 0.0
    %3699 = vmatpush1.msra.mxu0 %v63
    %3700 = vmatprep.subr.mxu0 0.0
    %3701 = vmatpush1.msra.mxu0 0.0
    %3702 = vmatprep.subr.mxu0 0.0
    %3703 = vmatpush1.msra.mxu0 0.0
    %3704 = vmatprep.subr.mxu0 0.0
    %3705 = vmatpush1.msra.mxu0 0.0
    %3706 = vmatprep.subr.mxu0 0.0
    %3707 = vmatpush1.msra.mxu0 0.0
    %3708 = vmatprep.subr.mxu0 0.0
    %3709 = vmatpush1.msra.mxu0 0.0
    %3710 = vmatprep.subr.mxu0 0.0
    %3711 = vmatpush1.msra.mxu0 0.0
    %3712 = vmatprep.subr.mxu0 0.0
    %3713 = vmatpush1.msra.mxu0 0.0
    %3714 = vmatprep.subr.mxu0 0.0
    %3715 = vmatpush1.msra.mxu0 0.0
    %3716 = vmatprep.subr.mxu0 0.0
    %3717 = vmatpush1.msra.mxu0 0.0
    %3718 = vmatprep.subr.mxu0 0.0
    %3719 = vmatpush1.msra.mxu0 0.0
    %3720 = vmatprep.subr.mxu0 0.0
    %3721 = vmatpush1.msra.mxu0 0.0
    %3722 = vmatprep.subr.mxu0 0.0
    %3723 = vmatpush1.msra.mxu0 0.0
    %3724 = vmatprep.subr.mxu0 0.0
    %3725 = vmatpush1.msra.mxu0 0.0
    %3726 = vmatprep.subr.mxu0 0.0
    %3727 = vmatpush1.msra.mxu0 0.0
    %3728 = vmatprep.subr.mxu0 0.0
    %3729 = vmatpush1.msra.mxu0 0.0
    %3730 = vmatprep.subr.mxu0 0.0
    %3731 = vmatpush1.msra.mxu0 0.0
    %3732 = vmatprep.mubr.f32.mxu0 0.0
    %3733 = vmatmul.mubr.f32.gmra.mrb[0].mxu0 %v3660
    %v3734 = vpop.f32.mrb[0].mxu0
    %v3735 = vadd.f32 0.0, %v3734
    %v3736 = vpop.f32.mrb[0].mxu0
    %3737 = vmatprep.mubr.f32.mxu0 0.0
    %3738 = vmatmul.mubr.f32.gmra.mrb[0].mxu0 %v3665
    %v3739 = vpop.f32.mrb[0].mxu0
    %v3740 = vadd.f32 0.0, %v3739
    %v3741 = vpop.f32.mrb[0].mxu0
    %3742 = vdwg.mxu0
    %v3743 = vmul.f32 %v3428, %v3428
    %v3744 = vmul.f32 %v3429, %v3429
    %v3745 = vmul.f32 %v3430, %v3430
    %v3746 = vmul.f32 %v3431, %v3431
    %v3748 = vsel %vm80, %v3746, 0
    %3750 = vmatprep.subr.mxu0 0.0
    %3751 = vmatpush1.msra.mxu0 %v3743
    %3752 = vmatprep.subr.mxu0 0.0
    %3753 = vmatpush1.msra.mxu0 %v3744
    %3754 = vmatprep.subr.mxu0 0.0
    %3755 = vmatpush1.msra.mxu0 %v3745
    %3756 = vmatprep.subr.mxu0 0.0
    %3757 = vmatpush1.msra.mxu0 %v3748
    %3758 = vmatprep.subr.mxu0 0.0
    %3759 = vmatpush1.msra.mxu0 0.0
    %3760 = vmatprep.subr.mxu0 0.0
    %3761 = vmatpush1.msra.mxu0 0.0
    %3762 = vmatprep.subr.mxu0 0.0
    %3763 = vmatpush1.msra.mxu0 0.0
    %3764 = vmatprep.subr.mxu0 0.0
    %3765 = vmatpush1.msra.mxu0 0.0
    %3766 = vmatprep.subr.mxu0 0.0
    %3767 = vmatpush1.msra.mxu0 0.0
    %3768 = vmatprep.subr.mxu0 0.0
    %3769 = vmatpush1.msra.mxu0 0.0
    %3770 = vmatprep.subr.mxu0 0.0
    %3771 = vmatpush1.msra.mxu0 0.0
    %3772 = vmatprep.subr.mxu0 0.0
    %3773 = vmatpush1.msra.mxu0 0.0
    %3774 = vmatprep.subr.mxu0 0.0
    %3775 = vmatpush1.msra.mxu0 0.0
    %3776 = vmatprep.subr.mxu0 0.0
    %3777 = vmatpush1.msra.mxu0 0.0
    %3778 = vmatprep.subr.mxu0 0.0
    %3779 = vmatpush1.msra.mxu0 0.0
    %3780 = vmatprep.subr.mxu0 0.0
    %3781 = vmatpush1.msra.mxu0 0.0
    %3782 = vmatprep.subr.mxu0 0.0
    %3783 = vmatpush1.msra.mxu0 0.0
    %3784 = vmatprep.subr.mxu0 0.0
    %3785 = vmatpush1.msra.mxu0 0.0
    %3786 = vmatprep.subr.mxu0 0.0
    %3787 = vmatpush1.msra.mxu0 0.0
    %3788 = vmatprep.subr.mxu0 0.0
    %3789 = vmatpush1.msra.mxu0 0.0
    %3790 = vmatprep.subr.mxu0 0.0
    %3791 = vmatpush1.msra.mxu0 0.0
    %3792 = vmatprep.subr.mxu0 0.0
    %3793 = vmatpush1.msra.mxu0 0.0
    %3794 = vmatprep.subr.mxu0 0.0
    %3795 = vmatpush1.msra.mxu0 0.0
    %3796 = vmatprep.subr.mxu0 0.0
    %3797 = vmatpush1.msra.mxu0 0.0
    %3798 = vmatprep.subr.mxu0 0.0
    %3799 = vmatpush1.msra.mxu0 0.0
    %3800 = vmatprep.subr.mxu0 0.0
    %3801 = vmatpush1.msra.mxu0 0.0
    %3802 = vmatprep.subr.mxu0 0.0
    %3803 = vmatpush1.msra.mxu0 0.0
    %3804 = vmatprep.subr.mxu0 0.0
    %3805 = vmatpush1.msra.mxu0 0.0
    %3806 = vmatprep.subr.mxu0 0.0
    %3807 = vmatpush1.msra.mxu0 0.0
    %3808 = vmatprep.subr.mxu0 0.0
    %3809 = vmatpush1.msra.mxu0 0.0
    %3810 = vmatprep.subr.mxu0 0.0
    %3811 = vmatpush1.msra.mxu0 0.0
    %3812 = vmatprep.subr.mxu0 0.0
    %3813 = vmatpush1.msra.mxu0 0.0
    %3814 = vmatprep.mubr.f32.mxu0 0.0
    %3815 = vmatmul.mubr.f32.gmra.mrb[0].mxu0 %v75
    %v3816 = vpop.f32.mrb[0].mxu0
    %v3817 = vadd.f32 0.0, %v3816
    %v3818 = vpop.f32.mrb[0].mxu0
    %3819 = vmatprep.mubr.f32.mxu0 0.0
    %3820 = vmatmul.mubr.f32.gmra.mrb[0].mxu0 %v78
    %v3821 = vpop.f32.mrb[0].mxu0
    %v3822 = vadd.f32 0.0, %v3821
    %v3823 = vpop.f32.mrb[0].mxu0
    %3824 = vdwg.mxu0
    %3825 = vmatprep.subr.mxu0 0.0
    %3826 = vmatpush1.msra.mxu0 %v48
    %3827 = vmatprep.subr.mxu0 0.0
    %3828 = vmatpush1.msra.mxu0 %v49
    %3829 = vmatprep.subr.mxu0 0.0
    %3830 = vmatpush1.msra.mxu0 %v50
    %3831 = vmatprep.subr.mxu0 0.0
    %3832 = vmatpush1.msra.mxu0 %v51
    %3833 = vmatprep.subr.mxu0 0.0
    %3834 = vmatpush1.msra.mxu0 %v52
    %3835 = vmatprep.subr.mxu0 0.0
    %3836 = vmatpush1.msra.mxu0 %v53
    %3837 = vmatprep.subr.mxu0 0.0
    %3838 = vmatpush1.msra.mxu0 %v54
    %3839 = vmatprep.subr.mxu0 0.0
    %3840 = vmatpush1.msra.mxu0 %v55
    %3841 = vmatprep.subr.mxu0 0.0
    %3842 = vmatpush1.msra.mxu0 %v56
    %3843 = vmatprep.subr.mxu0 0.0
    %3844 = vmatpush1.msra.mxu0 %v57
    %3845 = vmatprep.subr.mxu0 0.0
    %3846 = vmatpush1.msra.mxu0 %v58
    %3847 = vmatprep.subr.mxu0 0.0
    %3848 = vmatpush1.msra.mxu0 %v59
    %3849 = vmatprep.subr.mxu0 0.0
    %3850 = vmatpush1.msra.mxu0 %v60
    %3851 = vmatprep.subr.mxu0 0.0
    %3852 = vmatpush1.msra.mxu0 %v61
    %3853 = vmatprep.subr.mxu0 0.0
    %3854 = vmatpush1.msra.mxu0 %v62
    %3855 = vmatprep.subr.mxu0 0.0
    %3856 = vmatpush1.msra.mxu0 %v63
    %3857 = vmatprep.subr.mxu0 0.0
    %3858 = vmatpush1.msra.mxu0 0.0
    %3859 = vmatprep.subr.mxu0 0.0
    %3860 = vmatpush1.msra.mxu0 0.0
    %3861 = vmatprep.subr.mxu0 0.0
    %3862 = vmatpush1.msra.mxu0 0.0
    %3863 = vmatprep.subr.mxu0 0.0
    %3864 = vmatpush1.msra.mxu0 0.0
    %3865 = vmatprep.subr.mxu0 0.0
    %3866 = vmatpush1.msra.mxu0 0.0
    %3867 = vmatprep.subr.mxu0 0.0
    %3868 = vmatpush1.msra.mxu0 0.0
    %3869 = vmatprep.subr.mxu0 0.0
    %3870 = vmatpush1.msra.mxu0 0.0
    %3871 = vmatprep.subr.mxu0 0.0
    %3872 = vmatpush1.msra.mxu0 0.0
    %3873 = vmatprep.subr.mxu0 0.0
    %3874 = vmatpush1.msra.mxu0 0.0
    %3875 = vmatprep.subr.mxu0 0.0
    %3876 = vmatpush1.msra.mxu0 0.0
    %3877 = vmatprep.subr.mxu0 0.0
    %3878 = vmatpush1.msra.mxu0 0.0
    %3879 = vmatprep.subr.mxu0 0.0
    %3880 = vmatpush1.msra.mxu0 0.0
    %3881 = vmatprep.subr.mxu0 0.0
    %3882 = vmatpush1.msra.mxu0 0.0
    %3883 = vmatprep.subr.mxu0 0.0
    %3884 = vmatpush1.msra.mxu0 0.0
    %3885 = vmatprep.subr.mxu0 0.0
    %3886 = vmatpush1.msra.mxu0 0.0
    %3887 = vmatprep.subr.mxu0 0.0
    %3888 = vmatpush1.msra.mxu0 0.0
    %3889 = vmatprep.mubr.f32.mxu0 0.0
    %3890 = vmatmul.mubr.f32.gmra.mrb[0].mxu0 %v3817
    %v3891 = vpop.f32.mrb[0].mxu0
    %v3892 = vadd.f32 0.0, %v3891
    %v3893 = vpop.f32.mrb[0].mxu0
    %3894 = vmatprep.mubr.f32.mxu0 0.0
    %3895 = vmatmul.mubr.f32.gmra.mrb[0].mxu0 %v3822
    %v3896 = vpop.f32.mrb[0].mxu0
    %v3897 = vadd.f32 0.0, %v3896
    %v3898 = vpop.f32.mrb[0].mxu0
    %3899 = vdwg.mxu0
    %v3900 = vmul.f32 %v3433, %v3433
    %v3901 = vmul.f32 %v3434, %v3434
    %v3902 = vmul.f32 %v3435, %v3435
    %v3903 = vmul.f32 %v3436, %v3436
    %v3905 = vsel %vm80, %v3903, 0
    %3907 = vmatprep.subr.mxu0 0.0
    %3908 = vmatpush1.msra.mxu0 %v3900
    %3909 = vmatprep.subr.mxu0 0.0
    %3910 = vmatpush1.msra.mxu0 %v3901
    %3911 = vmatprep.subr.mxu0 0.0
    %3912 = vmatpush1.msra.mxu0 %v3902
    %3913 = vmatprep.subr.mxu0 0.0
    %3914 = vmatpush1.msra.mxu0 %v3905
    %3915 = vmatprep.subr.mxu0 0.0
    %3916 = vmatpush1.msra.mxu0 0.0
    %3917 = vmatprep.subr.mxu0 0.0
    %3918 = vmatpush1.msra.mxu0 0.0
    %3919 = vmatprep.subr.mxu0 0.0
    %3920 = vmatpush1.msra.mxu0 0.0
    %3921 = vmatprep.subr.mxu0 0.0
    %3922 = vmatpush1.msra.mxu0 0.0
    %3923 = vmatprep.subr.mxu0 0.0
    %3924 = vmatpush1.msra.mxu0 0.0
    %3925 = vmatprep.subr.mxu0 0.0
    %3926 = vmatpush1.msra.mxu0 0.0
    %3927 = vmatprep.subr.mxu0 0.0
    %3928 = vmatpush1.msra.mxu0 0.0
    %3929 = vmatprep.subr.mxu0 0.0
    %3930 = vmatpush1.msra.mxu0 0.0
    %3931 = vmatprep.subr.mxu0 0.0
    %3932 = vmatpush1.msra.mxu0 0.0
    %3933 = vmatprep.subr.mxu0 0.0
    %3934 = vmatpush1.msra.mxu0 0.0
    %3935 = vmatprep.subr.mxu0 0.0
    %3936 = vmatpush1.msra.mxu0 0.0
    %3937 = vmatprep.subr.mxu0 0.0
    %3938 = vmatpush1.msra.mxu0 0.0
    %3939 = vmatprep.subr.mxu0 0.0
    %3940 = vmatpush1.msra.mxu0 0.0
    %3941 = vmatprep.subr.mxu0 0.0
    %3942 = vmatpush1.msra.mxu0 0.0
    %3943 = vmatprep.subr.mxu0 0.0
    %3944 = vmatpush1.msra.mxu0 0.0
    %3945 = vmatprep.subr.mxu0 0.0
    %3946 = vmatpush1.msra.mxu0 0.0
    %3947 = vmatprep.subr.mxu0 0.0
    %3948 = vmatpush1.msra.mxu0 0.0
    %3949 = vmatprep.subr.mxu0 0.0
    %3950 = vmatpush1.msra.mxu0 0.0
    %3951 = vmatprep.subr.mxu0 0.0
    %3952 = vmatpush1.msra.mxu0 0.0
    %3953 = vmatprep.subr.mxu0 0.0
    %3954 = vmatpush1.msra.mxu0 0.0
    %3955 = vmatprep.subr.mxu0 0.0
    %3956 = vmatpush1.msra.mxu0 0.0
    %3957 = vmatprep.subr.mxu0 0.0
    %3958 = vmatpush1.msra.mxu0 0.0
    %3959 = vmatprep.subr.mxu0 0.0
    %3960 = vmatpush1.msra.mxu0 0.0
    %3961 = vmatprep.subr.mxu0 0.0
    %3962 = vmatpush1.msra.mxu0 0.0
    %3963 = vmatprep.subr.mxu0 0.0
    %3964 = vmatpush1.msra.mxu0 0.0
    %3965 = vmatprep.subr.mxu0 0.0
    %3966 = vmatpush1.msra.mxu0 0.0
    %3967 = vmatprep.subr.mxu0 0.0
    %3968 = vmatpush1.msra.mxu0 0.0
    %3969 = vmatprep.subr.mxu0 0.0
    %3970 = vmatpush1.msra.mxu0 0.0
    %3971 = vmatprep.mubr.f32.mxu0 0.0
    %3972 = vmatmul.mubr.f32.gmra.mrb[0].mxu0 %v75
    %v3973 = vpop.f32.mrb[0].mxu0
    %v3974 = vadd.f32 0.0, %v3973
    %v3975 = vpop.f32.mrb[0].mxu0
    %3976 = vmatprep.mubr.f32.mxu0 0.0
    %3977 = vmatmul.mubr.f32.gmra.mrb[0].mxu0 %v78
    %v3978 = vpop.f32.mrb[0].mxu0
    %v3979 = vadd.f32 0.0, %v3978
    %v3980 = vpop.f32.mrb[0].mxu0
    %3981 = vdwg.mxu0
    %3982 = vmatprep.subr.mxu0 0.0
    %3983 = vmatpush1.msra.mxu0 %v48
    %3984 = vmatprep.subr.mxu0 0.0
    %3985 = vmatpush1.msra.mxu0 %v49
    %3986 = vmatprep.subr.mxu0 0.0
    %3987 = vmatpush1.msra.mxu0 %v50
    %3988 = vmatprep.subr.mxu0 0.0
    %3989 = vmatpush1.msra.mxu0 %v51
    %3990 = vmatprep.subr.mxu0 0.0
    %3991 = vmatpush1.msra.mxu0 %v52
    %3992 = vmatprep.subr.mxu0 0.0
    %3993 = vmatpush1.msra.mxu0 %v53
    %3994 = vmatprep.subr.mxu0 0.0
    %3995 = vmatpush1.msra.mxu0 %v54
    %3996 = vmatprep.subr.mxu0 0.0
    %3997 = vmatpush1.msra.mxu0 %v55
    %3998 = vmatprep.subr.mxu0 0.0
    %3999 = vmatpush1.msra.mxu0 %v56
    %4000 = vmatprep.subr.mxu0 0.0
    %4001 = vmatpush1.msra.mxu0 %v57
    %4002 = vmatprep.subr.mxu0 0.0
    %4003 = vmatpush1.msra.mxu0 %v58
    %4004 = vmatprep.subr.mxu0 0.0
    %4005 = vmatpush1.msra.mxu0 %v59
    %4006 = vmatprep.subr.mxu0 0.0
    %4007 = vmatpush1.msra.mxu0 %v60
    %4008 = vmatprep.subr.mxu0 0.0
    %4009 = vmatpush1.msra.mxu0 %v61
    %4010 = vmatprep.subr.mxu0 0.0
    %4011 = vmatpush1.msra.mxu0 %v62
    %4012 = vmatprep.subr.mxu0 0.0
    %4013 = vmatpush1.msra.mxu0 %v63
    %4014 = vmatprep.subr.mxu0 0.0
    %4015 = vmatpush1.msra.mxu0 0.0
    %4016 = vmatprep.subr.mxu0 0.0
    %4017 = vmatpush1.msra.mxu0 0.0
    %4018 = vmatprep.subr.mxu0 0.0
    %4019 = vmatpush1.msra.mxu0 0.0
    %4020 = vmatprep.subr.mxu0 0.0
    %4021 = vmatpush1.msra.mxu0 0.0
    %4022 = vmatprep.subr.mxu0 0.0
    %4023 = vmatpush1.msra.mxu0 0.0
    %4024 = vmatprep.subr.mxu0 0.0
    %4025 = vmatpush1.msra.mxu0 0.0
    %4026 = vmatprep.subr.mxu0 0.0
    %4027 = vmatpush1.msra.mxu0 0.0
    %4028 = vmatprep.subr.mxu0 0.0
    %4029 = vmatpush1.msra.mxu0 0.0
    %4030 = vmatprep.subr.mxu0 0.0
    %4031 = vmatpush1.msra.mxu0 0.0
    %4032 = vmatprep.subr.mxu0 0.0
    %4033 = vmatpush1.msra.mxu0 0.0
    %4034 = vmatprep.subr.mxu0 0.0
    %4035 = vmatpush1.msra.mxu0 0.0
    %4036 = vmatprep.subr.mxu0 0.0
    %4037 = vmatpush1.msra.mxu0 0.0
    %4038 = vmatprep.subr.mxu0 0.0
    %4039 = vmatpush1.msra.mxu0 0.0
    %4040 = vmatprep.subr.mxu0 0.0
    %4041 = vmatpush1.msra.mxu0 0.0
    %4042 = vmatprep.subr.mxu0 0.0
    %4043 = vmatpush1.msra.mxu0 0.0
    %4044 = vmatprep.subr.mxu0 0.0
    %4045 = vmatpush1.msra.mxu0 0.0
    %4046 = vmatprep.mubr.f32.mxu0 0.0
    %4047 = vmatmul.mubr.f32.gmra.mrb[0].mxu0 %v3974
    %v4048 = vpop.f32.mrb[0].mxu0
    %v4049 = vadd.f32 0.0, %v4048
    %v4050 = vpop.f32.mrb[0].mxu0
    %4051 = vmatprep.mubr.f32.mxu0 0.0
    %4052 = vmatmul.mubr.f32.gmra.mrb[0].mxu0 %v3979
    %v4053 = vpop.f32.mrb[0].mxu0
    %v4054 = vadd.f32 0.0, %v4053
    %v4055 = vpop.f32.mrb[0].mxu0
    %4056 = vdwg.mxu0
    %v4057 = vmul.f32 %v3428, %v3433
    %v4058 = vmul.f32 %v3429, %v3434
    %v4059 = vmul.f32 %v3430, %v3435
    %v4060 = vmul.f32 %v3431, %v3436
    %v4062 = vsel %vm80, %v4060, 0
    %4064 = vmatprep.subr.mxu0 0.0
    %4065 = vmatpush1.msra.mxu0 %v4057
    %4066 = vmatprep.subr.mxu0 0.0
    %4067 = vmatpush1.msra.mxu0 %v4058
    %4068 = vmatprep.subr.mxu0 0.0
    %4069 = vmatpush1.msra.mxu0 %v4059
    %4070 = vmatprep.subr.mxu0 0.0
    %4071 = vmatpush1.msra.mxu0 %v4062
    %4072 = vmatprep.subr.mxu0 0.0
    %4073 = vmatpush1.msra.mxu0 0.0
    %4074 = vmatprep.subr.mxu0 0.0
    %4075 = vmatpush1.msra.mxu0 0.0
    %4076 = vmatprep.subr.mxu0 0.0
    %4077 = vmatpush1.msra.mxu0 0.0
    %4078 = vmatprep.subr.mxu0 0.0
    %4079 = vmatpush1.msra.mxu0 0.0
    %4080 = vmatprep.subr.mxu0 0.0
    %4081 = vmatpush1.msra.mxu0 0.0
    %4082 = vmatprep.subr.mxu0 0.0
    %4083 = vmatpush1.msra.mxu0 0.0
    %4084 = vmatprep.subr.mxu0 0.0
    %4085 = vmatpush1.msra.mxu0 0.0
    %4086 = vmatprep.subr.mxu0 0.0
    %4087 = vmatpush1.msra.mxu0 0.0
    %4088 = vmatprep.subr.mxu0 0.0
    %4089 = vmatpush1.msra.mxu0 0.0
    %4090 = vmatprep.subr.mxu0 0.0
    %4091 = vmatpush1.msra.mxu0 0.0
    %4092 = vmatprep.subr.mxu0 0.0
    %4093 = vmatpush1.msra.mxu0 0.0
    %4094 = vmatprep.subr.mxu0 0.0
    %4095 = vmatpush1.msra.mxu0 0.0
    %4096 = vmatprep.subr.mxu0 0.0
    %4097 = vmatpush1.msra.mxu0 0.0
    %4098 = vmatprep.subr.mxu0 0.0
    %4099 = vmatpush1.msra.mxu0 0.0
    %4100 = vmatprep.subr.mxu0 0.0
    %4101 = vmatpush1.msra.mxu0 0.0
    %4102 = vmatprep.subr.mxu0 0.0
    %4103 = vmatpush1.msra.mxu0 0.0
    %4104 = vmatprep.subr.mxu0 0.0
    %4105 = vmatpush1.msra.mxu0 0.0
    %4106 = vmatprep.subr.mxu0 0.0
    %4107 = vmatpush1.msra.mxu0 0.0
    %4108 = vmatprep.subr.mxu0 0.0
    %4109 = vmatpush1.msra.mxu0 0.0
    %4110 = vmatprep.subr.mxu0 0.0
    %4111 = vmatpush1.msra.mxu0 0.0
    %4112 = vmatprep.subr.mxu0 0.0
    %4113 = vmatpush1.msra.mxu0 0.0
    %4114 = vmatprep.subr.mxu0 0.0
    %4115 = vmatpush1.msra.mxu0 0.0
    %4116 = vmatprep.subr.mxu0 0.0
    %4117 = vmatpush1.msra.mxu0 0.0
    %4118 = vmatprep.subr.mxu0 0.0
    %4119 = vmatpush1.msra.mxu0 0.0
    %4120 = vmatprep.subr.mxu0 0.0
    %4121 = vmatpush1.msra.mxu0 0.0
    %4122 = vmatprep.subr.mxu0 0.0
    %4123 = vmatpush1.msra.mxu0 0.0
    %4124 = vmatprep.subr.mxu0 0.0
    %4125 = vmatpush1.msra.mxu0 0.0
    %4126 = vmatprep.subr.mxu0 0.0
    %4127 = vmatpush1.msra.mxu0 0.0
    %4128 = vmatprep.mubr.f32.mxu0 0.0
    %4129 = vmatmul.mubr.f32.gmra.mrb[0].mxu0 %v75
    %v4130 = vpop.f32.mrb[0].mxu0
    %v4131 = vadd.f32 0.0, %v4130
    %v4132 = vpop.f32.mrb[0].mxu0
    %4133 = vmatprep.mubr.f32.mxu0 0.0
    %4134 = vmatmul.mubr.f32.gmra.mrb[0].mxu0 %v78
    %v4135 = vpop.f32.mrb[0].mxu0
    %v4136 = vadd.f32 0.0, %v4135
    %v4137 = vpop.f32.mrb[0].mxu0
    %4138 = vdwg.mxu0
    %4139 = vmatprep.subr.mxu0 0.0
    %4140 = vmatpush1.msra.mxu0 %v48
    %4141 = vmatprep.subr.mxu0 0.0
    %4142 = vmatpush1.msra.mxu0 %v49
    %4143 = vmatprep.subr.mxu0 0.0
    %4144 = vmatpush1.msra.mxu0 %v50
    %4145 = vmatprep.subr.mxu0 0.0
    %4146 = vmatpush1.msra.mxu0 %v51
    %4147 = vmatprep.subr.mxu0 0.0
    %4148 = vmatpush1.msra.mxu0 %v52
    %4149 = vmatprep.subr.mxu0 0.0
    %4150 = vmatpush1.msra.mxu0 %v53
    %4151 = vmatprep.subr.mxu0 0.0
    %4152 = vmatpush1.msra.mxu0 %v54
    %4153 = vmatprep.subr.mxu0 0.0
    %4154 = vmatpush1.msra.mxu0 %v55
    %4155 = vmatprep.subr.mxu0 0.0
    %4156 = vmatpush1.msra.mxu0 %v56
    %4157 = vmatprep.subr.mxu0 0.0
    %4158 = vmatpush1.msra.mxu0 %v57
    %4159 = vmatprep.subr.mxu0 0.0
    %4160 = vmatpush1.msra.mxu0 %v58
    %4161 = vmatprep.subr.mxu0 0.0
    %4162 = vmatpush1.msra.mxu0 %v59
    %4163 = vmatprep.subr.mxu0 0.0
    %4164 = vmatpush1.msra.mxu0 %v60
    %4165 = vmatprep.subr.mxu0 0.0
    %4166 = vmatpush1.msra.mxu0 %v61
    %4167 = vmatprep.subr.mxu0 0.0
    %4168 = vmatpush1.msra.mxu0 %v62
    %4169 = vmatprep.subr.mxu0 0.0
    %4170 = vmatpush1.msra.mxu0 %v63
    %4171 = vmatprep.subr.mxu0 0.0
    %4172 = vmatpush1.msra.mxu0 0.0
    %4173 = vmatprep.subr.mxu0 0.0
    %4174 = vmatpush1.msra.mxu0 0.0
    %4175 = vmatprep.subr.mxu0 0.0
    %4176 = vmatpush1.msra.mxu0 0.0
    %4177 = vmatprep.subr.mxu0 0.0
    %4178 = vmatpush1.msra.mxu0 0.0
    %4179 = vmatprep.subr.mxu0 0.0
    %4180 = vmatpush1.msra.mxu0 0.0
    %4181 = vmatprep.subr.mxu0 0.0
    %4182 = vmatpush1.msra.mxu0 0.0
    %4183 = vmatprep.subr.mxu0 0.0
    %4184 = vmatpush1.msra.mxu0 0.0
    %4185 = vmatprep.subr.mxu0 0.0
    %4186 = vmatpush1.msra.mxu0 0.0
    %4187 = vmatprep.subr.mxu0 0.0
    %4188 = vmatpush1.msra.mxu0 0.0
    %4189 = vmatprep.subr.mxu0 0.0
    %4190 = vmatpush1.msra.mxu0 0.0
    %4191 = vmatprep.subr.mxu0 0.0
    %4192 = vmatpush1.msra.mxu0 0.0
    %4193 = vmatprep.subr.mxu0 0.0
    %4194 = vmatpush1.msra.mxu0 0.0
    %4195 = vmatprep.subr.mxu0 0.0
    %4196 = vmatpush1.msra.mxu0 0.0
    %4197 = vmatprep.subr.mxu0 0.0
    %4198 = vmatpush1.msra.mxu0 0.0
    %4199 = vmatprep.subr.mxu0 0.0
    %4200 = vmatpush1.msra.mxu0 0.0
    %4201 = vmatprep.subr.mxu0 0.0
    %4202 = vmatpush1.msra.mxu0 0.0
    %4203 = vmatprep.mubr.f32.mxu0 0.0
    %4204 = vmatmul.mubr.f32.gmra.mrb[0].mxu0 %v4131
    %v4205 = vpop.f32.mrb[0].mxu0
    %v4206 = vadd.f32 0.0, %v4205
    %v4207 = vpop.f32.mrb[0].mxu0
    %4208 = vmatprep.mubr.f32.mxu0 0.0
    %4209 = vmatmul.mubr.f32.gmra.mrb[0].mxu0 %v4136
    %v4210 = vpop.f32.mrb[0].mxu0
    %v4211 = vadd.f32 0.0, %v4210
    %v4212 = vpop.f32.mrb[0].mxu0
    %4213 = vdwg.mxu0
    %v4214 = vmul.f32 %v3582, %v3582
    %v4215 = vmul.f32 %v3587, %v3587
    %v4216 = vmul.f32 %v3735, %v3735
    %v4217 = vmul.f32 %v3740, %v3740
    %v4218 = vmul.f32 %v3582, %v3735
    %v4219 = vmul.f32 %v3587, %v3740
    %v4220 = vsub.f32 %v3892, %v4214
    %v4221 = vsub.f32 %v3897, %v4215
    %v4222 = vsub.f32 %v4049, %v4216
    %v4223 = vsub.f32 %v4054, %v4217
    %v4224 = vsub.f32 %v4206, %v4218
    %v4225 = vsub.f32 %v4211, %v4219
    %v4226 = vmul.f32 %v4218, 2.0
    %v4227 = vmul.f32 %v4219, 2.0
    %v4228 = vadd.f32 %v4226, 6.5025
    %v4229 = vadd.f32 %v4227, 6.5025
    %v4230 = vmul.f32 %v4224, 2.0
    %v4231 = vmul.f32 %v4225, 2.0
    %v4232 = vadd.f32 %v4230, 58.5225
    %v4233 = vadd.f32 %v4231, 58.5225
    %v4234 = vmul.f32 %v4228, %v4232
    %v4235 = vmul.f32 %v4229, %v4233
    %v4236 = vadd.f32 %v4214, %v4216
    %v4237 = vadd.f32 %v4215, %v4217
    %v4238 = vadd.f32 %v4236, 6.5025
    %v4239 = vadd.f32 %v4237, 6.5025
    %v4240 = vadd.f32 %v4220, %v4222
    %v4241 = vadd.f32 %v4221, %v4223
    %v4242 = vadd.f32 %v4240, 58.5225
    %v4243 = vadd.f32 %v4241, 58.5225
    %v4244 = vmul.f32 %v4238, %v4242
    %v4245 = vmul.f32 %v4239, %v4243
    %v4246 = vrcp.pop %v4244
    %v4247 = vrcp.pop %v4245
    %v4248 = vmul.f32 %v4234, %v4246
    %v4249 = vmul.f32 %v4235, %v4247
    %v4250 = vsel %vm894, %v4248, 0.0
    %v4251 = vsel %vm894, %v4249, 0.0
    %v4252 = vadd.f32 %v4250, %v4251
    %4253 = vadd.xlane.f32.xlu0 %v4252
    %v4254 = vpop.xlane.xlu0 %4253
    %v4255 = vrot.slane %v4254, 4
    %v4256 = vadd.f32 %v4254, %v4255
    %v4257 = vrot.slane %v4256, 2
    %v4258 = vadd.f32 %v4256, %v4257
    %v4259 = vrot.slane %v4258, 1
    %v4260 = vadd.f32 %v4258, %v4259
    %s4261 = vtos %v4260
    %s4262 = sadd.s32 %s64, 4
    %p4263 = scmp.lt.s32.totalorder %s4262, 6
    %s4264 = scalar_select %p4263, %s4261, 0.0
    %s4265 = sadd.f32 %s3426, %s4264
    %s4266 = scalar_lea.vmem [#allocation2], 160
    %v4267 = vld [vmem:[%s4266] sm:$0xff]
    %v4268 = vld [vmem:[%s4266 + $0x8] sm:$0xff]
    %v4269 = vld [vmem:[%s4266 + $0x10] sm:$0xff]
    %v4270 = vld [vmem:[%s4266 + $0x18] sm:$0x3]
    %s4271 = scalar_lea.vmem [#allocation5], 160
    %v4272 = vld [vmem:[%s4271] sm:$0xff]
    %v4273 = vld [vmem:[%s4271 + $0x8] sm:$0xff]
    %v4274 = vld [vmem:[%s4271 + $0x10] sm:$0xff]
    %v4275 = vld [vmem:[%s4271 + $0x18] sm:$0x3]
    %v4277 = vsel %vm80, %v4270, 0
    %4279 = vmatprep.subr.mxu0 0.0
    %4280 = vmatpush1.msra.mxu0 %v4267
    %4281 = vmatprep.subr.mxu0 0.0
    %4282 = vmatpush1.msra.mxu0 %v4268
    %4283 = vmatprep.subr.mxu0 0.0
    %4284 = vmatpush1.msra.mxu0 %v4269
    %4285 = vmatprep.subr.mxu0 0.0
    %4286 = vmatpush1.msra.mxu0 %v4277
    %4287 = vmatprep.subr.mxu0 0.0
    %4288 = vmatpush1.msra.mxu0 0.0
    %4289 = vmatprep.subr.mxu0 0.0
    %4290 = vmatpush1.msra.mxu0 0.0
    %4291 = vmatprep.subr.mxu0 0.0
    %4292 = vmatpush1.msra.mxu0 0.0
    %4293 = vmatprep.subr.mxu0 0.0
    %4294 = vmatpush1.msra.mxu0 0.0
    %4295 = vmatprep.subr.mxu0 0.0
    %4296 = vmatpush1.msra.mxu0 0.0
    %4297 = vmatprep.subr.mxu0 0.0
    %4298 = vmatpush1.msra.mxu0 0.0
    %4299 = vmatprep.subr.mxu0 0.0
    %4300 = vmatpush1.msra.mxu0 0.0
    %4301 = vmatprep.subr.mxu0 0.0
    %4302 = vmatpush1.msra.mxu0 0.0
    %4303 = vmatprep.subr.mxu0 0.0
    %4304 = vmatpush1.msra.mxu0 0.0
    %4305 = vmatprep.subr.mxu0 0.0
    %4306 = vmatpush1.msra.mxu0 0.0
    %4307 = vmatprep.subr.mxu0 0.0
    %4308 = vmatpush1.msra.mxu0 0.0
    %4309 = vmatprep.subr.mxu0 0.0
    %4310 = vmatpush1.msra.mxu0 0.0
    %4311 = vmatprep.subr.mxu0 0.0
    %4312 = vmatpush1.msra.mxu0 0.0
    %4313 = vmatprep.subr.mxu0 0.0
    %4314 = vmatpush1.msra.mxu0 0.0
    %4315 = vmatprep.subr.mxu0 0.0
    %4316 = vmatpush1.msra.mxu0 0.0
    %4317 = vmatprep.subr.mxu0 0.0
    %4318 = vmatpush1.msra.mxu0 0.0
    %4319 = vmatprep.subr.mxu0 0.0
    %4320 = vmatpush1.msra.mxu0 0.0
    %4321 = vmatprep.subr.mxu0 0.0
    %4322 = vmatpush1.msra.mxu0 0.0
    %4323 = vmatprep.subr.mxu0 0.0
    %4324 = vmatpush1.msra.mxu0 0.0
    %4325 = vmatprep.subr.mxu0 0.0
    %4326 = vmatpush1.msra.mxu0 0.0
    %4327 = vmatprep.subr.mxu0 0.0
    %4328 = vmatpush1.msra.mxu0 0.0
    %4329 = vmatprep.subr.mxu0 0.0
    %4330 = vmatpush1.msra.mxu0 0.0
    %4331 = vmatprep.subr.mxu0 0.0
    %4332 = vmatpush1.msra.mxu0 0.0
    %4333 = vmatprep.subr.mxu0 0.0
    %4334 = vmatpush1.msra.mxu0 0.0
    %4335 = vmatprep.subr.mxu0 0.0
    %4336 = vmatpush1.msra.mxu0 0.0
    %4337 = vmatprep.subr.mxu0 0.0
    %4338 = vmatpush1.msra.mxu0 0.0
    %4339 = vmatprep.subr.mxu0 0.0
    %4340 = vmatpush1.msra.mxu0 0.0
    %4341 = vmatprep.subr.mxu0 0.0
    %4342 = vmatpush1.msra.mxu0 0.0
    %4343 = vmatprep.mubr.f32.mxu0 0.0
    %4344 = vmatmul.mubr.f32.gmra.mrb[0].mxu0 %v75
    %v4345 = vpop.f32.mrb[0].mxu0
    %v4346 = vadd.f32 0.0, %v4345
    %v4347 = vpop.f32.mrb[0].mxu0
    %4348 = vmatprep.mubr.f32.mxu0 0.0
    %4349 = vmatmul.mubr.f32.gmra.mrb[0].mxu0 %v78
    %v4350 = vpop.f32.mrb[0].mxu0
    %v4351 = vadd.f32 0.0, %v4350
    %v4352 = vpop.f32.mrb[0].mxu0
    %4353 = vdwg.mxu0
    %4354 = vmatprep.subr.mxu0 0.0
    %4355 = vmatpush1.msra.mxu0 %v48
    %4356 = vmatprep.subr.mxu0 0.0
    %4357 = vmatpush1.msra.mxu0 %v49
    %4358 = vmatprep.subr.mxu0 0.0
    %4359 = vmatpush1.msra.mxu0 %v50
    %4360 = vmatprep.subr.mxu0 0.0
    %4361 = vmatpush1.msra.mxu0 %v51
    %4362 = vmatprep.subr.mxu0 0.0
    %4363 = vmatpush1.msra.mxu0 %v52
    %4364 = vmatprep.subr.mxu0 0.0
    %4365 = vmatpush1.msra.mxu0 %v53
    %4366 = vmatprep.subr.mxu0 0.0
    %4367 = vmatpush1.msra.mxu0 %v54
    %4368 = vmatprep.subr.mxu0 0.0
    %4369 = vmatpush1.msra.mxu0 %v55
    %4370 = vmatprep.subr.mxu0 0.0
    %4371 = vmatpush1.msra.mxu0 %v56
    %4372 = vmatprep.subr.mxu0 0.0
    %4373 = vmatpush1.msra.mxu0 %v57
    %4374 = vmatprep.subr.mxu0 0.0
    %4375 = vmatpush1.msra.mxu0 %v58
    %4376 = vmatprep.subr.mxu0 0.0
    %4377 = vmatpush1.msra.mxu0 %v59
    %4378 = vmatprep.subr.mxu0 0.0
    %4379 = vmatpush1.msra.mxu0 %v60
    %4380 = vmatprep.subr.mxu0 0.0
    %4381 = vmatpush1.msra.mxu0 %v61
    %4382 = vmatprep.subr.mxu0 0.0
    %4383 = vmatpush1.msra.mxu0 %v62
    %4384 = vmatprep.subr.mxu0 0.0
    %4385 = vmatpush1.msra.mxu0 %v63
    %4386 = vmatprep.subr.mxu0 0.0
    %4387 = vmatpush1.msra.mxu0 0.0
    %4388 = vmatprep.subr.mxu0 0.0
    %4389 = vmatpush1.msra.mxu0 0.0
    %4390 = vmatprep.subr.mxu0 0.0
    %4391 = vmatpush1.msra.mxu0 0.0
    %4392 = vmatprep.subr.mxu0 0.0
    %4393 = vmatpush1.msra.mxu0 0.0
    %4394 = vmatprep.subr.mxu0 0.0
    %4395 = vmatpush1.msra.mxu0 0.0
    %4396 = vmatprep.subr.mxu0 0.0
    %4397 = vmatpush1.msra.mxu0 0.0
    %4398 = vmatprep.subr.mxu0 0.0
    %4399 = vmatpush1.msra.mxu0 0.0
    %4400 = vmatprep.subr.mxu0 0.0
    %4401 = vmatpush1.msra.mxu0 0.0
    %4402 = vmatprep.subr.mxu0 0.0
    %4403 = vmatpush1.msra.mxu0 0.0
    %4404 = vmatprep.subr.mxu0 0.0
    %4405 = vmatpush1.msra.mxu0 0.0
    %4406 = vmatprep.subr.mxu0 0.0
    %4407 = vmatpush1.msra.mxu0 0.0
    %4408 = vmatprep.subr.mxu0 0.0
    %4409 = vmatpush1.msra.mxu0 0.0
    %4410 = vmatprep.subr.mxu0 0.0
    %4411 = vmatpush1.msra.mxu0 0.0
    %4412 = vmatprep.subr.mxu0 0.0
    %4413 = vmatpush1.msra.mxu0 0.0
    %4414 = vmatprep.subr.mxu0 0.0
    %4415 = vmatpush1.msra.mxu0 0.0
    %4416 = vmatprep.subr.mxu0 0.0
    %4417 = vmatpush1.msra.mxu0 0.0
    %4418 = vmatprep.mubr.f32.mxu0 0.0
    %4419 = vmatmul.mubr.f32.gmra.mrb[0].mxu0 %v4346
    %v4420 = vpop.f32.mrb[0].mxu0
    %v4421 = vadd.f32 0.0, %v4420
    %v4422 = vpop.f32.mrb[0].mxu0
    %4423 = vmatprep.mubr.f32.mxu0 0.0
    %4424 = vmatmul.mubr.f32.gmra.mrb[0].mxu0 %v4351
    %v4425 = vpop.f32.mrb[0].mxu0
    %v4426 = vadd.f32 0.0, %v4425
    %v4427 = vpop.f32.mrb[0].mxu0
    %4428 = vdwg.mxu0
    %v4430 = vsel %vm80, %v4275, 0
    %4432 = vmatprep.subr.mxu0 0.0
    %4433 = vmatpush1.msra.mxu0 %v4272
    %4434 = vmatprep.subr.mxu0 0.0
    %4435 = vmatpush1.msra.mxu0 %v4273
    %4436 = vmatprep.subr.mxu0 0.0
    %4437 = vmatpush1.msra.mxu0 %v4274
    %4438 = vmatprep.subr.mxu0 0.0
    %4439 = vmatpush1.msra.mxu0 %v4430
    %4440 = vmatprep.subr.mxu0 0.0
    %4441 = vmatpush1.msra.mxu0 0.0
    %4442 = vmatprep.subr.mxu0 0.0
    %4443 = vmatpush1.msra.mxu0 0.0
    %4444 = vmatprep.subr.mxu0 0.0
    %4445 = vmatpush1.msra.mxu0 0.0
    %4446 = vmatprep.subr.mxu0 0.0
    %4447 = vmatpush1.msra.mxu0 0.0
    %4448 = vmatprep.subr.mxu0 0.0
    %4449 = vmatpush1.msra.mxu0 0.0
    %4450 = vmatprep.subr.mxu0 0.0
    %4451 = vmatpush1.msra.mxu0 0.0
    %4452 = vmatprep.subr.mxu0 0.0
    %4453 = vmatpush1.msra.mxu0 0.0
    %4454 = vmatprep.subr.mxu0 0.0
    %4455 = vmatpush1.msra.mxu0 0.0
    %4456 = vmatprep.subr.mxu0 0.0
    %4457 = vmatpush1.msra.mxu0 0.0
    %4458 = vmatprep.subr.mxu0 0.0
    %4459 = vmatpush1.msra.mxu0 0.0
    %4460 = vmatprep.subr.mxu0 0.0
    %4461 = vmatpush1.msra.mxu0 0.0
    %4462 = vmatprep.subr.mxu0 0.0
    %4463 = vmatpush1.msra.mxu0 0.0
    %4464 = vmatprep.subr.mxu0 0.0
    %4465 = vmatpush1.msra.mxu0 0.0
    %4466 = vmatprep.subr.mxu0 0.0
    %4467 = vmatpush1.msra.mxu0 0.0
    %4468 = vmatprep.subr.mxu0 0.0
    %4469 = vmatpush1.msra.mxu0 0.0
    %4470 = vmatprep.subr.mxu0 0.0
    %4471 = vmatpush1.msra.mxu0 0.0
    %4472 = vmatprep.subr.mxu0 0.0
    %4473 = vmatpush1.msra.mxu0 0.0
    %4474 = vmatprep.subr.mxu0 0.0
    %4475 = vmatpush1.msra.mxu0 0.0
    %4476 = vmatprep.subr.mxu0 0.0
    %4477 = vmatpush1.msra.mxu0 0.0
    %4478 = vmatprep.subr.mxu0 0.0
    %4479 = vmatpush1.msra.mxu0 0.0
    %4480 = vmatprep.subr.mxu0 0.0
    %4481 = vmatpush1.msra.mxu0 0.0
    %4482 = vmatprep.subr.mxu0 0.0
    %4483 = vmatpush1.msra.mxu0 0.0
    %4484 = vmatprep.subr.mxu0 0.0
    %4485 = vmatpush1.msra.mxu0 0.0
    %4486 = vmatprep.subr.mxu0 0.0
    %4487 = vmatpush1.msra.mxu0 0.0
    %4488 = vmatprep.subr.mxu0 0.0
    %4489 = vmatpush1.msra.mxu0 0.0
    %4490 = vmatprep.subr.mxu0 0.0
    %4491 = vmatpush1.msra.mxu0 0.0
    %4492 = vmatprep.subr.mxu0 0.0
    %4493 = vmatpush1.msra.mxu0 0.0
    %4494 = vmatprep.subr.mxu0 0.0
    %4495 = vmatpush1.msra.mxu0 0.0
    %4496 = vmatprep.mubr.f32.mxu0 0.0
    %4497 = vmatmul.mubr.f32.gmra.mrb[0].mxu0 %v75
    %v4498 = vpop.f32.mrb[0].mxu0
    %v4499 = vadd.f32 0.0, %v4498
    %v4500 = vpop.f32.mrb[0].mxu0
    %4501 = vmatprep.mubr.f32.mxu0 0.0
    %4502 = vmatmul.mubr.f32.gmra.mrb[0].mxu0 %v78
    %v4503 = vpop.f32.mrb[0].mxu0
    %v4504 = vadd.f32 0.0, %v4503
    %v4505 = vpop.f32.mrb[0].mxu0
    %4506 = vdwg.mxu0
    %4507 = vmatprep.subr.mxu0 0.0
    %4508 = vmatpush1.msra.mxu0 %v48
    %4509 = vmatprep.subr.mxu0 0.0
    %4510 = vmatpush1.msra.mxu0 %v49
    %4511 = vmatprep.subr.mxu0 0.0
    %4512 = vmatpush1.msra.mxu0 %v50
    %4513 = vmatprep.subr.mxu0 0.0
    %4514 = vmatpush1.msra.mxu0 %v51
    %4515 = vmatprep.subr.mxu0 0.0
    %4516 = vmatpush1.msra.mxu0 %v52
    %4517 = vmatprep.subr.mxu0 0.0
    %4518 = vmatpush1.msra.mxu0 %v53
    %4519 = vmatprep.subr.mxu0 0.0
    %4520 = vmatpush1.msra.mxu0 %v54
    %4521 = vmatprep.subr.mxu0 0.0
    %4522 = vmatpush1.msra.mxu0 %v55
    %4523 = vmatprep.subr.mxu0 0.0
    %4524 = vmatpush1.msra.mxu0 %v56
    %4525 = vmatprep.subr.mxu0 0.0
    %4526 = vmatpush1.msra.mxu0 %v57
    %4527 = vmatprep.subr.mxu0 0.0
    %4528 = vmatpush1.msra.mxu0 %v58
    %4529 = vmatprep.subr.mxu0 0.0
    %4530 = vmatpush1.msra.mxu0 %v59
    %4531 = vmatprep.subr.mxu0 0.0
    %4532 = vmatpush1.msra.mxu0 %v60
    %4533 = vmatprep.subr.mxu0 0.0
    %4534 = vmatpush1.msra.mxu0 %v61
    %4535 = vmatprep.subr.mxu0 0.0
    %4536 = vmatpush1.msra.mxu0 %v62
    %4537 = vmatprep.subr.mxu0 0.0
    %4538 = vmatpush1.msra.mxu0 %v63
    %4539 = vmatprep.subr.mxu0 0.0
    %4540 = vmatpush1.msra.mxu0 0.0
    %4541 = vmatprep.subr.mxu0 0.0
    %4542 = vmatpush1.msra.mxu0 0.0
    %4543 = vmatprep.subr.mxu0 0.0
    %4544 = vmatpush1.msra.mxu0 0.0
    %4545 = vmatprep.subr.mxu0 0.0
    %4546 = vmatpush1.msra.mxu0 0.0
    %4547 = vmatprep.subr.mxu0 0.0
    %4548 = vmatpush1.msra.mxu0 0.0
    %4549 = vmatprep.subr.mxu0 0.0
    %4550 = vmatpush1.msra.mxu0 0.0
    %4551 = vmatprep.subr.mxu0 0.0
    %4552 = vmatpush1.msra.mxu0 0.0
    %4553 = vmatprep.subr.mxu0 0.0
    %4554 = vmatpush1.msra.mxu0 0.0
    %4555 = vmatprep.subr.mxu0 0.0
    %4556 = vmatpush1.msra.mxu0 0.0
    %4557 = vmatprep.subr.mxu0 0.0
    %4558 = vmatpush1.msra.mxu0 0.0
    %4559 = vmatprep.subr.mxu0 0.0
    %4560 = vmatpush1.msra.mxu0 0.0
    %4561 = vmatprep.subr.mxu0 0.0
    %4562 = vmatpush1.msra.mxu0 0.0
    %4563 = vmatprep.subr.mxu0 0.0
    %4564 = vmatpush1.msra.mxu0 0.0
    %4565 = vmatprep.subr.mxu0 0.0
    %4566 = vmatpush1.msra.mxu0 0.0
    %4567 = vmatprep.subr.mxu0 0.0
    %4568 = vmatpush1.msra.mxu0 0.0
    %4569 = vmatprep.subr.mxu0 0.0
    %4570 = vmatpush1.msra.mxu0 0.0
    %4571 = vmatprep.mubr.f32.mxu0 0.0
    %4572 = vmatmul.mubr.f32.gmra.mrb[0].mxu0 %v4499
    %v4573 = vpop.f32.mrb[0].mxu0
    %v4574 = vadd.f32 0.0, %v4573
    %v4575 = vpop.f32.mrb[0].mxu0
    %4576 = vmatprep.mubr.f32.mxu0 0.0
    %4577 = vmatmul.mubr.f32.gmra.mrb[0].mxu0 %v4504
    %v4578 = vpop.f32.mrb[0].mxu0
    %v4579 = vadd.f32 0.0, %v4578
    %v4580 = vpop.f32.mrb[0].mxu0
    %4581 = vdwg.mxu0
    %v4582 = vmul.f32 %v4267, %v4267
    %v4583 = vmul.f32 %v4268, %v4268
    %v4584 = vmul.f32 %v4269, %v4269
    %v4585 = vmul.f32 %v4270, %v4270
    %v4587 = vsel %vm80, %v4585, 0
    %4589 = vmatprep.subr.mxu0 0.0
    %4590 = vmatpush1.msra.mxu0 %v4582
    %4591 = vmatprep.subr.mxu0 0.0
    %4592 = vmatpush1.msra.mxu0 %v4583
    %4593 = vmatprep.subr.mxu0 0.0
    %4594 = vmatpush1.msra.mxu0 %v4584
    %4595 = vmatprep.subr.mxu0 0.0
    %4596 = vmatpush1.msra.mxu0 %v4587
    %4597 = vmatprep.subr.mxu0 0.0
    %4598 = vmatpush1.msra.mxu0 0.0
    %4599 = vmatprep.subr.mxu0 0.0
    %4600 = vmatpush1.msra.mxu0 0.0
    %4601 = vmatprep.subr.mxu0 0.0
    %4602 = vmatpush1.msra.mxu0 0.0
    %4603 = vmatprep.subr.mxu0 0.0
    %4604 = vmatpush1.msra.mxu0 0.0
    %4605 = vmatprep.subr.mxu0 0.0
    %4606 = vmatpush1.msra.mxu0 0.0
    %4607 = vmatprep.subr.mxu0 0.0
    %4608 = vmatpush1.msra.mxu0 0.0
    %4609 = vmatprep.subr.mxu0 0.0
    %4610 = vmatpush1.msra.mxu0 0.0
    %4611 = vmatprep.subr.mxu0 0.0
    %4612 = vmatpush1.msra.mxu0 0.0
    %4613 = vmatprep.subr.mxu0 0.0
    %4614 = vmatpush1.msra.mxu0 0.0
    %4615 = vmatprep.subr.mxu0 0.0
    %4616 = vmatpush1.msra.mxu0 0.0
    %4617 = vmatprep.subr.mxu0 0.0
    %4618 = vmatpush1.msra.mxu0 0.0
    %4619 = vmatprep.subr.mxu0 0.0
    %4620 = vmatpush1.msra.mxu0 0.0
    %4621 = vmatprep.subr.mxu0 0.0
    %4622 = vmatpush1.msra.mxu0 0.0
    %4623 = vmatprep.subr.mxu0 0.0
    %4624 = vmatpush1.msra.mxu0 0.0
    %4625 = vmatprep.subr.mxu0 0.0
    %4626 = vmatpush1.msra.mxu0 0.0
    %4627 = vmatprep.subr.mxu0 0.0
    %4628 = vmatpush1.msra.mxu0 0.0
    %4629 = vmatprep.subr.mxu0 0.0
    %4630 = vmatpush1.msra.mxu0 0.0
    %4631 = vmatprep.subr.mxu0 0.0
    %4632 = vmatpush1.msra.mxu0 0.0
    %4633 = vmatprep.subr.mxu0 0.0
    %4634 = vmatpush1.msra.mxu0 0.0
    %4635 = vmatprep.subr.mxu0 0.0
    %4636 = vmatpush1.msra.mxu0 0.0
    %4637 = vmatprep.subr.mxu0 0.0
    %4638 = vmatpush1.msra.mxu0 0.0
    %4639 = vmatprep.subr.mxu0 0.0
    %4640 = vmatpush1.msra.mxu0 0.0
    %4641 = vmatprep.subr.mxu0 0.0
    %4642 = vmatpush1.msra.mxu0 0.0
    %4643 = vmatprep.subr.mxu0 0.0
    %4644 = vmatpush1.msra.mxu0 0.0
    %4645 = vmatprep.subr.mxu0 0.0
    %4646 = vmatpush1.msra.mxu0 0.0
    %4647 = vmatprep.subr.mxu0 0.0
    %4648 = vmatpush1.msra.mxu0 0.0
    %4649 = vmatprep.subr.mxu0 0.0
    %4650 = vmatpush1.msra.mxu0 0.0
    %4651 = vmatprep.subr.mxu0 0.0
    %4652 = vmatpush1.msra.mxu0 0.0
    %4653 = vmatprep.mubr.f32.mxu0 0.0
    %4654 = vmatmul.mubr.f32.gmra.mrb[0].mxu0 %v75
    %v4655 = vpop.f32.mrb[0].mxu0
    %v4656 = vadd.f32 0.0, %v4655
    %v4657 = vpop.f32.mrb[0].mxu0
    %4658 = vmatprep.mubr.f32.mxu0 0.0
    %4659 = vmatmul.mubr.f32.gmra.mrb[0].mxu0 %v78
    %v4660 = vpop.f32.mrb[0].mxu0
    %v4661 = vadd.f32 0.0, %v4660
    %v4662 = vpop.f32.mrb[0].mxu0
    %4663 = vdwg.mxu0
    %4664 = vmatprep.subr.mxu0 0.0
    %4665 = vmatpush1.msra.mxu0 %v48
    %4666 = vmatprep.subr.mxu0 0.0
    %4667 = vmatpush1.msra.mxu0 %v49
    %4668 = vmatprep.subr.mxu0 0.0
    %4669 = vmatpush1.msra.mxu0 %v50
    %4670 = vmatprep.subr.mxu0 0.0
    %4671 = vmatpush1.msra.mxu0 %v51
    %4672 = vmatprep.subr.mxu0 0.0
    %4673 = vmatpush1.msra.mxu0 %v52
    %4674 = vmatprep.subr.mxu0 0.0
    %4675 = vmatpush1.msra.mxu0 %v53
    %4676 = vmatprep.subr.mxu0 0.0
    %4677 = vmatpush1.msra.mxu0 %v54
    %4678 = vmatprep.subr.mxu0 0.0
    %4679 = vmatpush1.msra.mxu0 %v55
    %4680 = vmatprep.subr.mxu0 0.0
    %4681 = vmatpush1.msra.mxu0 %v56
    %4682 = vmatprep.subr.mxu0 0.0
    %4683 = vmatpush1.msra.mxu0 %v57
    %4684 = vmatprep.subr.mxu0 0.0
    %4685 = vmatpush1.msra.mxu0 %v58
    %4686 = vmatprep.subr.mxu0 0.0
    %4687 = vmatpush1.msra.mxu0 %v59
    %4688 = vmatprep.subr.mxu0 0.0
    %4689 = vmatpush1.msra.mxu0 %v60
    %4690 = vmatprep.subr.mxu0 0.0
    %4691 = vmatpush1.msra.mxu0 %v61
    %4692 = vmatprep.subr.mxu0 0.0
    %4693 = vmatpush1.msra.mxu0 %v62
    %4694 = vmatprep.subr.mxu0 0.0
    %4695 = vmatpush1.msra.mxu0 %v63
    %4696 = vmatprep.subr.mxu0 0.0
    %4697 = vmatpush1.msra.mxu0 0.0
    %4698 = vmatprep.subr.mxu0 0.0
    %4699 = vmatpush1.msra.mxu0 0.0
    %4700 = vmatprep.subr.mxu0 0.0
    %4701 = vmatpush1.msra.mxu0 0.0
    %4702 = vmatprep.subr.mxu0 0.0
    %4703 = vmatpush1.msra.mxu0 0.0
    %4704 = vmatprep.subr.mxu0 0.0
    %4705 = vmatpush1.msra.mxu0 0.0
    %4706 = vmatprep.subr.mxu0 0.0
    %4707 = vmatpush1.msra.mxu0 0.0
    %4708 = vmatprep.subr.mxu0 0.0
    %4709 = vmatpush1.msra.mxu0 0.0
    %4710 = vmatprep.subr.mxu0 0.0
    %4711 = vmatpush1.msra.mxu0 0.0
    %4712 = vmatprep.subr.mxu0 0.0
    %4713 = vmatpush1.msra.mxu0 0.0
    %4714 = vmatprep.subr.mxu0 0.0
    %4715 = vmatpush1.msra.mxu0 0.0
    %4716 = vmatprep.subr.mxu0 0.0
    %4717 = vmatpush1.msra.mxu0 0.0
    %4718 = vmatprep.subr.mxu0 0.0
    %4719 = vmatpush1.msra.mxu0 0.0
    %4720 = vmatprep.subr.mxu0 0.0
    %4721 = vmatpush1.msra.mxu0 0.0
    %4722 = vmatprep.subr.mxu0 0.0
    %4723 = vmatpush1.msra.mxu0 0.0
    %4724 = vmatprep.subr.mxu0 0.0
    %4725 = vmatpush1.msra.mxu0 0.0
    %4726 = vmatprep.subr.mxu0 0.0
    %4727 = vmatpush1.msra.mxu0 0.0
    %4728 = vmatprep.mubr.f32.mxu0 0.0
    %4729 = vmatmul.mubr.f32.gmra.mrb[0].mxu0 %v4656
    %v4730 = vpop.f32.mrb[0].mxu0
    %v4731 = vadd.f32 0.0, %v4730
    %v4732 = vpop.f32.mrb[0].mxu0
    %4733 = vmatprep.mubr.f32.mxu0 0.0
    %4734 = vmatmul.mubr.f32.gmra.mrb[0].mxu0 %v4661
    %v4735 = vpop.f32.mrb[0].mxu0
    %v4736 = vadd.f32 0.0, %v4735
    %v4737 = vpop.f32.mrb[0].mxu0
    %4738 = vdwg.mxu0
    %v4739 = vmul.f32 %v4272, %v4272
    %v4740 = vmul.f32 %v4273, %v4273
    %v4741 = vmul.f32 %v4274, %v4274
    %v4742 = vmul.f32 %v4275, %v4275
    %v4744 = vsel %vm80, %v4742, 0
    %4746 = vmatprep.subr.mxu0 0.0
    %4747 = vmatpush1.msra.mxu0 %v4739
    %4748 = vmatprep.subr.mxu0 0.0
    %4749 = vmatpush1.msra.mxu0 %v4740
    %4750 = vmatprep.subr.mxu0 0.0
    %4751 = vmatpush1.msra.mxu0 %v4741
    %4752 = vmatprep.subr.mxu0 0.0
    %4753 = vmatpush1.msra.mxu0 %v4744
    %4754 = vmatprep.subr.mxu0 0.0
    %4755 = vmatpush1.msra.mxu0 0.0
    %4756 = vmatprep.subr.mxu0 0.0
    %4757 = vmatpush1.msra.mxu0 0.0
    %4758 = vmatprep.subr.mxu0 0.0
    %4759 = vmatpush1.msra.mxu0 0.0
    %4760 = vmatprep.subr.mxu0 0.0
    %4761 = vmatpush1.msra.mxu0 0.0
    %4762 = vmatprep.subr.mxu0 0.0
    %4763 = vmatpush1.msra.mxu0 0.0
    %4764 = vmatprep.subr.mxu0 0.0
    %4765 = vmatpush1.msra.mxu0 0.0
    %4766 = vmatprep.subr.mxu0 0.0
    %4767 = vmatpush1.msra.mxu0 0.0
    %4768 = vmatprep.subr.mxu0 0.0
    %4769 = vmatpush1.msra.mxu0 0.0
    %4770 = vmatprep.subr.mxu0 0.0
    %4771 = vmatpush1.msra.mxu0 0.0
    %4772 = vmatprep.subr.mxu0 0.0
    %4773 = vmatpush1.msra.mxu0 0.0
    %4774 = vmatprep.subr.mxu0 0.0
    %4775 = vmatpush1.msra.mxu0 0.0
    %4776 = vmatprep.subr.mxu0 0.0
    %4777 = vmatpush1.msra.mxu0 0.0
    %4778 = vmatprep.subr.mxu0 0.0
    %4779 = vmatpush1.msra.mxu0 0.0
    %4780 = vmatprep.subr.mxu0 0.0
    %4781 = vmatpush1.msra.mxu0 0.0
    %4782 = vmatprep.subr.mxu0 0.0
    %4783 = vmatpush1.msra.mxu0 0.0
    %4784 = vmatprep.subr.mxu0 0.0
    %4785 = vmatpush1.msra.mxu0 0.0
    %4786 = vmatprep.subr.mxu0 0.0
    %4787 = vmatpush1.msra.mxu0 0.0
    %4788 = vmatprep.subr.mxu0 0.0
    %4789 = vmatpush1.msra.mxu0 0.0
    %4790 = vmatprep.subr.mxu0 0.0
    %4791 = vmatpush1.msra.mxu0 0.0
    %4792 = vmatprep.subr.mxu0 0.0
    %4793 = vmatpush1.msra.mxu0 0.0
    %4794 = vmatprep.subr.mxu0 0.0
    %4795 = vmatpush1.msra.mxu0 0.0
    %4796 = vmatprep.subr.mxu0 0.0
    %4797 = vmatpush1.msra.mxu0 0.0
    %4798 = vmatprep.subr.mxu0 0.0
    %4799 = vmatpush1.msra.mxu0 0.0
    %4800 = vmatprep.subr.mxu0 0.0
    %4801 = vmatpush1.msra.mxu0 0.0
    %4802 = vmatprep.subr.mxu0 0.0
    %4803 = vmatpush1.msra.mxu0 0.0
    %4804 = vmatprep.subr.mxu0 0.0
    %4805 = vmatpush1.msra.mxu0 0.0
    %4806 = vmatprep.subr.mxu0 0.0
    %4807 = vmatpush1.msra.mxu0 0.0
    %4808 = vmatprep.subr.mxu0 0.0
    %4809 = vmatpush1.msra.mxu0 0.0
    %4810 = vmatprep.mubr.f32.mxu0 0.0
    %4811 = vmatmul.mubr.f32.gmra.mrb[0].mxu0 %v75
    %v4812 = vpop.f32.mrb[0].mxu0
    %v4813 = vadd.f32 0.0, %v4812
    %v4814 = vpop.f32.mrb[0].mxu0
    %4815 = vmatprep.mubr.f32.mxu0 0.0
    %4816 = vmatmul.mubr.f32.gmra.mrb[0].mxu0 %v78
    %v4817 = vpop.f32.mrb[0].mxu0
    %v4818 = vadd.f32 0.0, %v4817
    %v4819 = vpop.f32.mrb[0].mxu0
    %4820 = vdwg.mxu0
    %4821 = vmatprep.subr.mxu0 0.0
    %4822 = vmatpush1.msra.mxu0 %v48
    %4823 = vmatprep.subr.mxu0 0.0
    %4824 = vmatpush1.msra.mxu0 %v49
    %4825 = vmatprep.subr.mxu0 0.0
    %4826 = vmatpush1.msra.mxu0 %v50
    %4827 = vmatprep.subr.mxu0 0.0
    %4828 = vmatpush1.msra.mxu0 %v51
    %4829 = vmatprep.subr.mxu0 0.0
    %4830 = vmatpush1.msra.mxu0 %v52
    %4831 = vmatprep.subr.mxu0 0.0
    %4832 = vmatpush1.msra.mxu0 %v53
    %4833 = vmatprep.subr.mxu0 0.0
    %4834 = vmatpush1.msra.mxu0 %v54
    %4835 = vmatprep.subr.mxu0 0.0
    %4836 = vmatpush1.msra.mxu0 %v55
    %4837 = vmatprep.subr.mxu0 0.0
    %4838 = vmatpush1.msra.mxu0 %v56
    %4839 = vmatprep.subr.mxu0 0.0
    %4840 = vmatpush1.msra.mxu0 %v57
    %4841 = vmatprep.subr.mxu0 0.0
    %4842 = vmatpush1.msra.mxu0 %v58
    %4843 = vmatprep.subr.mxu0 0.0
    %4844 = vmatpush1.msra.mxu0 %v59
    %4845 = vmatprep.subr.mxu0 0.0
    %4846 = vmatpush1.msra.mxu0 %v60
    %4847 = vmatprep.subr.mxu0 0.0
    %4848 = vmatpush1.msra.mxu0 %v61
    %4849 = vmatprep.subr.mxu0 0.0
    %4850 = vmatpush1.msra.mxu0 %v62
    %4851 = vmatprep.subr.mxu0 0.0
    %4852 = vmatpush1.msra.mxu0 %v63
    %4853 = vmatprep.subr.mxu0 0.0
    %4854 = vmatpush1.msra.mxu0 0.0
    %4855 = vmatprep.subr.mxu0 0.0
    %4856 = vmatpush1.msra.mxu0 0.0
    %4857 = vmatprep.subr.mxu0 0.0
    %4858 = vmatpush1.msra.mxu0 0.0
    %4859 = vmatprep.subr.mxu0 0.0
    %4860 = vmatpush1.msra.mxu0 0.0
    %4861 = vmatprep.subr.mxu0 0.0
    %4862 = vmatpush1.msra.mxu0 0.0
    %4863 = vmatprep.subr.mxu0 0.0
    %4864 = vmatpush1.msra.mxu0 0.0
    %4865 = vmatprep.subr.mxu0 0.0
    %4866 = vmatpush1.msra.mxu0 0.0
    %4867 = vmatprep.subr.mxu0 0.0
    %4868 = vmatpush1.msra.mxu0 0.0
    %4869 = vmatprep.subr.mxu0 0.0
    %4870 = vmatpush1.msra.mxu0 0.0
    %4871 = vmatprep.subr.mxu0 0.0
    %4872 = vmatpush1.msra.mxu0 0.0
    %4873 = vmatprep.subr.mxu0 0.0
    %4874 = vmatpush1.msra.mxu0 0.0
    %4875 = vmatprep.subr.mxu0 0.0
    %4876 = vmatpush1.msra.mxu0 0.0
    %4877 = vmatprep.subr.mxu0 0.0
    %4878 = vmatpush1.msra.mxu0 0.0
    %4879 = vmatprep.subr.mxu0 0.0
    %4880 = vmatpush1.msra.mxu0 0.0
    %4881 = vmatprep.subr.mxu0 0.0
    %4882 = vmatpush1.msra.mxu0 0.0
    %4883 = vmatprep.subr.mxu0 0.0
    %4884 = vmatpush1.msra.mxu0 0.0
    %4885 = vmatprep.mubr.f32.mxu0 0.0
    %4886 = vmatmul.mubr.f32.gmra.mrb[0].mxu0 %v4813
    %v4887 = vpop.f32.mrb[0].mxu0
    %v4888 = vadd.f32 0.0, %v4887
    %v4889 = vpop.f32.mrb[0].mxu0
    %4890 = vmatprep.mubr.f32.mxu0 0.0
    %4891 = vmatmul.mubr.f32.gmra.mrb[0].mxu0 %v4818
    %v4892 = vpop.f32.mrb[0].mxu0
    %v4893 = vadd.f32 0.0, %v4892
    %v4894 = vpop.f32.mrb[0].mxu0
    %4895 = vdwg.mxu0
    %v4896 = vmul.f32 %v4267, %v4272
    %v4897 = vmul.f32 %v4268, %v4273
    %v4898 = vmul.f32 %v4269, %v4274
    %v4899 = vmul.f32 %v4270, %v4275
    %v4901 = vsel %vm80, %v4899, 0
    %4903 = vmatprep.subr.mxu0 0.0
    %4904 = vmatpush1.msra.mxu0 %v4896
    %4905 = vmatprep.subr.mxu0 0.0
    %4906 = vmatpush1.msra.mxu0 %v4897
    %4907 = vmatprep.subr.mxu0 0.0
    %4908 = vmatpush1.msra.mxu0 %v4898
    %4909 = vmatprep.subr.mxu0 0.0
    %4910 = vmatpush1.msra.mxu0 %v4901
    %4911 = vmatprep.subr.mxu0 0.0
    %4912 = vmatpush1.msra.mxu0 0.0
    %4913 = vmatprep.subr.mxu0 0.0
    %4914 = vmatpush1.msra.mxu0 0.0
    %4915 = vmatprep.subr.mxu0 0.0
    %4916 = vmatpush1.msra.mxu0 0.0
    %4917 = vmatprep.subr.mxu0 0.0
    %4918 = vmatpush1.msra.mxu0 0.0
    %4919 = vmatprep.subr.mxu0 0.0
    %4920 = vmatpush1.msra.mxu0 0.0
    %4921 = vmatprep.subr.mxu0 0.0
    %4922 = vmatpush1.msra.mxu0 0.0
    %4923 = vmatprep.subr.mxu0 0.0
    %4924 = vmatpush1.msra.mxu0 0.0
    %4925 = vmatprep.subr.mxu0 0.0
    %4926 = vmatpush1.msra.mxu0 0.0
    %4927 = vmatprep.subr.mxu0 0.0
    %4928 = vmatpush1.msra.mxu0 0.0
    %4929 = vmatprep.subr.mxu0 0.0
    %4930 = vmatpush1.msra.mxu0 0.0
    %4931 = vmatprep.subr.mxu0 0.0
    %4932 = vmatpush1.msra.mxu0 0.0
    %4933 = vmatprep.subr.mxu0 0.0
    %4934 = vmatpush1.msra.mxu0 0.0
    %4935 = vmatprep.subr.mxu0 0.0
    %4936 = vmatpush1.msra.mxu0 0.0
    %4937 = vmatprep.subr.mxu0 0.0
    %4938 = vmatpush1.msra.mxu0 0.0
    %4939 = vmatprep.subr.mxu0 0.0
    %4940 = vmatpush1.msra.mxu0 0.0
    %4941 = vmatprep.subr.mxu0 0.0
    %4942 = vmatpush1.msra.mxu0 0.0
    %4943 = vmatprep.subr.mxu0 0.0
    %4944 = vmatpush1.msra.mxu0 0.0
    %4945 = vmatprep.subr.mxu0 0.0
    %4946 = vmatpush1.msra.mxu0 0.0
    %4947 = vmatprep.subr.mxu0 0.0
    %4948 = vmatpush1.msra.mxu0 0.0
    %4949 = vmatprep.subr.mxu0 0.0
    %4950 = vmatpush1.msra.mxu0 0.0
    %4951 = vmatprep.subr.mxu0 0.0
    %4952 = vmatpush1.msra.mxu0 0.0
    %4953 = vmatprep.subr.mxu0 0.0
    %4954 = vmatpush1.msra.mxu0 0.0
    %4955 = vmatprep.subr.mxu0 0.0
    %4956 = vmatpush1.msra.mxu0 0.0
    %4957 = vmatprep.subr.mxu0 0.0
    %4958 = vmatpush1.msra.mxu0 0.0
    %4959 = vmatprep.subr.mxu0 0.0
    %4960 = vmatpush1.msra.mxu0 0.0
    %4961 = vmatprep.subr.mxu0 0.0
    %4962 = vmatpush1.msra.mxu0 0.0
    %4963 = vmatprep.subr.mxu0 0.0
    %4964 = vmatpush1.msra.mxu0 0.0
    %4965 = vmatprep.subr.mxu0 0.0
    %4966 = vmatpush1.msra.mxu0 0.0
    %4967 = vmatprep.mubr.f32.mxu0 0.0
    %4968 = vmatmul.mubr.f32.gmra.mrb[0].mxu0 %v75
    %v4969 = vpop.f32.mrb[0].mxu0
    %v4970 = vadd.f32 0.0, %v4969
    %v4971 = vpop.f32.mrb[0].mxu0
    %4972 = vmatprep.mubr.f32.mxu0 0.0
    %4973 = vmatmul.mubr.f32.gmra.mrb[0].mxu0 %v78
    %v4974 = vpop.f32.mrb[0].mxu0
    %v4975 = vadd.f32 0.0, %v4974
    %v4976 = vpop.f32.mrb[0].mxu0
    %4977 = vdwg.mxu0
    %4978 = vmatprep.subr.mxu0 0.0
    %4979 = vmatpush1.msra.mxu0 %v48
    %4980 = vmatprep.subr.mxu0 0.0
    %4981 = vmatpush1.msra.mxu0 %v49
    %4982 = vmatprep.subr.mxu0 0.0
    %4983 = vmatpush1.msra.mxu0 %v50
    %4984 = vmatprep.subr.mxu0 0.0
    %4985 = vmatpush1.msra.mxu0 %v51
    %4986 = vmatprep.subr.mxu0 0.0
    %4987 = vmatpush1.msra.mxu0 %v52
    %4988 = vmatprep.subr.mxu0 0.0
    %4989 = vmatpush1.msra.mxu0 %v53
    %4990 = vmatprep.subr.mxu0 0.0
    %4991 = vmatpush1.msra.mxu0 %v54
    %4992 = vmatprep.subr.mxu0 0.0
    %4993 = vmatpush1.msra.mxu0 %v55
    %4994 = vmatprep.subr.mxu0 0.0
    %4995 = vmatpush1.msra.mxu0 %v56
    %4996 = vmatprep.subr.mxu0 0.0
    %4997 = vmatpush1.msra.mxu0 %v57
    %4998 = vmatprep.subr.mxu0 0.0
    %4999 = vmatpush1.msra.mxu0 %v58
    %5000 = vmatprep.subr.mxu0 0.0
    %5001 = vmatpush1.msra.mxu0 %v59
    %5002 = vmatprep.subr.mxu0 0.0
    %5003 = vmatpush1.msra.mxu0 %v60
    %5004 = vmatprep.subr.mxu0 0.0
    %5005 = vmatpush1.msra.mxu0 %v61
    %5006 = vmatprep.subr.mxu0 0.0
    %5007 = vmatpush1.msra.mxu0 %v62
    %5008 = vmatprep.subr.mxu0 0.0
    %5009 = vmatpush1.msra.mxu0 %v63
    %5010 = vmatprep.subr.mxu0 0.0
    %5011 = vmatpush1.msra.mxu0 0.0
    %5012 = vmatprep.subr.mxu0 0.0
    %5013 = vmatpush1.msra.mxu0 0.0
    %5014 = vmatprep.subr.mxu0 0.0
    %5015 = vmatpush1.msra.mxu0 0.0
    %5016 = vmatprep.subr.mxu0 0.0
    %5017 = vmatpush1.msra.mxu0 0.0
    %5018 = vmatprep.subr.mxu0 0.0
    %5019 = vmatpush1.msra.mxu0 0.0
    %5020 = vmatprep.subr.mxu0 0.0
    %5021 = vmatpush1.msra.mxu0 0.0
    %5022 = vmatprep.subr.mxu0 0.0
    %5023 = vmatpush1.msra.mxu0 0.0
    %5024 = vmatprep.subr.mxu0 0.0
    %5025 = vmatpush1.msra.mxu0 0.0
    %5026 = vmatprep.subr.mxu0 0.0
    %5027 = vmatpush1.msra.mxu0 0.0
    %5028 = vmatprep.subr.mxu0 0.0
    %5029 = vmatpush1.msra.mxu0 0.0
    %5030 = vmatprep.subr.mxu0 0.0
    %5031 = vmatpush1.msra.mxu0 0.0
    %5032 = vmatprep.subr.mxu0 0.0
    %5033 = vmatpush1.msra.mxu0 0.0
    %5034 = vmatprep.subr.mxu0 0.0
    %5035 = vmatpush1.msra.mxu0 0.0
    %5036 = vmatprep.subr.mxu0 0.0
    %5037 = vmatpush1.msra.mxu0 0.0
    %5038 = vmatprep.subr.mxu0 0.0
    %5039 = vmatpush1.msra.mxu0 0.0
    %5040 = vmatprep.subr.mxu0 0.0
    %5041 = vmatpush1.msra.mxu0 0.0
    %5042 = vmatprep.mubr.f32.mxu0 0.0
    %5043 = vmatmul.mubr.f32.gmra.mrb[0].mxu0 %v4970
    %v5044 = vpop.f32.mrb[0].mxu0
    %v5045 = vadd.f32 0.0, %v5044
    %v5046 = vpop.f32.mrb[0].mxu0
    %5047 = vmatprep.mubr.f32.mxu0 0.0
    %5048 = vmatmul.mubr.f32.gmra.mrb[0].mxu0 %v4975
    %v5049 = vpop.f32.mrb[0].mxu0
    %v5050 = vadd.f32 0.0, %v5049
    %v5051 = vpop.f32.mrb[0].mxu0
    %5052 = vdwg.mxu0
    %v5053 = vmul.f32 %v4421, %v4421
    %v5054 = vmul.f32 %v4426, %v4426
    %v5055 = vmul.f32 %v4574, %v4574
    %v5056 = vmul.f32 %v4579, %v4579
    %v5057 = vmul.f32 %v4421, %v4574
    %v5058 = vmul.f32 %v4426, %v4579
    %v5059 = vsub.f32 %v4731, %v5053
    %v5060 = vsub.f32 %v4736, %v5054
    %v5061 = vsub.f32 %v4888, %v5055
    %v5062 = vsub.f32 %v4893, %v5056
    %v5063 = vsub.f32 %v5045, %v5057
    %v5064 = vsub.f32 %v5050, %v5058
    %v5065 = vmul.f32 %v5057, 2.0
    %v5066 = vmul.f32 %v5058, 2.0
    %v5067 = vadd.f32 %v5065, 6.5025
    %v5068 = vadd.f32 %v5066, 6.5025
    %v5069 = vmul.f32 %v5063, 2.0
    %v5070 = vmul.f32 %v5064, 2.0
    %v5071 = vadd.f32 %v5069, 58.5225
    %v5072 = vadd.f32 %v5070, 58.5225
    %v5073 = vmul.f32 %v5067, %v5071
    %v5074 = vmul.f32 %v5068, %v5072
    %v5075 = vadd.f32 %v5053, %v5055
    %v5076 = vadd.f32 %v5054, %v5056
    %v5077 = vadd.f32 %v5075, 6.5025
    %v5078 = vadd.f32 %v5076, 6.5025
    %v5079 = vadd.f32 %v5059, %v5061
    %v5080 = vadd.f32 %v5060, %v5062
    %v5081 = vadd.f32 %v5079, 58.5225
    %v5082 = vadd.f32 %v5080, 58.5225
    %v5083 = vmul.f32 %v5077, %v5081
    %v5084 = vmul.f32 %v5078, %v5082
    %v5085 = vrcp.pop %v5083
    %v5086 = vrcp.pop %v5084
    %v5087 = vmul.f32 %v5073, %v5085
    %v5088 = vmul.f32 %v5074, %v5086
    %v5089 = vsel %vm894, %v5087, 0.0
    %v5090 = vsel %vm894, %v5088, 0.0
    %v5091 = vadd.f32 %v5089, %v5090
    %5092 = vadd.xlane.f32.xlu0 %v5091
    %v5093 = vpop.xlane.xlu0 %5092
    %v5094 = vrot.slane %v5093, 4
    %v5095 = vadd.f32 %v5093, %v5094
    %v5096 = vrot.slane %v5095, 2
    %v5097 = vadd.f32 %v5095, %v5096
    %v5098 = vrot.slane %v5097, 1
    %v5099 = vadd.f32 %v5097, %v5098
    %s5100 = vtos %v5099
    %s5101 = sadd.s32 %s64, 5
    %p5102 = scmp.lt.s32.totalorder %s5101, 6
    %s5103 = scalar_select %p5102, %s5100, 0.0
    %s5104 = sadd.f32 %s4265, %s5103
    %v5105 = vstv %s5104
    %5106 = vst [vmem:[#allocation7] sm:$0x1] %v5105
    // Predicated region
    $region26: #{tpu_custom_call.1} parent=1 // pred_check
      _
    $region27: #{tpu_custom_call.1} parent=1 // pred_check_branch
      %5108 = sbr.rel (0) target = $region29
    $region28: #{tpu_custom_call.1} parent=1 // pred_region
      %s5110 = ssub.s32 16, 16
      %5111 = vsyncadd [#allocation4], %s5110
      %s5113 = sshll.u32 [#allocation7], 4
      %s5114 = int_to_ptr.vmem [resolvable:$true] %s5113
      %5116 = dma.vmem_to_hbm [thread:$0]  %s5114, 16, %s4, [#allocation4]
    $region29: #{tpu_custom_call.1} parent=1 // pred_fallthru
      _
    // Predicated region
    $region30: #{tpu_custom_call.1} parent=1 // pred_check
      _
    $region31: #{tpu_custom_call.1} parent=1 // pred_check_branch
      %5118 = sbr.rel (0) target = $region33
    $region32: #{tpu_custom_call.1} parent=1 // pred_region
      %5119 = dma.done [#allocation4], 16
    $region33: #{tpu_custom_call.1} parent=1 // pred_fallthru
      _
    %5120 = vsyncpa [#allocation3], 1
    %5121 = vsyncpa [#allocation6], 1
    %5122 = vsyncpa [#allocation4], 1

</llo_original>
